<compile_context>
chip_gen: v6e
topology: v6e:2x2x1
jax: 0.10.0
libtpu: 0.0.40
codegen_flags: <defaults>
</compile_context>

<pallas_src>
import math
import functools

import jax
import jax.numpy as jnp
from jax.experimental import pallas as pl
from jax.experimental.pallas import tpu as pltpu


_VMEM_LIMIT = 64 * 1024 * 1024   # fits v7x physical VMEM; < physical on v5e/v6e


# ---------------------------------------------------------------------------
# Tiling helper: largest tile <= target that divides `dim` and respects `align`,
# falling back to the full dimension (always BlockSpec-legal).
# ---------------------------------------------------------------------------
def _pick_tile(dim, target, align):
    if dim <= target:
        return dim
    t = (target // align) * align
    while t >= align:
        if dim % t == 0:
            return t
        t -= align
    return dim


# ---------------------------------------------------------------------------
# Kernel 1: tiled matmul + bias      y = x @ w + b        (bf16 in/out, f32 acc)
# grid = (M/tm, N/tn, K/tk)
# ---------------------------------------------------------------------------
def _matmul_bias_kernel(x_ref, w_ref, b_ref, o_ref, acc_ref):
    k = pl.program_id(2)

    @pl.when(k == 0)
    def _():
        acc_ref[...] = jnp.zeros_like(acc_ref)

    acc_ref[...] += jnp.dot(x_ref[...], w_ref[...],
                            preferred_element_type=jnp.float32)

    @pl.when(k == pl.num_programs(2) - 1)
    def _():
        o_ref[...] = (acc_ref[...] + b_ref[...].astype(jnp.float32)).astype(o_ref.dtype)


def matmul_bias(x, w, b, *, tm=256, tn=256, tk=512):
    # x: (M, K), w: (K, N), b: (N,)  ->  (M, N)
    M, K = x.shape
    N = w.shape[1]
    tm = _pick_tile(M, tm, 8)
    tn = _pick_tile(N, tn, 128)
    tk = _pick_tile(K, tk, 128)
    grid = (M // tm, N // tn, K // tk)
    return pl.pallas_call(
        _matmul_bias_kernel,
        out_shape=jax.ShapeDtypeStruct((M, N), x.dtype),
        grid_spec=pltpu.PrefetchScalarGridSpec(
            num_scalar_prefetch=0,
            grid=grid,
            in_specs=[
                pl.BlockSpec((tm, tk), lambda i, j, k: (i, k)),
                pl.BlockSpec((tk, tn), lambda i, j, k: (k, j)),
                pl.BlockSpec((1, tn), lambda i, j, k: (0, j)),
            ],
            out_specs=pl.BlockSpec((tm, tn), lambda i, j, k: (i, j)),
            scratch_shapes=[pltpu.VMEM((tm, tn), jnp.float32)],
        ),
        compiler_params=pltpu.CompilerParams(
            dimension_semantics=("parallel", "parallel", "arbitrary"),
            vmem_limit_bytes=_VMEM_LIMIT),
    )(x, w, b.reshape(1, N))


# ---------------------------------------------------------------------------
# Kernel 2: matmul + bias fused with residual-add + LayerNorm epilogue
#   out = LN((x @ w + b) + res) * gamma + beta       (bf16 MXU, f32 epilogue)
# Output rows are full-width (needed for LN); grid = (M/tm, K/tk).
# ---------------------------------------------------------------------------
def _matmul_res_ln_kernel(x_ref, w_ref, b_ref, r_ref, g_ref, be_ref,
                          o_ref, acc_ref, *, eps):
    k = pl.program_id(1)

    @pl.when(k == 0)
    def _():
        acc_ref[...] = jnp.zeros_like(acc_ref)

    acc_ref[...] += jnp.dot(x_ref[...], w_ref[...],
                            preferred_element_type=jnp.float32)

    @pl.when(k == pl.num_programs(1) - 1)
    def _():
        z = acc_ref[...] + b_ref[...].astype(jnp.float32) + r_ref[...].astype(jnp.float32)
        mu = jnp.mean(z, axis=-1, keepdims=True)
        zc = z - mu
        var = jnp.mean(zc * zc, axis=-1, keepdims=True)
        out = (zc * jax.lax.rsqrt(var + eps) * g_ref[...].astype(jnp.float32)
               + be_ref[...].astype(jnp.float32))
        o_ref[...] = out.astype(o_ref.dtype)


def matmul_res_ln(x, w, b, res, gamma, beta, eps, *, tm=256, tk=512):
    # x: (M, K), w: (K, N), res: (M, N)  ->  (M, N)
    M, K = x.shape
    N = w.shape[1]
    tm = _pick_tile(M, tm, 8)
    tk = _pick_tile(K, tk, 128)
    grid = (M // tm, K // tk)
    return pl.pallas_call(
        functools.partial(_matmul_res_ln_kernel, eps=eps),
        out_shape=jax.ShapeDtypeStruct((M, N), x.dtype),
        grid_spec=pltpu.PrefetchScalarGridSpec(
            num_scalar_prefetch=0,
            grid=grid,
            in_specs=[
                pl.BlockSpec((tm, tk), lambda i, k: (i, k)),
                pl.BlockSpec((tk, N), lambda i, k: (k, 0)),
                pl.BlockSpec((1, N), lambda i, k: (0, 0)),
                pl.BlockSpec((tm, N), lambda i, k: (i, 0)),
                pl.BlockSpec((1, N), lambda i, k: (0, 0)),
                pl.BlockSpec((1, N), lambda i, k: (0, 0)),
            ],
            out_specs=pl.BlockSpec((tm, N), lambda i, k: (i, 0)),
            scratch_shapes=[pltpu.VMEM((tm, N), jnp.float32)],
        ),
        compiler_params=pltpu.CompilerParams(
            dimension_semantics=("parallel", "arbitrary"),
            vmem_limit_bytes=_VMEM_LIMIT),
    )(x, w, b.reshape(1, N), res, gamma.reshape(1, N), beta.reshape(1, N))


# ---------------------------------------------------------------------------
# Kernel 3: fused FFN + residual + LayerNorm
#   out = LN(x + relu(x @ w1 + b1) @ w2 + b2) * gamma + beta
# grid = (M/tm, dim_ff/tf); the (tm, tf) hidden tile never touches HBM.
# ---------------------------------------------------------------------------
def _ffn_res_ln_kernel(x_ref, w1_ref, b1_ref, w2_ref, b2_ref, g_ref, be_ref,
                       o_ref, acc_ref, *, eps):
    f = pl.program_id(1)

    @pl.when(f == 0)
    def _():
        acc_ref[...] = jnp.zeros_like(acc_ref)

    h = jnp.dot(x_ref[...], w1_ref[...], preferred_element_type=jnp.float32)
    h = jnp.maximum(h + b1_ref[...].astype(jnp.float32), 0.0)
    acc_ref[...] += jnp.dot(h.astype(x_ref.dtype), w2_ref[...],
                            preferred_element_type=jnp.float32)

    @pl.when(f == pl.num_programs(1) - 1)
    def _():
        z = acc_ref[...] + b2_ref[...].astype(jnp.float32) + x_ref[...].astype(jnp.float32)
        mu = jnp.mean(z, axis=-1, keepdims=True)
        zc = z - mu
        var = jnp.mean(zc * zc, axis=-1, keepdims=True)
        out = (zc * jax.lax.rsqrt(var + eps) * g_ref[...].astype(jnp.float32)
               + be_ref[...].astype(jnp.float32))
        o_ref[...] = out.astype(o_ref.dtype)


def ffn_res_ln(x, w1, b1, w2, b2, gamma, beta, eps, *, tm=256, tf=256):
    # x: (M, E), w1: (E, F), w2: (F, E)  ->  (M, E)
    M, E = x.shape
    F = w1.shape[1]
    tm = _pick_tile(M, tm, 8)
    tf = _pick_tile(F, tf, 128)
    grid = (M // tm, F // tf)
    return pl.pallas_call(
        functools.partial(_ffn_res_ln_kernel, eps=eps),
        out_shape=jax.ShapeDtypeStruct((M, E), x.dtype),
        grid_spec=pltpu.PrefetchScalarGridSpec(
            num_scalar_prefetch=0,
            grid=grid,
            in_specs=[
                pl.BlockSpec((tm, E), lambda i, f: (i, 0)),   # x stays resident over f
                pl.BlockSpec((E, tf), lambda i, f: (0, f)),
                pl.BlockSpec((1, tf), lambda i, f: (0, f)),
                pl.BlockSpec((tf, E), lambda i, f: (f, 0)),
                pl.BlockSpec((1, E), lambda i, f: (0, 0)),
                pl.BlockSpec((1, E), lambda i, f: (0, 0)),
                pl.BlockSpec((1, E), lambda i, f: (0, 0)),
            ],
            out_specs=pl.BlockSpec((tm, E), lambda i, f: (i, 0)),
            scratch_shapes=[pltpu.VMEM((tm, E), jnp.float32)],
        ),
        compiler_params=pltpu.CompilerParams(
            dimension_semantics=("parallel", "arbitrary"),
            vmem_limit_bytes=_VMEM_LIMIT),
    )(x, w1, b1.reshape(1, F), w2, b2.reshape(1, E),
      gamma.reshape(1, E), beta.reshape(1, E))


# ---------------------------------------------------------------------------
# Kernel 4: head-packed flash attention.
# Reads lane-dense (tq, E)/(tk, E) slabs of Q/K/V directly out of the fused
# projection outputs (column block indices pick the Q/K/V slab), online softmax
# per head inside the block, writes a lane-dense (tq, E) output slab.
# grid = (batch, L/tq, S/tk); KV axis is the "arbitrary" accumulation axis.
# ---------------------------------------------------------------------------
def _flash_mha_kernel(q_ref, k_ref, v_ref, o_ref, m_sc, l_sc, acc_sc,
                      *, nhead, head_dim):
    kv = pl.program_id(2)

    @pl.when(kv == 0)
    def _():
        m_sc[...] = jnp.full_like(m_sc, -jnp.inf)
        l_sc[...] = jnp.zeros_like(l_sc)
        acc_sc[...] = jnp.zeros_like(acc_sc)

    q = q_ref[0]            # (tq, E), bf16 -> MXU fast path; 1/sqrt(hd) folded in weights
    k = k_ref[0]            # (tk, E)
    v = v_ref[0]            # (tk, E)

    for h in range(nhead):
        lo, hi = h * head_dim, (h + 1) * head_dim
        q_h = q[:, lo:hi]
        k_h = k[:, lo:hi]
        v_h = v[:, lo:hi]
        # q_h @ k_h^T (contract head_dim), no transpose materialized, f32 scores.
        s = jax.lax.dot_general(q_h, k_h, (((1,), (1,)), ((), ())),
                                preferred_element_type=jnp.float32)     # (tq, tk)
        m_prev = m_sc[:, h:h + 1]
        m_new = jnp.maximum(m_prev, s.max(axis=-1, keepdims=True))
        alpha = jnp.exp(m_prev - m_new)
        p = jnp.exp(s - m_new)
        l_sc[:, h:h + 1] = alpha * l_sc[:, h:h + 1] + p.sum(axis=-1, keepdims=True)
        acc_sc[:, lo:hi] = alpha * acc_sc[:, lo:hi] + jnp.dot(
            p.astype(v_h.dtype), v_h, preferred_element_type=jnp.float32)
        m_sc[:, h:h + 1] = m_new

    @pl.when(kv == pl.num_programs(2) - 1)
    def _():
        inv = pl.reciprocal(l_sc[...], approx=False)                    # (tq, nhead)
        outs = [acc_sc[:, h * head_dim:(h + 1) * head_dim] * inv[:, h:h + 1]
                for h in range(nhead)]
        o_ref[0] = jnp.concatenate(outs, axis=-1).astype(o_ref.dtype)   # lane-dense store


def flash_mha(q_src, k_src, v_src, q_col, k_col, v_col, *, nhead, d_model,
              tq=128, tk=256):
    # q_src: (N, L, Wq); k_src/v_src: (N, S, Wk)/(N, S, Wv); the d_model-wide Q/K/V
    # slabs sit at column block q_col/k_col/v_col (in units of d_model).
    N, L, _ = q_src.shape
    S = k_src.shape[1]
    E = d_model
    hd = E // nhead
    tq = _pick_tile(L, tq, 8)
    tk = _pick_tile(S, tk, 8)
    grid = (N, L // tq, S // tk)
    return pl.pallas_call(
        functools.partial(_flash_mha_kernel, nhead=nhead, head_dim=hd),
        out_shape=jax.ShapeDtypeStruct((N, L, E), q_src.dtype),
        grid_spec=pltpu.PrefetchScalarGridSpec(
            num_scalar_prefetch=0,
            grid=grid,
            in_specs=[
                pl.BlockSpec((1, tq, E), lambda n, i, j, c=q_col: (n, i, c)),
                pl.BlockSpec((1, tk, E), lambda n, i, j, c=k_col: (n, j, c)),
                pl.BlockSpec((1, tk, E), lambda n, i, j, c=v_col: (n, j, c)),
            ],
            out_specs=pl.BlockSpec((1, tq, E), lambda n, i, j: (n, i, 0)),
            scratch_shapes=[
                pltpu.VMEM((tq, nhead), jnp.float32),   # running max (per head)
                pltpu.VMEM((tq, nhead), jnp.float32),   # running sum (per head)
                pltpu.VMEM((tq, E), jnp.float32),       # packed output accumulator
            ],
        ),
        compiler_params=pltpu.CompilerParams(
            dimension_semantics=("parallel", "parallel", "arbitrary"),
            vmem_limit_bytes=_VMEM_LIMIT),
    )(q_src, k_src, v_src)


# ---------------------------------------------------------------------------
# Attention blocks (fused QKV/KV projections + head-packed flash + fused
# out_proj/residual/LN).  All activations are batch-major (N*L, E) bf16.
# ---------------------------------------------------------------------------
def self_attention_block(x2d, L, N, E, nhead, p, norm_w, norm_b, eps):
    qkv = matmul_bias(x2d, p["w_qkv"], p["b_qkv"])              # (N*L, 3E), one matmul
    if E % 128 == 0:
        qkv3 = qkv.reshape(N, L, 3 * E)                          # free reshape
        o = flash_mha(qkv3, qkv3, qkv3, 0, 1, 2, nhead=nhead, d_model=E)
    else:
        # TODO(synk): lane-packed column reads need E % 128 == 0; fall back to XLA slices.
        q3 = qkv[:, :E].reshape(N, L, E)
        k3 = qkv[:, E:2 * E].reshape(N, L, E)
        v3 = qkv[:, 2 * E:].reshape(N, L, E)
        o = flash_mha(q3, k3, v3, 0, 0, 0, nhead=nhead, d_model=E)
    o2d = o.reshape(N * L, E)                                    # free reshape (merge heads)
    return matmul_res_ln(o2d, p["w_out"], p["b_out"], x2d, norm_w, norm_b, eps)


def cross_attention_block(x2d, mem2d, L, S, N, E, nhead, p, norm_w, norm_b, eps):
    q = matmul_bias(x2d, p["w_q"], p["b_q"])                     # (N*L, E)
    kv = matmul_bias(mem2d, p["w_kv"], p["b_kv"])                # (N*S, 2E), fused K/V
    q3 = q.reshape(N, L, E)
    if E % 128 == 0:
        kv3 = kv.reshape(N, S, 2 * E)
        o = flash_mha(q3, kv3, kv3, 0, 0, 1, nhead=nhead, d_model=E)
    else:
        # TODO(synk): lane-packed column reads need E % 128 == 0; fall back to XLA slices.
        k3 = kv[:, :E].reshape(N, S, E)
        v3 = kv[:, E:].reshape(N, S, E)
        o = flash_mha(q3, k3, v3, 0, 0, 0, nhead=nhead, d_model=E)
    o2d = o.reshape(N * L, E)
    return matmul_res_ln(o2d, p["w_out"], p["b_out"], x2d, norm_w, norm_b, eps)


# ---------------------------------------------------------------------------
# TransformerDecoderLayer forward (norm_first=False; dropouts are identity)
# ---------------------------------------------------------------------------
def decoder_layer_forward(tgt, memory, params, nhead, eps=1e-5,
                          compute_dtype=jnp.bfloat16):
    L, N, E = tgt.shape
    S = memory.shape[0]
    out_dtype = tgt.dtype
    # One layout change per activation: (L,N,E) -> (N,L,E); everything else is free reshapes.
    x = tgt.transpose(1, 0, 2).astype(compute_dtype).reshape(N * L, E)
    mem = memory.transpose(1, 0, 2).astype(compute_dtype).reshape(N * S, E)

    x = self_attention_block(x, L, N, E, nhead, params["self_attn"],
                             params["norm1_w"], params["norm1_b"], eps)
    x = cross_attention_block(x, mem, L, S, N, E, nhead, params["cross_attn"],
                              params["norm2_w"], params["norm2_b"], eps)
    x = ffn_res_ln(x, params["w1"], params["b1"], params["w2"], params["b2"],
                   params["norm3_w"], params["norm3_b"], eps)
    return x.reshape(N, L, E).transpose(1, 0, 2).astype(out_dtype)


# ---------------------------------------------------------------------------
# Parameter init (PyTorch layout) + one-time preparation (transpose / concat /
# scale-folding / bf16 cast) — done once outside the hot loop.
# ---------------------------------------------------------------------------
def _xavier(key, shape):
    fan_out, fan_in = shape
    limit = math.sqrt(6.0 / (fan_in + fan_out))
    return jax.random.uniform(key, shape, jnp.float32, -limit, limit)


def init_torch_params(key, d_model, nhead, dim_feedforward):
    # Shapes follow the PyTorch module: in_proj_weight (3E, E), out_proj (E, E),
    # linear1 (F, E), linear2 (E, F).
    ks = jax.random.split(key, 8)
    return {
        "self_attn": {
            "in_w": _xavier(ks[0], (3 * d_model, d_model)),
            "in_b": jnp.zeros((3 * d_model,), jnp.float32),
            "out_w": _xavier(ks[1], (d_model, d_model)),
            "out_b": jnp.zeros((d_model,), jnp.float32),
        },
        "cross_attn": {
            "in_w": _xavier(ks[2], (3 * d_model, d_model)),
            "in_b": jnp.zeros((3 * d_model,), jnp.float32),
            "out_w": _xavier(ks[3], (d_model, d_model)),
            "out_b": jnp.zeros((d_model,), jnp.float32),
        },
        "lin1_w": _xavier(ks[4], (dim_feedforward, d_model)),
        "lin1_b": jnp.zeros((dim_feedforward,), jnp.float32),
        "lin2_w": _xavier(ks[5], (d_model, dim_feedforward)),
        "lin2_b": jnp.zeros((d_model,), jnp.float32),
        "norm1_w": jnp.ones((d_model,), jnp.float32),
        "norm1_b": jnp.zeros((d_model,), jnp.float32),
        "norm2_w": jnp.ones((d_model,), jnp.float32),
        "norm2_b": jnp.zeros((d_model,), jnp.float32),
        "norm3_w": jnp.ones((d_model,), jnp.float32),
        "norm3_b": jnp.zeros((d_model,), jnp.float32),
    }


def prepare_params(tp, d_model, nhead, compute_dtype=jnp.bfloat16):
    # Pre-transpose / pre-concatenate weights, fold 1/sqrt(head_dim) into the Q
    # projection, and cast MXU/HBM-resident weights to bf16.  Biases and LN params
    # stay f32 (they are consumed by the f32 epilogue).
    E = d_model
    hd = E // nhead
    scale = 1.0 / math.sqrt(hd)

    w_qkv = tp["self_attn"]["in_w"].T                      # (E, 3E)
    b_qkv = tp["self_attn"]["in_b"]
    w_qkv = w_qkv.at[:, :E].multiply(scale)                # fold softmax scale into Q
    b_qkv = b_qkv.at[:E].multiply(scale)

    w_q = tp["cross_attn"]["in_w"][:E].T * scale           # (E, E), scale folded
    b_q = tp["cross_attn"]["in_b"][:E] * scale
    w_kv = tp["cross_attn"]["in_w"][E:].T                  # (E, 2E)
    b_kv = tp["cross_attn"]["in_b"][E:]

    cd = compute_dtype
    return {
        "self_attn": {
            "w_qkv": w_qkv.astype(cd), "b_qkv": b_qkv,
            "w_out": tp["self_attn"]["out_w"].T.astype(cd),
            "b_out": tp["self_attn"]["out_b"],
        },
        "cross_attn": {
            "w_q": w_q.astype(cd), "b_q": b_q,
            "w_kv": w_kv.astype(cd), "b_kv": b_kv,
            "w_out": tp["cross_attn"]["out_w"].T.astype(cd),
            "b_out": tp["cross_attn"]["out_b"],
        },
        "w1": tp["lin1_w"].T.astype(cd), "b1": tp["lin1_b"],
        "w2": tp["lin2_w"].T.astype(cd), "b2": tp["lin2_b"],
        "norm1_w": tp["norm1_w"], "norm1_b": tp["norm1_b"],
        "norm2_w": tp["norm2_w"], "norm2_b": tp["norm2_b"],
        "norm3_w": tp["norm3_w"], "norm3_b": tp["norm3_b"],
    }


if __name__ == "__main__":
    d_model, nhead, dim_ff = 128, 4, 256
    T, S, B = 8, 16, 2   # tgt_len, memory_len, batch

    key = jax.random.PRNGKey(0)
    k_tgt, k_mem, k_par = jax.random.split(key, 3)

    tgt = jax.random.normal(k_tgt, (T, B, d_model), jnp.float32)      # (seq, batch, d_model)
    memory = jax.random.normal(k_mem, (S, B, d_model), jnp.float32)   # (seq, batch, d_model)

    torch_params = init_torch_params(k_par, d_model, nhead, dim_ff)
    params = prepare_params(torch_params, d_model, nhead)

    fwd = jax.jit(functools.partial(decoder_layer_forward, nhead=nhead))
    out = fwd(tgt, memory, params)
    jax.block_until_ready(out)

    assert out.shape == (T, B, d_model)
    assert bool(jnp.all(jnp.isfinite(out)))
    print("KERNEL_OK")
</pallas_src>

<mosaic_0001>
module attributes {stable_mosaic.version = 11 : i64} {
  func.func @_matmul_bias_kernel(%arg0: i32, %arg1: i32, %arg2: i32, %arg3: memref<16x128xbf16, #tpu.memory_space<vmem>>, %arg4: memref<128x128xbf16, #tpu.memory_space<vmem>>, %arg5: memref<1x128xf32, #tpu.memory_space<vmem>>, %arg6: memref<16x128xbf16, #tpu.memory_space<vmem>>, %arg7: memref<16x128xf32, #tpu.memory_space<vmem>>) attributes {dimension_semantics = [#tpu.dimension_semantics<parallel>, #tpu.dimension_semantics<parallel>, #tpu.dimension_semantics<arbitrary>], iteration_bounds = array<i64: 1, 3, 1>, scalar_prefetch = 0 : i64, scratch_operands = 1 : i64, tpu.core_type = #tpu.core_type<tc>, window_params = [{transform_indices = @transform_0, window_bounds = array<i64: 16, 128>}, {transform_indices = @transform_1, window_bounds = array<i64: 128, 128>}, {transform_indices = @transform_2, window_bounds = array<i64: 1, 128>}, {transform_indices = @transform_3, window_bounds = array<i64: 16, 128>}]} {
    %c0_i32 = arith.constant 0 : i32
    %0 = arith.cmpi eq, %arg2, %c0_i32 : i32
    %1 = arith.extui %0 : i1 to i32
    %c0_i32_0 = arith.constant 0 : i32
    %2 = arith.cmpi ne, %1, %c0_i32_0 : i32
    scf.if %2 {
      %cst_10 = arith.constant 0.000000e+00 : f32
      %12 = vector.broadcast %cst_10 : f32 to vector<16x128xf32>
      %c0_11 = arith.constant 0 : index
      %c0_12 = arith.constant 0 : index
      %13 = vector.load %arg7[%c0_11, %c0_12] : memref<16x128xf32, #tpu.memory_space<vmem>>, vector<16x128xf32>
      tpu.vector_store %arg7[%c0_11, %c0_12], %12 {strides = array<i32>} : memref<16x128xf32, #tpu.memory_space<vmem>>, vector<16x128xf32>,
    } else {
    }
    %c0 = arith.constant 0 : index
    %c0_1 = arith.constant 0 : index
    %3 = vector.load %arg7[%c0, %c0_1] : memref<16x128xf32, #tpu.memory_space<vmem>>, vector<16x128xf32>
    %c0_2 = arith.constant 0 : index
    %c0_3 = arith.constant 0 : index
    %4 = vector.load %arg3[%c0_2, %c0_3] : memref<16x128xbf16, #tpu.memory_space<vmem>>, vector<16x128xbf16>
    %c0_4 = arith.constant 0 : index
    %c0_5 = arith.constant 0 : index
    %5 = vector.load %arg4[%c0_4, %c0_5] : memref<128x128xbf16, #tpu.memory_space<vmem>>, vector<128x128xbf16>
    %cst = arith.constant dense<0.000000e+00> : vector<16x128xf32>
    %6 = tpu.matmul %4, %5, %cst {dimension_numbers = #tpu.dot_dimension_numbers<[1], [0], [0], [1], [0, 0, 1, 1], [], []>} : vector<16x128xbf16>, vector<128x128xbf16>, vector<16x128xf32> -> vector<16x128xf32>
    %7 = arith.addf %3, %6 : vector<16x128xf32>
    %c0_6 = arith.constant 0 : index
    %c0_7 = arith.constant 0 : index
    %8 = vector.load %arg7[%c0_6, %c0_7] : memref<16x128xf32, #tpu.memory_space<vmem>>, vector<16x128xf32>
    tpu.vector_store %arg7[%c0_6, %c0_7], %7 {strides = array<i32>} : memref<16x128xf32, #tpu.memory_space<vmem>>, vector<16x128xf32>,
    %c0_i32_8 = arith.constant 0 : i32
    %9 = arith.cmpi eq, %arg2, %c0_i32_8 : i32
    %10 = arith.extui %9 : i1 to i32
    %c0_i32_9 = arith.constant 0 : i32
    %11 = arith.cmpi ne, %10, %c0_i32_9 : i32
    scf.if %11 {
      %c0_10 = arith.constant 0 : index
      %c0_11 = arith.constant 0 : index
      %12 = vector.load %arg7[%c0_10, %c0_11] : memref<16x128xf32, #tpu.memory_space<vmem>>, vector<16x128xf32>
      %c0_12 = arith.constant 0 : index
      %c0_13 = arith.constant 0 : index
      %13 = vector.load %arg5[%c0_12, %c0_13] : memref<1x128xf32, #tpu.memory_space<vmem>>, vector<1x128xf32>
      %14 = vector.broadcast %13 : vector<1x128xf32> to vector<16x128xf32>
      %15 = arith.addf %12, %14 : vector<16x128xf32>
      %16 = arith.truncf %15 : vector<16x128xf32> to vector<16x128xbf16>
      %c0_14 = arith.constant 0 : index
      %c0_15 = arith.constant 0 : index
      %17 = vector.load %arg6[%c0_14, %c0_15] : memref<16x128xbf16, #tpu.memory_space<vmem>>, vector<16x128xbf16>
      tpu.vector_store %arg6[%c0_14, %c0_15], %16 {strides = array<i32>} : memref<16x128xbf16, #tpu.memory_space<vmem>>, vector<16x128xbf16>,
    } else {
    }
    return
  }
  func.func @transform_0(%arg0: i32, %arg1: i32, %arg2: i32) -> (i32, i32) {
    %c0_i32 = arith.constant 0 : i32
    return %arg0, %arg2 : i32, i32
  }
  func.func @transform_1(%arg0: i32, %arg1: i32, %arg2: i32) -> (i32, i32) {
    %c0_i32 = arith.constant 0 : i32
    return %arg2, %arg1 : i32, i32
  }
  func.func @transform_2(%arg0: i32, %arg1: i32, %arg2: i32) -> (i32, i32) {
    %c0_i32 = arith.constant 0 : i32
    %c0_i32_0 = arith.constant 0 : i32
    return %c0_i32, %arg1 : i32, i32
  }
  func.func @transform_3(%arg0: i32, %arg1: i32, %arg2: i32) -> (i32, i32) {
    %c0_i32 = arith.constant 0 : i32
    return %arg0, %arg1 : i32, i32
  }
}

module attributes {stable_mosaic.version = 11 : i64} {
  func.func @_matmul_res_ln_kernel(%arg0: i32, %arg1: i32, %arg2: memref<16x128xbf16, #tpu.memory_space<vmem>>, %arg3: memref<128x128xbf16, #tpu.memory_space<vmem>>, %arg4: memref<1x128xf32, #tpu.memory_space<vmem>>, %arg5: memref<16x128xbf16, #tpu.memory_space<vmem>>, %arg6: memref<1x128xf32, #tpu.memory_space<vmem>>, %arg7: memref<1x128xf32, #tpu.memory_space<vmem>>, %arg8: memref<16x128xbf16, #tpu.memory_space<vmem>>, %arg9: memref<16x128xf32, #tpu.memory_space<vmem>>) attributes {dimension_semantics = [#tpu.dimension_semantics<parallel>, #tpu.dimension_semantics<arbitrary>], iteration_bounds = array<i64: 1, 1>, scalar_prefetch = 0 : i64, scratch_operands = 1 : i64, tpu.core_type = #tpu.core_type<tc>, window_params = [{transform_indices = @transform_0, window_bounds = array<i64: 16, 128>}, {transform_indices = @transform_1, window_bounds = array<i64: 128, 128>}, {pipeline_mode = #tpu.pipeline_mode<synchronous>, transform_indices = @transform_2, window_bounds = array<i64: 1, 128>}, {transform_indices = @transform_3, window_bounds = array<i64: 16, 128>}, {pipeline_mode = #tpu.pipeline_mode<synchronous>, transform_indices = @transform_4, window_bounds = array<i64: 1, 128>}, {pipeline_mode = #tpu.pipeline_mode<synchronous>, transform_indices = @transform_5, window_bounds = array<i64: 1, 128>}, {transform_indices = @transform_6, window_bounds = array<i64: 16, 128>}]} {
    %c0_i32 = arith.constant 0 : i32
    %0 = arith.cmpi eq, %arg1, %c0_i32 : i32
    %1 = arith.extui %0 : i1 to i32
    %c0_i32_0 = arith.constant 0 : i32
    %2 = arith.cmpi ne, %1, %c0_i32_0 : i32
    scf.if %2 {
      %cst_10 = arith.constant 0.000000e+00 : f32
      %12 = vector.broadcast %cst_10 : f32 to vector<16x128xf32>
      %c0_11 = arith.constant 0 : index
      %c0_12 = arith.constant 0 : index
      %13 = vector.load %arg9[%c0_11, %c0_12] : memref<16x128xf32, #tpu.memory_space<vmem>>, vector<16x128xf32>
      tpu.vector_store %arg9[%c0_11, %c0_12], %12 {strides = array<i32>} : memref<16x128xf32, #tpu.memory_space<vmem>>, vector<16x128xf32>,
    } else {
    }
    %c0 = arith.constant 0 : index
    %c0_1 = arith.constant 0 : index
    %3 = vector.load %arg9[%c0, %c0_1] : memref<16x128xf32, #tpu.memory_space<vmem>>, vector<16x128xf32>
    %c0_2 = arith.constant 0 : index
    %c0_3 = arith.constant 0 : index
    %4 = vector.load %arg2[%c0_2, %c0_3] : memref<16x128xbf16, #tpu.memory_space<vmem>>, vector<16x128xbf16>
    %c0_4 = arith.constant 0 : index
    %c0_5 = arith.constant 0 : index
    %5 = vector.load %arg3[%c0_4, %c0_5] : memref<128x128xbf16, #tpu.memory_space<vmem>>, vector<128x128xbf16>
    %cst = arith.constant dense<0.000000e+00> : vector<16x128xf32>
    %6 = tpu.matmul %4, %5, %cst {dimension_numbers = #tpu.dot_dimension_numbers<[1], [0], [0], [1], [0, 0, 1, 1], [], []>} : vector<16x128xbf16>, vector<128x128xbf16>, vector<16x128xf32> -> vector<16x128xf32>
    %7 = arith.addf %3, %6 : vector<16x128xf32>
    %c0_6 = arith.constant 0 : index
    %c0_7 = arith.constant 0 : index
    %8 = vector.load %arg9[%c0_6, %c0_7] : memref<16x128xf32, #tpu.memory_space<vmem>>, vector<16x128xf32>
    tpu.vector_store %arg9[%c0_6, %c0_7], %7 {strides = array<i32>} : memref<16x128xf32, #tpu.memory_space<vmem>>, vector<16x128xf32>,
    %c0_i32_8 = arith.constant 0 : i32
    %9 = arith.cmpi eq, %arg1, %c0_i32_8 : i32
    %10 = arith.extui %9 : i1 to i32
    %c0_i32_9 = arith.constant 0 : i32
    %11 = arith.cmpi ne, %10, %c0_i32_9 : i32
    scf.if %11 {
      %c0_10 = arith.constant 0 : index
      %c0_11 = arith.constant 0 : index
      %12 = vector.load %arg9[%c0_10, %c0_11] : memref<16x128xf32, #tpu.memory_space<vmem>>, vector<16x128xf32>
      %c0_12 = arith.constant 0 : index
      %c0_13 = arith.constant 0 : index
      %13 = vector.load %arg4[%c0_12, %c0_13] : memref<1x128xf32, #tpu.memory_space<vmem>>, vector<1x128xf32>
      %14 = vector.broadcast %13 : vector<1x128xf32> to vector<16x128xf32>
      %15 = arith.addf %12, %14 : vector<16x128xf32>
      %c0_14 = arith.constant 0 : index
      %c0_15 = arith.constant 0 : index
      %16 = vector.load %arg5[%c0_14, %c0_15] : memref<16x128xbf16, #tpu.memory_space<vmem>>, vector<16x128xbf16>
      %17 = arith.extf %16 : vector<16x128xbf16> to vector<16x128xf32>
      %18 = arith.addf %15, %17 : vector<16x128xf32>
      %cst_16 = arith.constant dense<0.000000e+00> : vector<16xf32>
      %19 = vector.multi_reduction <add>, %18, %cst_16 [1] : vector<16x128xf32> to vector<16xf32>
      %20 = vector.shape_cast %19 : vector<16xf32> to vector<16x1xf32>
      %cst_17 = arith.constant 1.280000e+02 : f32
      %21 = vector.broadcast %cst_17 : f32 to vector<16x1xf32>
      %22 = arith.divf %20, %21 : vector<16x1xf32>
      %23 = vector.broadcast %22 : vector<16x1xf32> to vector<16x128xf32>
      %24 = arith.subf %18, %23 : vector<16x128xf32>
      %25 = arith.mulf %24, %24 : vector<16x128xf32>
      %cst_18 = arith.constant dense<0.000000e+00> : vector<16xf32>
      %26 = vector.multi_reduction <add>, %25, %cst_18 [1] : vector<16x128xf32> to vector<16xf32>
      %27 = vector.shape_cast %26 : vector<16xf32> to vector<16x1xf32>
      %cst_19 = arith.constant 1.280000e+02 : f32
      %28 = vector.broadcast %cst_19 : f32 to vector<16x1xf32>
      %29 = arith.divf %27, %28 : vector<16x1xf32>
      %cst_20 = arith.constant 9.99999974E-6 : f32
      %30 = vector.broadcast %cst_20 : f32 to vector<16x1xf32>
      %31 = arith.addf %29, %30 : vector<16x1xf32>
      %32 = math.rsqrt %31 : vector<16x1xf32>
      %33 = vector.broadcast %32 : vector<16x1xf32> to vector<16x128xf32>
      %34 = arith.mulf %24, %33 : vector<16x128xf32>
      %c0_21 = arith.constant 0 : index
      %c0_22 = arith.constant 0 : index
      %35 = vector.load %arg6[%c0_21, %c0_22] : memref<1x128xf32, #tpu.memory_space<vmem>>, vector<1x128xf32>
      %36 = vector.broadcast %35 : vector<1x128xf32> to vector<16x128xf32>
      %37 = arith.mulf %34, %36 : vector<16x128xf32>
      %c0_23 = arith.constant 0 : index
      %c0_24 = arith.constant 0 : index
      %38 = vector.load %arg7[%c0_23, %c0_24] : memref<1x128xf32, #tpu.memory_space<vmem>>, vector<1x128xf32>
      %39 = vector.broadcast %38 : vector<1x128xf32> to vector<16x128xf32>
      %40 = arith.addf %37, %39 : vector<16x128xf32>
      %41 = arith.truncf %40 : vector<16x128xf32> to vector<16x128xbf16>
      %c0_25 = arith.constant 0 : index
      %c0_26 = arith.constant 0 : index
      %42 = vector.load %arg8[%c0_25, %c0_26] : memref<16x128xbf16, #tpu.memory_space<vmem>>, vector<16x128xbf16>
      tpu.vector_store %arg8[%c0_25, %c0_26], %41 {strides = array<i32>} : memref<16x128xbf16, #tpu.memory_space<vmem>>, vector<16x128xbf16>,
    } else {
    }
    return
  }
  func.func @transform_0(%arg0: i32, %arg1: i32) -> (i32, i32) {
    %c0_i32 = arith.constant 0 : i32
    return %arg0, %arg1 : i32, i32
  }
  func.func @transform_1(%arg0: i32, %arg1: i32) -> (i32, i32) {
    %c0_i32 = arith.constant 0 : i32
    %c0_i32_0 = arith.constant 0 : i32
    return %arg1, %c0_i32 : i32, i32
  }
  func.func @transform_2(%arg0: i32, %arg1: i32) -> (i32, i32) {
    %c0_i32 = arith.constant 0 : i32
    %c0_i32_0 = arith.constant 0 : i32
    %c0_i32_1 = arith.constant 0 : i32
    return %c0_i32, %c0_i32_0 : i32, i32
  }
  func.func @transform_3(%arg0: i32, %arg1: i32) -> (i32, i32) {
    %c0_i32 = arith.constant 0 : i32
    %c0_i32_0 = arith.constant 0 : i32
    return %arg0, %c0_i32 : i32, i32
  }
  func.func @transform_4(%arg0: i32, %arg1: i32) -> (i32, i32) {
    %c0_i32 = arith.constant 0 : i32
    %c0_i32_0 = arith.constant 0 : i32
    %c0_i32_1 = arith.constant 0 : i32
    return %c0_i32, %c0_i32_0 : i32, i32
  }
  func.func @transform_5(%arg0: i32, %arg1: i32) -> (i32, i32) {
    %c0_i32 = arith.constant 0 : i32
    %c0_i32_0 = arith.constant 0 : i32
    %c0_i32_1 = arith.constant 0 : i32
    return %c0_i32, %c0_i32_0 : i32, i32
  }
  func.func @transform_6(%arg0: i32, %arg1: i32) -> (i32, i32) {
    %c0_i32 = arith.constant 0 : i32
    %c0_i32_0 = arith.constant 0 : i32
    return %arg0, %c0_i32 : i32, i32
  }
}

module attributes {stable_mosaic.version = 11 : i64} {
  func.func @_matmul_bias_kernel(%arg0: i32, %arg1: i32, %arg2: i32, %arg3: memref<16x128xbf16, #tpu.memory_space<vmem>>, %arg4: memref<128x128xbf16, #tpu.memory_space<vmem>>, %arg5: memref<1x128xf32, #tpu.memory_space<vmem>>, %arg6: memref<16x128xbf16, #tpu.memory_space<vmem>>, %arg7: memref<16x128xf32, #tpu.memory_space<vmem>>) attributes {dimension_semantics = [#tpu.dimension_semantics<parallel>, #tpu.dimension_semantics<parallel>, #tpu.dimension_semantics<arbitrary>], iteration_bounds = array<i64: 1, 1, 1>, scalar_prefetch = 0 : i64, scratch_operands = 1 : i64, tpu.core_type = #tpu.core_type<tc>, window_params = [{transform_indices = @transform_0, window_bounds = array<i64: 16, 128>}, {transform_indices = @transform_1, window_bounds = array<i64: 128, 128>}, {transform_indices = @transform_2, window_bounds = array<i64: 1, 128>}, {transform_indices = @transform_3, window_bounds = array<i64: 16, 128>}]} {
    %c0_i32 = arith.constant 0 : i32
    %0 = arith.cmpi eq, %arg2, %c0_i32 : i32
    %1 = arith.extui %0 : i1 to i32
    %c0_i32_0 = arith.constant 0 : i32
    %2 = arith.cmpi ne, %1, %c0_i32_0 : i32
    scf.if %2 {
      %cst_10 = arith.constant 0.000000e+00 : f32
      %12 = vector.broadcast %cst_10 : f32 to vector<16x128xf32>
      %c0_11 = arith.constant 0 : index
      %c0_12 = arith.constant 0 : index
      %13 = vector.load %arg7[%c0_11, %c0_12] : memref<16x128xf32, #tpu.memory_space<vmem>>, vector<16x128xf32>
      tpu.vector_store %arg7[%c0_11, %c0_12], %12 {strides = array<i32>} : memref<16x128xf32, #tpu.memory_space<vmem>>, vector<16x128xf32>,
    } else {
    }
    %c0 = arith.constant 0 : index
    %c0_1 = arith.constant 0 : index
    %3 = vector.load %arg7[%c0, %c0_1] : memref<16x128xf32, #tpu.memory_space<vmem>>, vector<16x128xf32>
    %c0_2 = arith.constant 0 : index
    %c0_3 = arith.constant 0 : index
    %4 = vector.load %arg3[%c0_2, %c0_3] : memref<16x128xbf16, #tpu.memory_space<vmem>>, vector<16x128xbf16>
    %c0_4 = arith.constant 0 : index
    %c0_5 = arith.constant 0 : index
    %5 = vector.load %arg4[%c0_4, %c0_5] : memref<128x128xbf16, #tpu.memory_space<vmem>>, vector<128x128xbf16>
    %cst = arith.constant dense<0.000000e+00> : vector<16x128xf32>
    %6 = tpu.matmul %4, %5, %cst {dimension_numbers = #tpu.dot_dimension_numbers<[1], [0], [0], [1], [0, 0, 1, 1], [], []>} : vector<16x128xbf16>, vector<128x128xbf16>, vector<16x128xf32> -> vector<16x128xf32>
    %7 = arith.addf %3, %6 : vector<16x128xf32>
    %c0_6 = arith.constant 0 : index
    %c0_7 = arith.constant 0 : index
    %8 = vector.load %arg7[%c0_6, %c0_7] : memref<16x128xf32, #tpu.memory_space<vmem>>, vector<16x128xf32>
    tpu.vector_store %arg7[%c0_6, %c0_7], %7 {strides = array<i32>} : memref<16x128xf32, #tpu.memory_space<vmem>>, vector<16x128xf32>,
    %c0_i32_8 = arith.constant 0 : i32
    %9 = arith.cmpi eq, %arg2, %c0_i32_8 : i32
    %10 = arith.extui %9 : i1 to i32
    %c0_i32_9 = arith.constant 0 : i32
    %11 = arith.cmpi ne, %10, %c0_i32_9 : i32
    scf.if %11 {
      %c0_10 = arith.constant 0 : index
      %c0_11 = arith.constant 0 : index
      %12 = vector.load %arg7[%c0_10, %c0_11] : memref<16x128xf32, #tpu.memory_space<vmem>>, vector<16x128xf32>
      %c0_12 = arith.constant 0 : index
      %c0_13 = arith.constant 0 : index
      %13 = vector.load %arg5[%c0_12, %c0_13] : memref<1x128xf32, #tpu.memory_space<vmem>>, vector<1x128xf32>
      %14 = vector.broadcast %13 : vector<1x128xf32> to vector<16x128xf32>
      %15 = arith.addf %12, %14 : vector<16x128xf32>
      %16 = arith.truncf %15 : vector<16x128xf32> to vector<16x128xbf16>
      %c0_14 = arith.constant 0 : index
      %c0_15 = arith.constant 0 : index
      %17 = vector.load %arg6[%c0_14, %c0_15] : memref<16x128xbf16, #tpu.memory_space<vmem>>, vector<16x128xbf16>
      tpu.vector_store %arg6[%c0_14, %c0_15], %16 {strides = array<i32>} : memref<16x128xbf16, #tpu.memory_space<vmem>>, vector<16x128xbf16>,
    } else {
    }
    return
  }
  func.func @transform_0(%arg0: i32, %arg1: i32, %arg2: i32) -> (i32, i32) {
    %c0_i32 = arith.constant 0 : i32
    return %arg0, %arg2 : i32, i32
  }
  func.func @transform_1(%arg0: i32, %arg1: i32, %arg2: i32) -> (i32, i32) {
    %c0_i32 = arith.constant 0 : i32
    return %arg2, %arg1 : i32, i32
  }
  func.func @transform_2(%arg0: i32, %arg1: i32, %arg2: i32) -> (i32, i32) {
    %c0_i32 = arith.constant 0 : i32
    %c0_i32_0 = arith.constant 0 : i32
    return %c0_i32, %arg1 : i32, i32
  }
  func.func @transform_3(%arg0: i32, %arg1: i32, %arg2: i32) -> (i32, i32) {
    %c0_i32 = arith.constant 0 : i32
    return %arg0, %arg1 : i32, i32
  }
}

module attributes {stable_mosaic.version = 11 : i64} {
  func.func @_flash_mha_kernel(%arg0: i32, %arg1: i32, %arg2: i32, %arg3: memref<1x8x128xbf16, #tpu.memory_space<vmem>>, %arg4: memref<1x8x128xbf16, #tpu.memory_space<vmem>>, %arg5: memref<1x8x128xbf16, #tpu.memory_space<vmem>>, %arg6: memref<1x8x128xbf16, #tpu.memory_space<vmem>>, %arg7: memref<8x4xf32, #tpu.memory_space<vmem>>, %arg8: memref<8x4xf32, #tpu.memory_space<vmem>>, %arg9: memref<8x128xf32, #tpu.memory_space<vmem>>) attributes {dimension_semantics = [#tpu.dimension_semantics<parallel>, #tpu.dimension_semantics<parallel>, #tpu.dimension_semantics<arbitrary>], iteration_bounds = array<i64: 2, 1, 1>, scalar_prefetch = 0 : i64, scratch_operands = 3 : i64, tpu.core_type = #tpu.core_type<tc>, window_params = [{transform_indices = @transform_0, window_bounds = array<i64: 1, 8, 128>}, {transform_indices = @transform_1, window_bounds = array<i64: 1, 8, 128>}, {transform_indices = @transform_2, window_bounds = array<i64: 1, 8, 128>}, {transform_indices = @transform_3, window_bounds = array<i64: 1, 8, 128>}]} {
    %c0_i32 = arith.constant 0 : i32
    %0 = arith.cmpi eq, %arg2, %c0_i32 : i32
    %1 = arith.extui %0 : i1 to i32
    %c0_i32_0 = arith.constant 0 : i32
    %2 = arith.cmpi ne, %1, %c0_i32_0 : i32
    scf.if %2 {
      %cst_68 = arith.constant 0xFF800000 : f32
      %120 = vector.broadcast %cst_68 : f32 to vector<8x4xf32>
      %c0_69 = arith.constant 0 : index
      %c0_70 = arith.constant 0 : index
      %121 = vector.load %arg7[%c0_69, %c0_70] : memref<8x4xf32, #tpu.memory_space<vmem>>, vector<8x4xf32>
      tpu.vector_store %arg7[%c0_69, %c0_70], %120 {strides = array<i32>} : memref<8x4xf32, #tpu.memory_space<vmem>>, vector<8x4xf32>,
      %cst_71 = arith.constant 0.000000e+00 : f32
      %122 = vector.broadcast %cst_71 : f32 to vector<8x4xf32>
      %c0_72 = arith.constant 0 : index
      %c0_73 = arith.constant 0 : index
      %123 = vector.load %arg8[%c0_72, %c0_73] : memref<8x4xf32, #tpu.memory_space<vmem>>, vector<8x4xf32>
      tpu.vector_store %arg8[%c0_72, %c0_73], %122 {strides = array<i32>} : memref<8x4xf32, #tpu.memory_space<vmem>>, vector<8x4xf32>,
      %cst_74 = arith.constant 0.000000e+00 : f32
      %124 = vector.broadcast %cst_74 : f32 to vector<8x128xf32>
      %c0_75 = arith.constant 0 : index
      %c0_76 = arith.constant 0 : index
      %125 = vector.load %arg9[%c0_75, %c0_76] : memref<8x128xf32, #tpu.memory_space<vmem>>, vector<8x128xf32>
      tpu.vector_store %arg9[%c0_75, %c0_76], %124 {strides = array<i32>} : memref<8x128xf32, #tpu.memory_space<vmem>>, vector<8x128xf32>,
    } else {
    }
    %c0 = arith.constant 0 : index
    %c0_1 = arith.constant 0 : index
    %c0_2 = arith.constant 0 : index
    %3 = vector.load %arg3[%c0, %c0_1, %c0_2] : memref<1x8x128xbf16, #tpu.memory_space<vmem>>, vector<1x8x128xbf16>
    %4 = vector.shape_cast %3 : vector<1x8x128xbf16> to vector<8x128xbf16>
    %c0_3 = arith.constant 0 : index
    %c0_4 = arith.constant 0 : index
    %c0_5 = arith.constant 0 : index
    %5 = vector.load %arg4[%c0_3, %c0_4, %c0_5] : memref<1x8x128xbf16, #tpu.memory_space<vmem>>, vector<1x8x128xbf16>
    %6 = vector.shape_cast %5 : vector<1x8x128xbf16> to vector<8x128xbf16>
    %c0_6 = arith.constant 0 : index
    %c0_7 = arith.constant 0 : index
    %c0_8 = arith.constant 0 : index
    %7 = vector.load %arg5[%c0_6, %c0_7, %c0_8] : memref<1x8x128xbf16, #tpu.memory_space<vmem>>, vector<1x8x128xbf16>
    %8 = vector.shape_cast %7 : vector<1x8x128xbf16> to vector<8x128xbf16>
    %9 = vector.extract_strided_slice %4 {offsets = [0, 0], sizes = [8, 32], strides = [1, 1]} : vector<8x128xbf16> to vector<8x32xbf16>
    %10 = vector.extract_strided_slice %6 {offsets = [0, 0], sizes = [8, 32], strides = [1, 1]} : vector<8x128xbf16> to vector<8x32xbf16>
    %11 = vector.extract_strided_slice %8 {offsets = [0, 0], sizes = [8, 32], strides = [1, 1]} : vector<8x128xbf16> to vector<8x32xbf16>
    %cst = arith.constant dense<0.000000e+00> : vector<8x8xf32>
    %12 = tpu.matmul %9, %10, %cst {dimension_numbers = #tpu.dot_dimension_numbers<[1], [1], [0], [0], [0, 0, 1, 0], [], []>} : vector<8x32xbf16>, vector<8x32xbf16>, vector<8x8xf32> -> vector<8x8xf32>
    %c0_9 = arith.constant 0 : index
    %c0_10 = arith.constant 0 : index
    %13 = vector.load %arg7[%c0_9, %c0_10] : memref<8x4xf32, #tpu.memory_space<vmem>>, vector<8x1xf32>
    %cst_11 = arith.constant dense<0xFF800000> : vector<8xf32>
    %14 = vector.multi_reduction <maximumf>, %12, %cst_11 [1] : vector<8x8xf32> to vector<8xf32>
    %15 = vector.shape_cast %14 : vector<8xf32> to vector<8x1xf32>
    %16 = arith.maximumf %13, %15 : vector<8x1xf32>
    %17 = arith.subf %13, %16 : vector<8x1xf32>
    %18 = math.exp %17 : vector<8x1xf32>
    %19 = vector.broadcast %16 : vector<8x1xf32> to vector<8x8xf32>
    %20 = arith.subf %12, %19 : vector<8x8xf32>
    %21 = math.exp %20 : vector<8x8xf32>
    %c0_12 = arith.constant 0 : index
    %c0_13 = arith.constant 0 : index
    %22 = vector.load %arg8[%c0_12, %c0_13] : memref<8x4xf32, #tpu.memory_space<vmem>>, vector<8x1xf32>
    %23 = arith.mulf %18, %22 : vector<8x1xf32>
    %cst_14 = arith.constant dense<0.000000e+00> : vector<8xf32>
    %24 = vector.multi_reduction <add>, %21, %cst_14 [1] : vector<8x8xf32> to vector<8xf32>
    %25 = vector.shape_cast %24 : vector<8xf32> to vector<8x1xf32>
    %26 = arith.addf %23, %25 : vector<8x1xf32>
    %c0_15 = arith.constant 0 : index
    %c0_16 = arith.constant 0 : index
    %27 = vector.load %arg8[%c0_15, %c0_16] : memref<8x4xf32, #tpu.memory_space<vmem>>, vector<8x1xf32>
    tpu.vector_store %arg8[%c0_15, %c0_16], %26 {strides = array<i32>} : memref<8x4xf32, #tpu.memory_space<vmem>>, vector<8x1xf32>,
    %c0_17 = arith.constant 0 : index
    %c0_18 = arith.constant 0 : index
    %28 = vector.load %arg9[%c0_17, %c0_18] : memref<8x128xf32, #tpu.memory_space<vmem>>, vector<8x32xf32>
    %29 = vector.broadcast %18 : vector<8x1xf32> to vector<8x32xf32>
    %30 = arith.mulf %29, %28 : vector<8x32xf32>
    %31 = arith.truncf %21 : vector<8x8xf32> to vector<8x8xbf16>
    %cst_19 = arith.constant dense<0.000000e+00> : vector<8x32xf32>
    %32 = tpu.matmul %31, %11, %cst_19 {dimension_numbers = #tpu.dot_dimension_numbers<[1], [0], [0], [1], [0, 0, 1, 1], [], []>} : vector<8x8xbf16>, vector<8x32xbf16>, vector<8x32xf32> -> vector<8x32xf32>
    %33 = arith.addf %30, %32 : vector<8x32xf32>
    %c0_20 = arith.constant 0 : index
    %c0_21 = arith.constant 0 : index
    %34 = vector.load %arg9[%c0_20, %c0_21] : memref<8x128xf32, #tpu.memory_space<vmem>>, vector<8x32xf32>
    tpu.vector_store %arg9[%c0_20, %c0_21], %33 {strides = array<i32>} : memref<8x128xf32, #tpu.memory_space<vmem>>, vector<8x32xf32>,
    %c0_22 = arith.constant 0 : index
    %c0_23 = arith.constant 0 : index
    %35 = vector.load %arg7[%c0_22, %c0_23] : memref<8x4xf32, #tpu.memory_space<vmem>>, vector<8x1xf32>
    tpu.vector_store %arg7[%c0_22, %c0_23], %16 {strides = array<i32>} : memref<8x4xf32, #tpu.memory_space<vmem>>, vector<8x1xf32>,
    %36 = vector.extract_strided_slice %4 {offsets = [0, 32], sizes = [8, 32], strides = [1, 1]} : vector<8x128xbf16> to vector<8x32xbf16>
    %37 = vector.extract_strided_slice %6 {offsets = [0, 32], sizes = [8, 32], strides = [1, 1]} : vector<8x128xbf16> to vector<8x32xbf16>
    %38 = vector.extract_strided_slice %8 {offsets = [0, 32], sizes = [8, 32], strides = [1, 1]} : vector<8x128xbf16> to vector<8x32xbf16>
    %cst_24 = arith.constant dense<0.000000e+00> : vector<8x8xf32>
    %39 = tpu.matmul %36, %37, %cst_24 {dimension_numbers = #tpu.dot_dimension_numbers<[1], [1], [0], [0], [0, 0, 1, 0], [], []>} : vector<8x32xbf16>, vector<8x32xbf16>, vector<8x8xf32> -> vector<8x8xf32>
    %c0_25 = arith.constant 0 : index
    %c1 = arith.constant 1 : index
    %40 = vector.load %arg7[%c0_25, %c1] : memref<8x4xf32, #tpu.memory_space<vmem>>, vector<8x1xf32>
    %cst_26 = arith.constant dense<0xFF800000> : vector<8xf32>
    %41 = vector.multi_reduction <maximumf>, %39, %cst_26 [1] : vector<8x8xf32> to vector<8xf32>
    %42 = vector.shape_cast %41 : vector<8xf32> to vector<8x1xf32>
    %43 = arith.maximumf %40, %42 : vector<8x1xf32>
    %44 = arith.subf %40, %43 : vector<8x1xf32>
    %45 = math.exp %44 : vector<8x1xf32>
    %46 = vector.broadcast %43 : vector<8x1xf32> to vector<8x8xf32>
    %47 = arith.subf %39, %46 : vector<8x8xf32>
    %48 = math.exp %47 : vector<8x8xf32>
    %c0_27 = arith.constant 0 : index
    %c1_28 = arith.constant 1 : index
    %49 = vector.load %arg8[%c0_27, %c1_28] : memref<8x4xf32, #tpu.memory_space<vmem>>, vector<8x1xf32>
    %50 = arith.mulf %45, %49 : vector<8x1xf32>
    %cst_29 = arith.constant dense<0.000000e+00> : vector<8xf32>
    %51 = vector.multi_reduction <add>, %48, %cst_29 [1] : vector<8x8xf32> to vector<8xf32>
    %52 = vector.shape_cast %51 : vector<8xf32> to vector<8x1xf32>
    %53 = arith.addf %50, %52 : vector<8x1xf32>
    %c0_30 = arith.constant 0 : index
    %c1_31 = arith.constant 1 : index
    %54 = vector.load %arg8[%c0_30, %c1_31] : memref<8x4xf32, #tpu.memory_space<vmem>>, vector<8x1xf32>
    tpu.vector_store %arg8[%c0_30, %c1_31], %53 {strides = array<i32>} : memref<8x4xf32, #tpu.memory_space<vmem>>, vector<8x1xf32>,
    %c0_32 = arith.constant 0 : index
    %c32 = arith.constant 32 : index
    %55 = vector.load %arg9[%c0_32, %c32] : memref<8x128xf32, #tpu.memory_space<vmem>>, vector<8x32xf32>
    %56 = vector.broadcast %45 : vector<8x1xf32> to vector<8x32xf32>
    %57 = arith.mulf %56, %55 : vector<8x32xf32>
    %58 = arith.truncf %48 : vector<8x8xf32> to vector<8x8xbf16>
    %cst_33 = arith.constant dense<0.000000e+00> : vector<8x32xf32>
    %59 = tpu.matmul %58, %38, %cst_33 {dimension_numbers = #tpu.dot_dimension_numbers<[1], [0], [0], [1], [0, 0, 1, 1], [], []>} : vector<8x8xbf16>, vector<8x32xbf16>, vector<8x32xf32> -> vector<8x32xf32>
    %60 = arith.addf %57, %59 : vector<8x32xf32>
    %c0_34 = arith.constant 0 : index
    %c32_35 = arith.constant 32 : index
    %61 = vector.load %arg9[%c0_34, %c32_35] : memref<8x128xf32, #tpu.memory_space<vmem>>, vector<8x32xf32>
    tpu.vector_store %arg9[%c0_34, %c32_35], %60 {strides = array<i32>} : memref<8x128xf32, #tpu.memory_space<vmem>>, vector<8x32xf32>,
    %c0_36 = arith.constant 0 : index
    %c1_37 = arith.constant 1 : index
    %62 = vector.load %arg7[%c0_36, %c1_37] : memref<8x4xf32, #tpu.memory_space<vmem>>, vector<8x1xf32>
    tpu.vector_store %arg7[%c0_36, %c1_37], %43 {strides = array<i32>} : memref<8x4xf32, #tpu.memory_space<vmem>>, vector<8x1xf32>,
    %63 = vector.extract_strided_slice %4 {offsets = [0, 64], sizes = [8, 32], strides = [1, 1]} : vector<8x128xbf16> to vector<8x32xbf16>
    %64 = vector.extract_strided_slice %6 {offsets = [0, 64], sizes = [8, 32], strides = [1, 1]} : vector<8x128xbf16> to vector<8x32xbf16>
    %65 = vector.extract_strided_slice %8 {offsets = [0, 64], sizes = [8, 32], strides = [1, 1]} : vector<8x128xbf16> to vector<8x32xbf16>
    %cst_38 = arith.constant dense<0.000000e+00> : vector<8x8xf32>
    %66 = tpu.matmul %63, %64, %cst_38 {dimension_numbers = #tpu.dot_dimension_numbers<[1], [1], [0], [0], [0, 0, 1, 0], [], []>} : vector<8x32xbf16>, vector<8x32xbf16>, vector<8x8xf32> -> vector<8x8xf32>
    %c0_39 = arith.constant 0 : index
    %c2 = arith.constant 2 : index
    %67 = vector.load %arg7[%c0_39, %c2] : memref<8x4xf32, #tpu.memory_space<vmem>>, vector<8x1xf32>
    %cst_40 = arith.constant dense<0xFF800000> : vector<8xf32>
    %68 = vector.multi_reduction <maximumf>, %66, %cst_40 [1] : vector<8x8xf32> to vector<8xf32>
    %69 = vector.shape_cast %68 : vector<8xf32> to vector<8x1xf32>
    %70 = arith.maximumf %67, %69 : vector<8x1xf32>
    %71 = arith.subf %67, %70 : vector<8x1xf32>
    %72 = math.exp %71 : vector<8x1xf32>
    %73 = vector.broadcast %70 : vector<8x1xf32> to vector<8x8xf32>
    %74 = arith.subf %66, %73 : vector<8x8xf32>
    %75 = math.exp %74 : vector<8x8xf32>
    %c0_41 = arith.constant 0 : index
    %c2_42 = arith.constant 2 : index
    %76 = vector.load %arg8[%c0_41, %c2_42] : memref<8x4xf32, #tpu.memory_space<vmem>>, vector<8x1xf32>
    %77 = arith.mulf %72, %76 : vector<8x1xf32>
    %cst_43 = arith.constant dense<0.000000e+00> : vector<8xf32>
    %78 = vector.multi_reduction <add>, %75, %cst_43 [1] : vector<8x8xf32> to vector<8xf32>
    %79 = vector.shape_cast %78 : vector<8xf32> to vector<8x1xf32>
    %80 = arith.addf %77, %79 : vector<8x1xf32>
    %c0_44 = arith.constant 0 : index
    %c2_45 = arith.constant 2 : index
    %81 = vector.load %arg8[%c0_44, %c2_45] : memref<8x4xf32, #tpu.memory_space<vmem>>, vector<8x1xf32>
    tpu.vector_store %arg8[%c0_44, %c2_45], %80 {strides = array<i32>} : memref<8x4xf32, #tpu.memory_space<vmem>>, vector<8x1xf32>,
    %c0_46 = arith.constant 0 : index
    %c64 = arith.constant 64 : index
    %82 = vector.load %arg9[%c0_46, %c64] : memref<8x128xf32, #tpu.memory_space<vmem>>, vector<8x32xf32>
    %83 = vector.broadcast %72 : vector<8x1xf32> to vector<8x32xf32>
    %84 = arith.mulf %83, %82 : vector<8x32xf32>
    %85 = arith.truncf %75 : vector<8x8xf32> to vector<8x8xbf16>
    %cst_47 = arith.constant dense<0.000000e+00> : vector<8x32xf32>
    %86 = tpu.matmul %85, %65, %cst_47 {dimension_numbers = #tpu.dot_dimension_numbers<[1], [0], [0], [1], [0, 0, 1, 1], [], []>} : vector<8x8xbf16>, vector<8x32xbf16>, vector<8x32xf32> -> vector<8x32xf32>
    %87 = arith.addf %84, %86 : vector<8x32xf32>
    %c0_48 = arith.constant 0 : index
    %c64_49 = arith.constant 64 : index
    %88 = vector.load %arg9[%c0_48, %c64_49] : memref<8x128xf32, #tpu.memory_space<vmem>>, vector<8x32xf32>
    tpu.vector_store %arg9[%c0_48, %c64_49], %87 {strides = array<i32>} : memref<8x128xf32, #tpu.memory_space<vmem>>, vector<8x32xf32>,
    %c0_50 = arith.constant 0 : index
    %c2_51 = arith.constant 2 : index
    %89 = vector.load %arg7[%c0_50, %c2_51] : memref<8x4xf32, #tpu.memory_space<vmem>>, vector<8x1xf32>
    tpu.vector_store %arg7[%c0_50, %c2_51], %70 {strides = array<i32>} : memref<8x4xf32, #tpu.memory_space<vmem>>, vector<8x1xf32>,
    %90 = vector.extract_strided_slice %4 {offsets = [0, 96], sizes = [8, 32], strides = [1, 1]} : vector<8x128xbf16> to vector<8x32xbf16>
    %91 = vector.extract_strided_slice %6 {offsets = [0, 96], sizes = [8, 32], strides = [1, 1]} : vector<8x128xbf16> to vector<8x32xbf16>
    %92 = vector.extract_strided_slice %8 {offsets = [0, 96], sizes = [8, 32], strides = [1, 1]} : vector<8x128xbf16> to vector<8x32xbf16>
    %cst_52 = arith.constant dense<0.000000e+00> : vector<8x8xf32>
    %93 = tpu.matmul %90, %91, %cst_52 {dimension_numbers = #tpu.dot_dimension_numbers<[1], [1], [0], [0], [0, 0, 1, 0], [], []>} : vector<8x32xbf16>, vector<8x32xbf16>, vector<8x8xf32> -> vector<8x8xf32>
    %c0_53 = arith.constant 0 : index
    %c3 = arith.constant 3 : index
    %94 = vector.load %arg7[%c0_53, %c3] : memref<8x4xf32, #tpu.memory_space<vmem>>, vector<8x1xf32>
    %cst_54 = arith.constant dense<0xFF800000> : vector<8xf32>
    %95 = vector.multi_reduction <maximumf>, %93, %cst_54 [1] : vector<8x8xf32> to vector<8xf32>
    %96 = vector.shape_cast %95 : vector<8xf32> to vector<8x1xf32>
    %97 = arith.maximumf %94, %96 : vector<8x1xf32>
    %98 = arith.subf %94, %97 : vector<8x1xf32>
    %99 = math.exp %98 : vector<8x1xf32>
    %100 = vector.broadcast %97 : vector<8x1xf32> to vector<8x8xf32>
    %101 = arith.subf %93, %100 : vector<8x8xf32>
    %102 = math.exp %101 : vector<8x8xf32>
    %c0_55 = arith.constant 0 : index
    %c3_56 = arith.constant 3 : index
    %103 = vector.load %arg8[%c0_55, %c3_56] : memref<8x4xf32, #tpu.memory_space<vmem>>, vector<8x1xf32>
    %104 = arith.mulf %99, %103 : vector<8x1xf32>
    %cst_57 = arith.constant dense<0.000000e+00> : vector<8xf32>
    %105 = vector.multi_reduction <add>, %102, %cst_57 [1] : vector<8x8xf32> to vector<8xf32>
    %106 = vector.shape_cast %105 : vector<8xf32> to vector<8x1xf32>
    %107 = arith.addf %104, %106 : vector<8x1xf32>
    %c0_58 = arith.constant 0 : index
    %c3_59 = arith.constant 3 : index
    %108 = vector.load %arg8[%c0_58, %c3_59] : memref<8x4xf32, #tpu.memory_space<vmem>>, vector<8x1xf32>
    tpu.vector_store %arg8[%c0_58, %c3_59], %107 {strides = array<i32>} : memref<8x4xf32, #tpu.memory_space<vmem>>, vector<8x1xf32>,
    %c0_60 = arith.constant 0 : index
    %c96 = arith.constant 96 : index
    %109 = vector.load %arg9[%c0_60, %c96] : memref<8x128xf32, #tpu.memory_space<vmem>>, vector<8x32xf32>
    %110 = vector.broadcast %99 : vector<8x1xf32> to vector<8x32xf32>
    %111 = arith.mulf %110, %109 : vector<8x32xf32>
    %112 = arith.truncf %102 : vector<8x8xf32> to vector<8x8xbf16>
    %cst_61 = arith.constant dense<0.000000e+00> : vector<8x32xf32>
    %113 = tpu.matmul %112, %92, %cst_61 {dimension_numbers = #tpu.dot_dimension_numbers<[1], [0], [0], [1], [0, 0, 1, 1], [], []>} : vector<8x8xbf16>, vector<8x32xbf16>, vector<8x32xf32> -> vector<8x32xf32>
    %114 = arith.addf %111, %113 : vector<8x32xf32>
    %c0_62 = arith.constant 0 : index
    %c96_63 = arith.constant 96 : index
    %115 = vector.load %arg9[%c0_62, %c96_63] : memref<8x128xf32, #tpu.memory_space<vmem>>, vector<8x32xf32>
    tpu.vector_store %arg9[%c0_62, %c96_63], %114 {strides = array<i32>} : memref<8x128xf32, #tpu.memory_space<vmem>>, vector<8x32xf32>,
    %c0_64 = arith.constant 0 : index
    %c3_65 = arith.constant 3 : index
    %116 = vector.load %arg7[%c0_64, %c3_65] : memref<8x4xf32, #tpu.memory_space<vmem>>, vector<8x1xf32>
    tpu.vector_store %arg7[%c0_64, %c3_65], %97 {strides = array<i32>} : memref<8x4xf32, #tpu.memory_space<vmem>>, vector<8x1xf32>,
    %c0_i32_66 = arith.constant 0 : i32
    %117 = arith.cmpi eq, %arg2, %c0_i32_66 : i32
    %118 = arith.extui %117 : i1 to i32
    %c0_i32_67 = arith.constant 0 : i32
    %119 = arith.cmpi ne, %118, %c0_i32_67 : i32
    scf.if %119 {
      %c0_68 = arith.constant 0 : index
      %c0_69 = arith.constant 0 : index
      %120 = vector.load %arg8[%c0_68, %c0_69] : memref<8x4xf32, #tpu.memory_space<vmem>>, vector<8x4xf32>
      %121 = tpu.reciprocal %120 : vector<8x4xf32> -> vector<8x4xf32>
      %c0_70 = arith.constant 0 : index
      %c0_71 = arith.constant 0 : index
      %122 = vector.load %arg9[%c0_70, %c0_71] : memref<8x128xf32, #tpu.memory_space<vmem>>, vector<8x32xf32>
      %123 = vector.extract_strided_slice %121 {offsets = [0, 0], sizes = [8, 1], strides = [1, 1]} : vector<8x4xf32> to vector<8x1xf32>
      %124 = vector.broadcast %123 : vector<8x1xf32> to vector<8x32xf32>
      %125 = arith.mulf %122, %124 : vector<8x32xf32>
      %c0_72 = arith.constant 0 : index
      %c32_73 = arith.constant 32 : index
      %126 = vector.load %arg9[%c0_72, %c32_73] : memref<8x128xf32, #tpu.memory_space<vmem>>, vector<8x32xf32>
      %127 = vector.extract_strided_slice %121 {offsets = [0, 1], sizes = [8, 1], strides = [1, 1]} : vector<8x4xf32> to vector<8x1xf32>
      %128 = vector.broadcast %127 : vector<8x1xf32> to vector<8x32xf32>
      %129 = arith.mulf %126, %128 : vector<8x32xf32>
      %c0_74 = arith.constant 0 : index
      %c64_75 = arith.constant 64 : index
      %130 = vector.load %arg9[%c0_74, %c64_75] : memref<8x128xf32, #tpu.memory_space<vmem>>, vector<8x32xf32>
      %131 = vector.extract_strided_slice %121 {offsets = [0, 2], sizes = [8, 1], strides = [1, 1]} : vector<8x4xf32> to vector<8x1xf32>
      %132 = vector.broadcast %131 : vector<8x1xf32> to vector<8x32xf32>
      %133 = arith.mulf %130, %132 : vector<8x32xf32>
      %c0_76 = arith.constant 0 : index
      %c96_77 = arith.constant 96 : index
      %134 = vector.load %arg9[%c0_76, %c96_77] : memref<8x128xf32, #tpu.memory_space<vmem>>, vector<8x32xf32>
      %135 = vector.extract_strided_slice %121 {offsets = [0, 3], sizes = [8, 1], strides = [1, 1]} : vector<8x4xf32> to vector<8x1xf32>
      %136 = vector.broadcast %135 : vector<8x1xf32> to vector<8x32xf32>
      %137 = arith.mulf %134, %136 : vector<8x32xf32>
      %138 = tpu.concatenate %125, %129, %133, %137 in 1 : vector<8x32xf32>, vector<8x32xf32>, vector<8x32xf32>, vector<8x32xf32> -> vector<8x128xf32>
      %139 = arith.truncf %138 : vector<8x128xf32> to vector<8x128xbf16>
      %c0_78 = arith.constant 0 : index
      %c0_79 = arith.constant 0 : index
      %c0_80 = arith.constant 0 : index
      %140 = vector.load %arg6[%c0_78, %c0_79, %c0_80] : memref<1x8x128xbf16, #tpu.memory_space<vmem>>, vector<1x8x128xbf16>
      %141 = vector.shape_cast %140 : vector<1x8x128xbf16> to vector<8x128xbf16>
      %142 = vector.shape_cast %139 : vector<8x128xbf16> to vector<1x8x128xbf16>
      tpu.vector_store %arg6[%c0_78, %c0_79, %c0_80], %142 {strides = array<i32>} : memref<1x8x128xbf16, #tpu.memory_space<vmem>>, vector<1x8x128xbf16>,
    } else {
    }
    return
  }
  func.func @transform_0(%arg0: i32, %arg1: i32, %arg2: i32) -> (i32, i32, i32) {
    %c0_i32 = arith.constant 0 : i32
    %c0_i32_0 = arith.constant 0 : i32
    return %arg0, %arg1, %c0_i32 : i32, i32, i32
  }
  func.func @transform_1(%arg0: i32, %arg1: i32, %arg2: i32) -> (i32, i32, i32) {
    %c1_i32 = arith.constant 1 : i32
    %c0_i32 = arith.constant 0 : i32
    return %arg0, %arg2, %c1_i32 : i32, i32, i32
  }
  func.func @transform_2(%arg0: i32, %arg1: i32, %arg2: i32) -> (i32, i32, i32) {
    %c2_i32 = arith.constant 2 : i32
    %c0_i32 = arith.constant 0 : i32
    return %arg0, %arg2, %c2_i32 : i32, i32, i32
  }
  func.func @transform_3(%arg0: i32, %arg1: i32, %arg2: i32) -> (i32, i32, i32) {
    %c0_i32 = arith.constant 0 : i32
    %c0_i32_0 = arith.constant 0 : i32
    return %arg0, %arg1, %c0_i32 : i32, i32, i32
  }
}

module attributes {stable_mosaic.version = 11 : i64} {
  func.func @_ffn_res_ln_kernel(%arg0: i32, %arg1: i32, %arg2: memref<16x128xbf16, #tpu.memory_space<vmem>>, %arg3: memref<128x256xbf16, #tpu.memory_space<vmem>>, %arg4: memref<1x256xf32, #tpu.memory_space<vmem>>, %arg5: memref<256x128xbf16, #tpu.memory_space<vmem>>, %arg6: memref<1x128xf32, #tpu.memory_space<vmem>>, %arg7: memref<1x128xf32, #tpu.memory_space<vmem>>, %arg8: memref<1x128xf32, #tpu.memory_space<vmem>>, %arg9: memref<16x128xbf16, #tpu.memory_space<vmem>>, %arg10: memref<16x128xf32, #tpu.memory_space<vmem>>) attributes {dimension_semantics = [#tpu.dimension_semantics<parallel>, #tpu.dimension_semantics<arbitrary>], iteration_bounds = array<i64: 1, 1>, scalar_prefetch = 0 : i64, scratch_operands = 1 : i64, tpu.core_type = #tpu.core_type<tc>, window_params = [{transform_indices = @transform_0, window_bounds = array<i64: 16, 128>}, {transform_indices = @transform_1, window_bounds = array<i64: 128, 256>}, {transform_indices = @transform_2, window_bounds = array<i64: 1, 256>}, {transform_indices = @transform_3, window_bounds = array<i64: 256, 128>}, {pipeline_mode = #tpu.pipeline_mode<synchronous>, transform_indices = @transform_4, window_bounds = array<i64: 1, 128>}, {pipeline_mode = #tpu.pipeline_mode<synchronous>, transform_indices = @transform_5, window_bounds = array<i64: 1, 128>}, {pipeline_mode = #tpu.pipeline_mode<synchronous>, transform_indices = @transform_6, window_bounds = array<i64: 1, 128>}, {transform_indices = @transform_7, window_bounds = array<i64: 16, 128>}]} {
    %c0_i32 = arith.constant 0 : i32
    %0 = arith.cmpi eq, %arg1, %c0_i32 : i32
    %1 = arith.extui %0 : i1 to i32
    %c0_i32_0 = arith.constant 0 : i32
    %2 = arith.cmpi ne, %1, %c0_i32_0 : i32
    scf.if %2 {
      %cst_16 = arith.constant 0.000000e+00 : f32
      %20 = vector.broadcast %cst_16 : f32 to vector<16x128xf32>
      %c0_17 = arith.constant 0 : index
      %c0_18 = arith.constant 0 : index
      %21 = vector.load %arg10[%c0_17, %c0_18] : memref<16x128xf32, #tpu.memory_space<vmem>>, vector<16x128xf32>
      tpu.vector_store %arg10[%c0_17, %c0_18], %20 {strides = array<i32>} : memref<16x128xf32, #tpu.memory_space<vmem>>, vector<16x128xf32>,
    } else {
    }
    %c0 = arith.constant 0 : index
    %c0_1 = arith.constant 0 : index
    %3 = vector.load %arg2[%c0, %c0_1] : memref<16x128xbf16, #tpu.memory_space<vmem>>, vector<16x128xbf16>
    %c0_2 = arith.constant 0 : index
    %c0_3 = arith.constant 0 : index
    %4 = vector.load %arg3[%c0_2, %c0_3] : memref<128x256xbf16, #tpu.memory_space<vmem>>, vector<128x256xbf16>
    %cst = arith.constant dense<0.000000e+00> : vector<16x256xf32>
    %5 = tpu.matmul %3, %4, %cst {dimension_numbers = #tpu.dot_dimension_numbers<[1], [0], [0], [1], [0, 0, 1, 1], [], []>} : vector<16x128xbf16>, vector<128x256xbf16>, vector<16x256xf32> -> vector<16x256xf32>
    %c0_4 = arith.constant 0 : index
    %c0_5 = arith.constant 0 : index
    %6 = vector.load %arg4[%c0_4, %c0_5] : memref<1x256xf32, #tpu.memory_space<vmem>>, vector<1x256xf32>
    %7 = vector.broadcast %6 : vector<1x256xf32> to vector<16x256xf32>
    %8 = arith.addf %5, %7 : vector<16x256xf32>
    %cst_6 = arith.constant 0.000000e+00 : f32
    %9 = vector.broadcast %cst_6 : f32 to vector<16x256xf32>
    %10 = arith.maximumf %8, %9 : vector<16x256xf32>
    %c0_7 = arith.constant 0 : index
    %c0_8 = arith.constant 0 : index
    %11 = vector.load %arg10[%c0_7, %c0_8] : memref<16x128xf32, #tpu.memory_space<vmem>>, vector<16x128xf32>
    %12 = arith.truncf %10 : vector<16x256xf32> to vector<16x256xbf16>
    %c0_9 = arith.constant 0 : index
    %c0_10 = arith.constant 0 : index
    %13 = vector.load %arg5[%c0_9, %c0_10] : memref<256x128xbf16, #tpu.memory_space<vmem>>, vector<256x128xbf16>
    %cst_11 = arith.constant dense<0.000000e+00> : vector<16x128xf32>
    %14 = tpu.matmul %12, %13, %cst_11 {dimension_numbers = #tpu.dot_dimension_numbers<[1], [0], [0], [1], [0, 0, 1, 1], [], []>} : vector<16x256xbf16>, vector<256x128xbf16>, vector<16x128xf32> -> vector<16x128xf32>
    %15 = arith.addf %11, %14 : vector<16x128xf32>
    %c0_12 = arith.constant 0 : index
    %c0_13 = arith.constant 0 : index
    %16 = vector.load %arg10[%c0_12, %c0_13] : memref<16x128xf32, #tpu.memory_space<vmem>>, vector<16x128xf32>
    tpu.vector_store %arg10[%c0_12, %c0_13], %15 {strides = array<i32>} : memref<16x128xf32, #tpu.memory_space<vmem>>, vector<16x128xf32>,
    %c0_i32_14 = arith.constant 0 : i32
    %17 = arith.cmpi eq, %arg1, %c0_i32_14 : i32
    %18 = arith.extui %17 : i1 to i32
    %c0_i32_15 = arith.constant 0 : i32
    %19 = arith.cmpi ne, %18, %c0_i32_15 : i32
    scf.if %19 {
      %c0_16 = arith.constant 0 : index
      %c0_17 = arith.constant 0 : index
      %20 = vector.load %arg10[%c0_16, %c0_17] : memref<16x128xf32, #tpu.memory_space<vmem>>, vector<16x128xf32>
      %c0_18 = arith.constant 0 : index
      %c0_19 = arith.constant 0 : index
      %21 = vector.load %arg6[%c0_18, %c0_19] : memref<1x128xf32, #tpu.memory_space<vmem>>, vector<1x128xf32>
      %22 = vector.broadcast %21 : vector<1x128xf32> to vector<16x128xf32>
      %23 = arith.addf %20, %22 : vector<16x128xf32>
      %c0_20 = arith.constant 0 : index
      %c0_21 = arith.constant 0 : index
      %24 = vector.load %arg2[%c0_20, %c0_21] : memref<16x128xbf16, #tpu.memory_space<vmem>>, vector<16x128xbf16>
      %25 = arith.extf %24 : vector<16x128xbf16> to vector<16x128xf32>
      %26 = arith.addf %23, %25 : vector<16x128xf32>
      %cst_22 = arith.constant dense<0.000000e+00> : vector<16xf32>
      %27 = vector.multi_reduction <add>, %26, %cst_22 [1] : vector<16x128xf32> to vector<16xf32>
      %28 = vector.shape_cast %27 : vector<16xf32> to vector<16x1xf32>
      %cst_23 = arith.constant 1.280000e+02 : f32
      %29 = vector.broadcast %cst_23 : f32 to vector<16x1xf32>
      %30 = arith.divf %28, %29 : vector<16x1xf32>
      %31 = vector.broadcast %30 : vector<16x1xf32> to vector<16x128xf32>
      %32 = arith.subf %26, %31 : vector<16x128xf32>
      %33 = arith.mulf %32, %32 : vector<16x128xf32>
      %cst_24 = arith.constant dense<0.000000e+00> : vector<16xf32>
      %34 = vector.multi_reduction <add>, %33, %cst_24 [1] : vector<16x128xf32> to vector<16xf32>
      %35 = vector.shape_cast %34 : vector<16xf32> to vector<16x1xf32>
      %cst_25 = arith.constant 1.280000e+02 : f32
      %36 = vector.broadcast %cst_25 : f32 to vector<16x1xf32>
      %37 = arith.divf %35, %36 : vector<16x1xf32>
      %cst_26 = arith.constant 9.99999974E-6 : f32
      %38 = vector.broadcast %cst_26 : f32 to vector<16x1xf32>
      %39 = arith.addf %37, %38 : vector<16x1xf32>
      %40 = math.rsqrt %39 : vector<16x1xf32>
      %41 = vector.broadcast %40 : vector<16x1xf32> to vector<16x128xf32>
      %42 = arith.mulf %32, %41 : vector<16x128xf32>
      %c0_27 = arith.constant 0 : index
      %c0_28 = arith.constant 0 : index
      %43 = vector.load %arg7[%c0_27, %c0_28] : memref<1x128xf32, #tpu.memory_space<vmem>>, vector<1x128xf32>
      %44 = vector.broadcast %43 : vector<1x128xf32> to vector<16x128xf32>
      %45 = arith.mulf %42, %44 : vector<16x128xf32>
      %c0_29 = arith.constant 0 : index
      %c0_30 = arith.constant 0 : index
      %46 = vector.load %arg8[%c0_29, %c0_30] : memref<1x128xf32, #tpu.memory_space<vmem>>, vector<1x128xf32>
      %47 = vector.broadcast %46 : vector<1x128xf32> to vector<16x128xf32>
      %48 = arith.addf %45, %47 : vector<16x128xf32>
      %49 = arith.truncf %48 : vector<16x128xf32> to vector<16x128xbf16>
      %c0_31 = arith.constant 0 : index
      %c0_32 = arith.constant 0 : index
      %50 = vector.load %arg9[%c0_31, %c0_32] : memref<16x128xbf16, #tpu.memory_space<vmem>>, vector<16x128xbf16>
      tpu.vector_store %arg9[%c0_31, %c0_32], %49 {strides = array<i32>} : memref<16x128xbf16, #tpu.memory_space<vmem>>, vector<16x128xbf16>,
    } else {
    }
    return
  }
  func.func @transform_0(%arg0: i32, %arg1: i32) -> (i32, i32) {
    %c0_i32 = arith.constant 0 : i32
    %c0_i32_0 = arith.constant 0 : i32
    return %arg0, %c0_i32 : i32, i32
  }
  func.func @transform_1(%arg0: i32, %arg1: i32) -> (i32, i32) {
    %c0_i32 = arith.constant 0 : i32
    %c0_i32_0 = arith.constant 0 : i32
    return %c0_i32, %arg1 : i32, i32
  }
  func.func @transform_2(%arg0: i32, %arg1: i32) -> (i32, i32) {
    %c0_i32 = arith.constant 0 : i32
    %c0_i32_0 = arith.constant 0 : i32
    return %c0_i32, %arg1 : i32, i32
  }
  func.func @transform_3(%arg0: i32, %arg1: i32) -> (i32, i32) {
    %c0_i32 = arith.constant 0 : i32
    %c0_i32_0 = arith.constant 0 : i32
    return %arg1, %c0_i32 : i32, i32
  }
  func.func @transform_4(%arg0: i32, %arg1: i32) -> (i32, i32) {
    %c0_i32 = arith.constant 0 : i32
    %c0_i32_0 = arith.constant 0 : i32
    %c0_i32_1 = arith.constant 0 : i32
    return %c0_i32, %c0_i32_0 : i32, i32
  }
  func.func @transform_5(%arg0: i32, %arg1: i32) -> (i32, i32) {
    %c0_i32 = arith.constant 0 : i32
    %c0_i32_0 = arith.constant 0 : i32
    %c0_i32_1 = arith.constant 0 : i32
    return %c0_i32, %c0_i32_0 : i32, i32
  }
  func.func @transform_6(%arg0: i32, %arg1: i32) -> (i32, i32) {
    %c0_i32 = arith.constant 0 : i32
    %c0_i32_0 = arith.constant 0 : i32
    %c0_i32_1 = arith.constant 0 : i32
    return %c0_i32, %c0_i32_0 : i32, i32
  }
  func.func @transform_7(%arg0: i32, %arg1: i32) -> (i32, i32) {
    %c0_i32 = arith.constant 0 : i32
    %c0_i32_0 = arith.constant 0 : i32
    return %arg0, %c0_i32 : i32, i32
  }
}

module attributes {stable_mosaic.version = 11 : i64} {
  func.func @_matmul_bias_kernel(%arg0: i32, %arg1: i32, %arg2: i32, %arg3: memref<32x128xbf16, #tpu.memory_space<vmem>>, %arg4: memref<128x256xbf16, #tpu.memory_space<vmem>>, %arg5: memref<1x256xf32, #tpu.memory_space<vmem>>, %arg6: memref<32x256xbf16, #tpu.memory_space<vmem>>, %arg7: memref<32x256xf32, #tpu.memory_space<vmem>>) attributes {dimension_semantics = [#tpu.dimension_semantics<parallel>, #tpu.dimension_semantics<parallel>, #tpu.dimension_semantics<arbitrary>], iteration_bounds = array<i64: 1, 1, 1>, scalar_prefetch = 0 : i64, scratch_operands = 1 : i64, tpu.core_type = #tpu.core_type<tc>, window_params = [{transform_indices = @transform_0, window_bounds = array<i64: 32, 128>}, {transform_indices = @transform_1, window_bounds = array<i64: 128, 256>}, {transform_indices = @transform_2, window_bounds = array<i64: 1, 256>}, {transform_indices = @transform_3, window_bounds = array<i64: 32, 256>}]} {
    %c0_i32 = arith.constant 0 : i32
    %0 = arith.cmpi eq, %arg2, %c0_i32 : i32
    %1 = arith.extui %0 : i1 to i32
    %c0_i32_0 = arith.constant 0 : i32
    %2 = arith.cmpi ne, %1, %c0_i32_0 : i32
    scf.if %2 {
      %cst_10 = arith.constant 0.000000e+00 : f32
      %12 = vector.broadcast %cst_10 : f32 to vector<32x256xf32>
      %c0_11 = arith.constant 0 : index
      %c0_12 = arith.constant 0 : index
      %13 = vector.load %arg7[%c0_11, %c0_12] : memref<32x256xf32, #tpu.memory_space<vmem>>, vector<32x256xf32>
      tpu.vector_store %arg7[%c0_11, %c0_12], %12 {strides = array<i32>} : memref<32x256xf32, #tpu.memory_space<vmem>>, vector<32x256xf32>,
    } else {
    }
    %c0 = arith.constant 0 : index
    %c0_1 = arith.constant 0 : index
    %3 = vector.load %arg7[%c0, %c0_1] : memref<32x256xf32, #tpu.memory_space<vmem>>, vector<32x256xf32>
    %c0_2 = arith.constant 0 : index
    %c0_3 = arith.constant 0 : index
    %4 = vector.load %arg3[%c0_2, %c0_3] : memref<32x128xbf16, #tpu.memory_space<vmem>>, vector<32x128xbf16>
    %c0_4 = arith.constant 0 : index
    %c0_5 = arith.constant 0 : index
    %5 = vector.load %arg4[%c0_4, %c0_5] : memref<128x256xbf16, #tpu.memory_space<vmem>>, vector<128x256xbf16>
    %cst = arith.constant dense<0.000000e+00> : vector<32x256xf32>
    %6 = tpu.matmul %4, %5, %cst {dimension_numbers = #tpu.dot_dimension_numbers<[1], [0], [0], [1], [0, 0, 1, 1], [], []>} : vector<32x128xbf16>, vector<128x256xbf16>, vector<32x256xf32> -> vector<32x256xf32>
    %7 = arith.addf %3, %6 : vector<32x256xf32>
    %c0_6 = arith.constant 0 : index
    %c0_7 = arith.constant 0 : index
    %8 = vector.load %arg7[%c0_6, %c0_7] : memref<32x256xf32, #tpu.memory_space<vmem>>, vector<32x256xf32>
    tpu.vector_store %arg7[%c0_6, %c0_7], %7 {strides = array<i32>} : memref<32x256xf32, #tpu.memory_space<vmem>>, vector<32x256xf32>,
    %c0_i32_8 = arith.constant 0 : i32
    %9 = arith.cmpi eq, %arg2, %c0_i32_8 : i32
    %10 = arith.extui %9 : i1 to i32
    %c0_i32_9 = arith.constant 0 : i32
    %11 = arith.cmpi ne, %10, %c0_i32_9 : i32
    scf.if %11 {
      %c0_10 = arith.constant 0 : index
      %c0_11 = arith.constant 0 : index
      %12 = vector.load %arg7[%c0_10, %c0_11] : memref<32x256xf32, #tpu.memory_space<vmem>>, vector<32x256xf32>
      %c0_12 = arith.constant 0 : index
      %c0_13 = arith.constant 0 : index
      %13 = vector.load %arg5[%c0_12, %c0_13] : memref<1x256xf32, #tpu.memory_space<vmem>>, vector<1x256xf32>
      %14 = vector.broadcast %13 : vector<1x256xf32> to vector<32x256xf32>
      %15 = arith.addf %12, %14 : vector<32x256xf32>
      %16 = arith.truncf %15 : vector<32x256xf32> to vector<32x256xbf16>
      %c0_14 = arith.constant 0 : index
      %c0_15 = arith.constant 0 : index
      %17 = vector.load %arg6[%c0_14, %c0_15] : memref<32x256xbf16, #tpu.memory_space<vmem>>, vector<32x256xbf16>
      tpu.vector_store %arg6[%c0_14, %c0_15], %16 {strides = array<i32>} : memref<32x256xbf16, #tpu.memory_space<vmem>>, vector<32x256xbf16>,
    } else {
    }
    return
  }
  func.func @transform_0(%arg0: i32, %arg1: i32, %arg2: i32) -> (i32, i32) {
    %c0_i32 = arith.constant 0 : i32
    return %arg0, %arg2 : i32, i32
  }
  func.func @transform_1(%arg0: i32, %arg1: i32, %arg2: i32) -> (i32, i32) {
    %c0_i32 = arith.constant 0 : i32
    return %arg2, %arg1 : i32, i32
  }
  func.func @transform_2(%arg0: i32, %arg1: i32, %arg2: i32) -> (i32, i32) {
    %c0_i32 = arith.constant 0 : i32
    %c0_i32_0 = arith.constant 0 : i32
    return %c0_i32, %arg1 : i32, i32
  }
  func.func @transform_3(%arg0: i32, %arg1: i32, %arg2: i32) -> (i32, i32) {
    %c0_i32 = arith.constant 0 : i32
    return %arg0, %arg1 : i32, i32
  }
}

module attributes {stable_mosaic.version = 11 : i64} {
  func.func @_flash_mha_kernel(%arg0: i32, %arg1: i32, %arg2: i32, %arg3: memref<1x8x128xbf16, #tpu.memory_space<vmem>>, %arg4: memref<1x16x128xbf16, #tpu.memory_space<vmem>>, %arg5: memref<1x16x128xbf16, #tpu.memory_space<vmem>>, %arg6: memref<1x8x128xbf16, #tpu.memory_space<vmem>>, %arg7: memref<8x4xf32, #tpu.memory_space<vmem>>, %arg8: memref<8x4xf32, #tpu.memory_space<vmem>>, %arg9: memref<8x128xf32, #tpu.memory_space<vmem>>) attributes {dimension_semantics = [#tpu.dimension_semantics<parallel>, #tpu.dimension_semantics<parallel>, #tpu.dimension_semantics<arbitrary>], iteration_bounds = array<i64: 2, 1, 1>, scalar_prefetch = 0 : i64, scratch_operands = 3 : i64, tpu.core_type = #tpu.core_type<tc>, window_params = [{transform_indices = @transform_0, window_bounds = array<i64: 1, 8, 128>}, {transform_indices = @transform_1, window_bounds = array<i64: 1, 16, 128>}, {transform_indices = @transform_2, window_bounds = array<i64: 1, 16, 128>}, {transform_indices = @transform_3, window_bounds = array<i64: 1, 8, 128>}]} {
    %c0_i32 = arith.constant 0 : i32
    %0 = arith.cmpi eq, %arg2, %c0_i32 : i32
    %1 = arith.extui %0 : i1 to i32
    %c0_i32_0 = arith.constant 0 : i32
    %2 = arith.cmpi ne, %1, %c0_i32_0 : i32
    scf.if %2 {
      %cst_68 = arith.constant 0xFF800000 : f32
      %120 = vector.broadcast %cst_68 : f32 to vector<8x4xf32>
      %c0_69 = arith.constant 0 : index
      %c0_70 = arith.constant 0 : index
      %121 = vector.load %arg7[%c0_69, %c0_70] : memref<8x4xf32, #tpu.memory_space<vmem>>, vector<8x4xf32>
      tpu.vector_store %arg7[%c0_69, %c0_70], %120 {strides = array<i32>} : memref<8x4xf32, #tpu.memory_space<vmem>>, vector<8x4xf32>,
      %cst_71 = arith.constant 0.000000e+00 : f32
      %122 = vector.broadcast %cst_71 : f32 to vector<8x4xf32>
      %c0_72 = arith.constant 0 : index
      %c0_73 = arith.constant 0 : index
      %123 = vector.load %arg8[%c0_72, %c0_73] : memref<8x4xf32, #tpu.memory_space<vmem>>, vector<8x4xf32>
      tpu.vector_store %arg8[%c0_72, %c0_73], %122 {strides = array<i32>} : memref<8x4xf32, #tpu.memory_space<vmem>>, vector<8x4xf32>,
      %cst_74 = arith.constant 0.000000e+00 : f32
      %124 = vector.broadcast %cst_74 : f32 to vector<8x128xf32>
      %c0_75 = arith.constant 0 : index
      %c0_76 = arith.constant 0 : index
      %125 = vector.load %arg9[%c0_75, %c0_76] : memref<8x128xf32, #tpu.memory_space<vmem>>, vector<8x128xf32>
      tpu.vector_store %arg9[%c0_75, %c0_76], %124 {strides = array<i32>} : memref<8x128xf32, #tpu.memory_space<vmem>>, vector<8x128xf32>,
    } else {
    }
    %c0 = arith.constant 0 : index
    %c0_1 = arith.constant 0 : index
    %c0_2 = arith.constant 0 : index
    %3 = vector.load %arg3[%c0, %c0_1, %c0_2] : memref<1x8x128xbf16, #tpu.memory_space<vmem>>, vector<1x8x128xbf16>
    %4 = vector.shape_cast %3 : vector<1x8x128xbf16> to vector<8x128xbf16>
    %c0_3 = arith.constant 0 : index
    %c0_4 = arith.constant 0 : index
    %c0_5 = arith.constant 0 : index
    %5 = vector.load %arg4[%c0_3, %c0_4, %c0_5] : memref<1x16x128xbf16, #tpu.memory_space<vmem>>, vector<1x16x128xbf16>
    %6 = vector.shape_cast %5 : vector<1x16x128xbf16> to vector<16x128xbf16>
    %c0_6 = arith.constant 0 : index
    %c0_7 = arith.constant 0 : index
    %c0_8 = arith.constant 0 : index
    %7 = vector.load %arg5[%c0_6, %c0_7, %c0_8] : memref<1x16x128xbf16, #tpu.memory_space<vmem>>, vector<1x16x128xbf16>
    %8 = vector.shape_cast %7 : vector<1x16x128xbf16> to vector<16x128xbf16>
    %9 = vector.extract_strided_slice %4 {offsets = [0, 0], sizes = [8, 32], strides = [1, 1]} : vector<8x128xbf16> to vector<8x32xbf16>
    %10 = vector.extract_strided_slice %6 {offsets = [0, 0], sizes = [16, 32], strides = [1, 1]} : vector<16x128xbf16> to vector<16x32xbf16>
    %11 = vector.extract_strided_slice %8 {offsets = [0, 0], sizes = [16, 32], strides = [1, 1]} : vector<16x128xbf16> to vector<16x32xbf16>
    %cst = arith.constant dense<0.000000e+00> : vector<8x16xf32>
    %12 = tpu.matmul %9, %10, %cst {dimension_numbers = #tpu.dot_dimension_numbers<[1], [1], [0], [0], [0, 0, 1, 0], [], []>} : vector<8x32xbf16>, vector<16x32xbf16>, vector<8x16xf32> -> vector<8x16xf32>
    %c0_9 = arith.constant 0 : index
    %c0_10 = arith.constant 0 : index
    %13 = vector.load %arg7[%c0_9, %c0_10] : memref<8x4xf32, #tpu.memory_space<vmem>>, vector<8x1xf32>
    %cst_11 = arith.constant dense<0xFF800000> : vector<8xf32>
    %14 = vector.multi_reduction <maximumf>, %12, %cst_11 [1] : vector<8x16xf32> to vector<8xf32>
    %15 = vector.shape_cast %14 : vector<8xf32> to vector<8x1xf32>
    %16 = arith.maximumf %13, %15 : vector<8x1xf32>
    %17 = arith.subf %13, %16 : vector<8x1xf32>
    %18 = math.exp %17 : vector<8x1xf32>
    %19 = vector.broadcast %16 : vector<8x1xf32> to vector<8x16xf32>
    %20 = arith.subf %12, %19 : vector<8x16xf32>
    %21 = math.exp %20 : vector<8x16xf32>
    %c0_12 = arith.constant 0 : index
    %c0_13 = arith.constant 0 : index
    %22 = vector.load %arg8[%c0_12, %c0_13] : memref<8x4xf32, #tpu.memory_space<vmem>>, vector<8x1xf32>
    %23 = arith.mulf %18, %22 : vector<8x1xf32>
    %cst_14 = arith.constant dense<0.000000e+00> : vector<8xf32>
    %24 = vector.multi_reduction <add>, %21, %cst_14 [1] : vector<8x16xf32> to vector<8xf32>
    %25 = vector.shape_cast %24 : vector<8xf32> to vector<8x1xf32>
    %26 = arith.addf %23, %25 : vector<8x1xf32>
    %c0_15 = arith.constant 0 : index
    %c0_16 = arith.constant 0 : index
    %27 = vector.load %arg8[%c0_15, %c0_16] : memref<8x4xf32, #tpu.memory_space<vmem>>, vector<8x1xf32>
    tpu.vector_store %arg8[%c0_15, %c0_16], %26 {strides = array<i32>} : memref<8x4xf32, #tpu.memory_space<vmem>>, vector<8x1xf32>,
    %c0_17 = arith.constant 0 : index
    %c0_18 = arith.constant 0 : index
    %28 = vector.load %arg9[%c0_17, %c0_18] : memref<8x128xf32, #tpu.memory_space<vmem>>, vector<8x32xf32>
    %29 = vector.broadcast %18 : vector<8x1xf32> to vector<8x32xf32>
    %30 = arith.mulf %29, %28 : vector<8x32xf32>
    %31 = arith.truncf %21 : vector<8x16xf32> to vector<8x16xbf16>
    %cst_19 = arith.constant dense<0.000000e+00> : vector<8x32xf32>
    %32 = tpu.matmul %31, %11, %cst_19 {dimension_numbers = #tpu.dot_dimension_numbers<[1], [0], [0], [1], [0, 0, 1, 1], [], []>} : vector<8x16xbf16>, vector<16x32xbf16>, vector<8x32xf32> -> vector<8x32xf32>
    %33 = arith.addf %30, %32 : vector<8x32xf32>
    %c0_20 = arith.constant 0 : index
    %c0_21 = arith.constant 0 : index
    %34 = vector.load %arg9[%c0_20, %c0_21] : memref<8x128xf32, #tpu.memory_space<vmem>>, vector<8x32xf32>
    tpu.vector_store %arg9[%c0_20, %c0_21], %33 {strides = array<i32>} : memref<8x128xf32, #tpu.memory_space<vmem>>, vector<8x32xf32>,
    %c0_22 = arith.constant 0 : index
    %c0_23 = arith.constant 0 : index
    %35 = vector.load %arg7[%c0_22, %c0_23] : memref<8x4xf32, #tpu.memory_space<vmem>>, vector<8x1xf32>
    tpu.vector_store %arg7[%c0_22, %c0_23], %16 {strides = array<i32>} : memref<8x4xf32, #tpu.memory_space<vmem>>, vector<8x1xf32>,
    %36 = vector.extract_strided_slice %4 {offsets = [0, 32], sizes = [8, 32], strides = [1, 1]} : vector<8x128xbf16> to vector<8x32xbf16>
    %37 = vector.extract_strided_slice %6 {offsets = [0, 32], sizes = [16, 32], strides = [1, 1]} : vector<16x128xbf16> to vector<16x32xbf16>
    %38 = vector.extract_strided_slice %8 {offsets = [0, 32], sizes = [16, 32], strides = [1, 1]} : vector<16x128xbf16> to vector<16x32xbf16>
    %cst_24 = arith.constant dense<0.000000e+00> : vector<8x16xf32>
    %39 = tpu.matmul %36, %37, %cst_24 {dimension_numbers = #tpu.dot_dimension_numbers<[1], [1], [0], [0], [0, 0, 1, 0], [], []>} : vector<8x32xbf16>, vector<16x32xbf16>, vector<8x16xf32> -> vector<8x16xf32>
    %c0_25 = arith.constant 0 : index
    %c1 = arith.constant 1 : index
    %40 = vector.load %arg7[%c0_25, %c1] : memref<8x4xf32, #tpu.memory_space<vmem>>, vector<8x1xf32>
    %cst_26 = arith.constant dense<0xFF800000> : vector<8xf32>
    %41 = vector.multi_reduction <maximumf>, %39, %cst_26 [1] : vector<8x16xf32> to vector<8xf32>
    %42 = vector.shape_cast %41 : vector<8xf32> to vector<8x1xf32>
    %43 = arith.maximumf %40, %42 : vector<8x1xf32>
    %44 = arith.subf %40, %43 : vector<8x1xf32>
    %45 = math.exp %44 : vector<8x1xf32>
    %46 = vector.broadcast %43 : vector<8x1xf32> to vector<8x16xf32>
    %47 = arith.subf %39, %46 : vector<8x16xf32>
    %48 = math.exp %47 : vector<8x16xf32>
    %c0_27 = arith.constant 0 : index
    %c1_28 = arith.constant 1 : index
    %49 = vector.load %arg8[%c0_27, %c1_28] : memref<8x4xf32, #tpu.memory_space<vmem>>, vector<8x1xf32>
    %50 = arith.mulf %45, %49 : vector<8x1xf32>
    %cst_29 = arith.constant dense<0.000000e+00> : vector<8xf32>
    %51 = vector.multi_reduction <add>, %48, %cst_29 [1] : vector<8x16xf32> to vector<8xf32>
    %52 = vector.shape_cast %51 : vector<8xf32> to vector<8x1xf32>
    %53 = arith.addf %50, %52 : vector<8x1xf32>
    %c0_30 = arith.constant 0 : index
    %c1_31 = arith.constant 1 : index
    %54 = vector.load %arg8[%c0_30, %c1_31] : memref<8x4xf32, #tpu.memory_space<vmem>>, vector<8x1xf32>
    tpu.vector_store %arg8[%c0_30, %c1_31], %53 {strides = array<i32>} : memref<8x4xf32, #tpu.memory_space<vmem>>, vector<8x1xf32>,
    %c0_32 = arith.constant 0 : index
    %c32 = arith.constant 32 : index
    %55 = vector.load %arg9[%c0_32, %c32] : memref<8x128xf32, #tpu.memory_space<vmem>>, vector<8x32xf32>
    %56 = vector.broadcast %45 : vector<8x1xf32> to vector<8x32xf32>
    %57 = arith.mulf %56, %55 : vector<8x32xf32>
    %58 = arith.truncf %48 : vector<8x16xf32> to vector<8x16xbf16>
    %cst_33 = arith.constant dense<0.000000e+00> : vector<8x32xf32>
    %59 = tpu.matmul %58, %38, %cst_33 {dimension_numbers = #tpu.dot_dimension_numbers<[1], [0], [0], [1], [0, 0, 1, 1], [], []>} : vector<8x16xbf16>, vector<16x32xbf16>, vector<8x32xf32> -> vector<8x32xf32>
    %60 = arith.addf %57, %59 : vector<8x32xf32>
    %c0_34 = arith.constant 0 : index
    %c32_35 = arith.constant 32 : index
    %61 = vector.load %arg9[%c0_34, %c32_35] : memref<8x128xf32, #tpu.memory_space<vmem>>, vector<8x32xf32>
    tpu.vector_store %arg9[%c0_34, %c32_35], %60 {strides = array<i32>} : memref<8x128xf32, #tpu.memory_space<vmem>>, vector<8x32xf32>,
    %c0_36 = arith.constant 0 : index
    %c1_37 = arith.constant 1 : index
    %62 = vector.load %arg7[%c0_36, %c1_37] : memref<8x4xf32, #tpu.memory_space<vmem>>, vector<8x1xf32>
    tpu.vector_store %arg7[%c0_36, %c1_37], %43 {strides = array<i32>} : memref<8x4xf32, #tpu.memory_space<vmem>>, vector<8x1xf32>,
    %63 = vector.extract_strided_slice %4 {offsets = [0, 64], sizes = [8, 32], strides = [1, 1]} : vector<8x128xbf16> to vector<8x32xbf16>
    %64 = vector.extract_strided_slice %6 {offsets = [0, 64], sizes = [16, 32], strides = [1, 1]} : vector<16x128xbf16> to vector<16x32xbf16>
    %65 = vector.extract_strided_slice %8 {offsets = [0, 64], sizes = [16, 32], strides = [1, 1]} : vector<16x128xbf16> to vector<16x32xbf16>
    %cst_38 = arith.constant dense<0.000000e+00> : vector<8x16xf32>
    %66 = tpu.matmul %63, %64, %cst_38 {dimension_numbers = #tpu.dot_dimension_numbers<[1], [1], [0], [0], [0, 0, 1, 0], [], []>} : vector<8x32xbf16>, vector<16x32xbf16>, vector<8x16xf32> -> vector<8x16xf32>
    %c0_39 = arith.constant 0 : index
    %c2 = arith.constant 2 : index
    %67 = vector.load %arg7[%c0_39, %c2] : memref<8x4xf32, #tpu.memory_space<vmem>>, vector<8x1xf32>
    %cst_40 = arith.constant dense<0xFF800000> : vector<8xf32>
    %68 = vector.multi_reduction <maximumf>, %66, %cst_40 [1] : vector<8x16xf32> to vector<8xf32>
    %69 = vector.shape_cast %68 : vector<8xf32> to vector<8x1xf32>
    %70 = arith.maximumf %67, %69 : vector<8x1xf32>
    %71 = arith.subf %67, %70 : vector<8x1xf32>
    %72 = math.exp %71 : vector<8x1xf32>
    %73 = vector.broadcast %70 : vector<8x1xf32> to vector<8x16xf32>
    %74 = arith.subf %66, %73 : vector<8x16xf32>
    %75 = math.exp %74 : vector<8x16xf32>
    %c0_41 = arith.constant 0 : index
    %c2_42 = arith.constant 2 : index
    %76 = vector.load %arg8[%c0_41, %c2_42] : memref<8x4xf32, #tpu.memory_space<vmem>>, vector<8x1xf32>
    %77 = arith.mulf %72, %76 : vector<8x1xf32>
    %cst_43 = arith.constant dense<0.000000e+00> : vector<8xf32>
    %78 = vector.multi_reduction <add>, %75, %cst_43 [1] : vector<8x16xf32> to vector<8xf32>
    %79 = vector.shape_cast %78 : vector<8xf32> to vector<8x1xf32>
    %80 = arith.addf %77, %79 : vector<8x1xf32>
    %c0_44 = arith.constant 0 : index
    %c2_45 = arith.constant 2 : index
    %81 = vector.load %arg8[%c0_44, %c2_45] : memref<8x4xf32, #tpu.memory_space<vmem>>, vector<8x1xf32>
    tpu.vector_store %arg8[%c0_44, %c2_45], %80 {strides = array<i32>} : memref<8x4xf32, #tpu.memory_space<vmem>>, vector<8x1xf32>,
    %c0_46 = arith.constant 0 : index
    %c64 = arith.constant 64 : index
    %82 = vector.load %arg9[%c0_46, %c64] : memref<8x128xf32, #tpu.memory_space<vmem>>, vector<8x32xf32>
    %83 = vector.broadcast %72 : vector<8x1xf32> to vector<8x32xf32>
    %84 = arith.mulf %83, %82 : vector<8x32xf32>
    %85 = arith.truncf %75 : vector<8x16xf32> to vector<8x16xbf16>
    %cst_47 = arith.constant dense<0.000000e+00> : vector<8x32xf32>
    %86 = tpu.matmul %85, %65, %cst_47 {dimension_numbers = #tpu.dot_dimension_numbers<[1], [0], [0], [1], [0, 0, 1, 1], [], []>} : vector<8x16xbf16>, vector<16x32xbf16>, vector<8x32xf32> -> vector<8x32xf32>
    %87 = arith.addf %84, %86 : vector<8x32xf32>
    %c0_48 = arith.constant 0 : index
    %c64_49 = arith.constant 64 : index
    %88 = vector.load %arg9[%c0_48, %c64_49] : memref<8x128xf32, #tpu.memory_space<vmem>>, vector<8x32xf32>
    tpu.vector_store %arg9[%c0_48, %c64_49], %87 {strides = array<i32>} : memref<8x128xf32, #tpu.memory_space<vmem>>, vector<8x32xf32>,
    %c0_50 = arith.constant 0 : index
    %c2_51 = arith.constant 2 : index
    %89 = vector.load %arg7[%c0_50, %c2_51] : memref<8x4xf32, #tpu.memory_space<vmem>>, vector<8x1xf32>
    tpu.vector_store %arg7[%c0_50, %c2_51], %70 {strides = array<i32>} : memref<8x4xf32, #tpu.memory_space<vmem>>, vector<8x1xf32>,
    %90 = vector.extract_strided_slice %4 {offsets = [0, 96], sizes = [8, 32], strides = [1, 1]} : vector<8x128xbf16> to vector<8x32xbf16>
    %91 = vector.extract_strided_slice %6 {offsets = [0, 96], sizes = [16, 32], strides = [1, 1]} : vector<16x128xbf16> to vector<16x32xbf16>
    %92 = vector.extract_strided_slice %8 {offsets = [0, 96], sizes = [16, 32], strides = [1, 1]} : vector<16x128xbf16> to vector<16x32xbf16>
    %cst_52 = arith.constant dense<0.000000e+00> : vector<8x16xf32>
    %93 = tpu.matmul %90, %91, %cst_52 {dimension_numbers = #tpu.dot_dimension_numbers<[1], [1], [0], [0], [0, 0, 1, 0], [], []>} : vector<8x32xbf16>, vector<16x32xbf16>, vector<8x16xf32> -> vector<8x16xf32>
    %c0_53 = arith.constant 0 : index
    %c3 = arith.constant 3 : index
    %94 = vector.load %arg7[%c0_53, %c3] : memref<8x4xf32, #tpu.memory_space<vmem>>, vector<8x1xf32>
    %cst_54 = arith.constant dense<0xFF800000> : vector<8xf32>
    %95 = vector.multi_reduction <maximumf>, %93, %cst_54 [1] : vector<8x16xf32> to vector<8xf32>
    %96 = vector.shape_cast %95 : vector<8xf32> to vector<8x1xf32>
    %97 = arith.maximumf %94, %96 : vector<8x1xf32>
    %98 = arith.subf %94, %97 : vector<8x1xf32>
    %99 = math.exp %98 : vector<8x1xf32>
    %100 = vector.broadcast %97 : vector<8x1xf32> to vector<8x16xf32>
    %101 = arith.subf %93, %100 : vector<8x16xf32>
    %102 = math.exp %101 : vector<8x16xf32>
    %c0_55 = arith.constant 0 : index
    %c3_56 = arith.constant 3 : index
    %103 = vector.load %arg8[%c0_55, %c3_56] : memref<8x4xf32, #tpu.memory_space<vmem>>, vector<8x1xf32>
    %104 = arith.mulf %99, %103 : vector<8x1xf32>
    %cst_57 = arith.constant dense<0.000000e+00> : vector<8xf32>
    %105 = vector.multi_reduction <add>, %102, %cst_57 [1] : vector<8x16xf32> to vector<8xf32>
    %106 = vector.shape_cast %105 : vector<8xf32> to vector<8x1xf32>
    %107 = arith.addf %104, %106 : vector<8x1xf32>
    %c0_58 = arith.constant 0 : index
    %c3_59 = arith.constant 3 : index
    %108 = vector.load %arg8[%c0_58, %c3_59] : memref<8x4xf32, #tpu.memory_space<vmem>>, vector<8x1xf32>
    tpu.vector_store %arg8[%c0_58, %c3_59], %107 {strides = array<i32>} : memref<8x4xf32, #tpu.memory_space<vmem>>, vector<8x1xf32>,
    %c0_60 = arith.constant 0 : index
    %c96 = arith.constant 96 : index
    %109 = vector.load %arg9[%c0_60, %c96] : memref<8x128xf32, #tpu.memory_space<vmem>>, vector<8x32xf32>
    %110 = vector.broadcast %99 : vector<8x1xf32> to vector<8x32xf32>
    %111 = arith.mulf %110, %109 : vector<8x32xf32>
    %112 = arith.truncf %102 : vector<8x16xf32> to vector<8x16xbf16>
    %cst_61 = arith.constant dense<0.000000e+00> : vector<8x32xf32>
    %113 = tpu.matmul %112, %92, %cst_61 {dimension_numbers = #tpu.dot_dimension_numbers<[1], [0], [0], [1], [0, 0, 1, 1], [], []>} : vector<8x16xbf16>, vector<16x32xbf16>, vector<8x32xf32> -> vector<8x32xf32>
    %114 = arith.addf %111, %113 : vector<8x32xf32>
    %c0_62 = arith.constant 0 : index
    %c96_63 = arith.constant 96 : index
    %115 = vector.load %arg9[%c0_62, %c96_63] : memref<8x128xf32, #tpu.memory_space<vmem>>, vector<8x32xf32>
    tpu.vector_store %arg9[%c0_62, %c96_63], %114 {strides = array<i32>} : memref<8x128xf32, #tpu.memory_space<vmem>>, vector<8x32xf32>,
    %c0_64 = arith.constant 0 : index
    %c3_65 = arith.constant 3 : index
    %116 = vector.load %arg7[%c0_64, %c3_65] : memref<8x4xf32, #tpu.memory_space<vmem>>, vector<8x1xf32>
    tpu.vector_store %arg7[%c0_64, %c3_65], %97 {strides = array<i32>} : memref<8x4xf32, #tpu.memory_space<vmem>>, vector<8x1xf32>,
    %c0_i32_66 = arith.constant 0 : i32
    %117 = arith.cmpi eq, %arg2, %c0_i32_66 : i32
    %118 = arith.extui %117 : i1 to i32
    %c0_i32_67 = arith.constant 0 : i32
    %119 = arith.cmpi ne, %118, %c0_i32_67 : i32
    scf.if %119 {
      %c0_68 = arith.constant 0 : index
      %c0_69 = arith.constant 0 : index
      %120 = vector.load %arg8[%c0_68, %c0_69] : memref<8x4xf32, #tpu.memory_space<vmem>>, vector<8x4xf32>
      %121 = tpu.reciprocal %120 : vector<8x4xf32> -> vector<8x4xf32>
      %c0_70 = arith.constant 0 : index
      %c0_71 = arith.constant 0 : index
      %122 = vector.load %arg9[%c0_70, %c0_71] : memref<8x128xf32, #tpu.memory_space<vmem>>, vector<8x32xf32>
      %123 = vector.extract_strided_slice %121 {offsets = [0, 0], sizes = [8, 1], strides = [1, 1]} : vector<8x4xf32> to vector<8x1xf32>
      %124 = vector.broadcast %123 : vector<8x1xf32> to vector<8x32xf32>
      %125 = arith.mulf %122, %124 : vector<8x32xf32>
      %c0_72 = arith.constant 0 : index
      %c32_73 = arith.constant 32 : index
      %126 = vector.load %arg9[%c0_72, %c32_73] : memref<8x128xf32, #tpu.memory_space<vmem>>, vector<8x32xf32>
      %127 = vector.extract_strided_slice %121 {offsets = [0, 1], sizes = [8, 1], strides = [1, 1]} : vector<8x4xf32> to vector<8x1xf32>
      %128 = vector.broadcast %127 : vector<8x1xf32> to vector<8x32xf32>
      %129 = arith.mulf %126, %128 : vector<8x32xf32>
      %c0_74 = arith.constant 0 : index
      %c64_75 = arith.constant 64 : index
      %130 = vector.load %arg9[%c0_74, %c64_75] : memref<8x128xf32, #tpu.memory_space<vmem>>, vector<8x32xf32>
      %131 = vector.extract_strided_slice %121 {offsets = [0, 2], sizes = [8, 1], strides = [1, 1]} : vector<8x4xf32> to vector<8x1xf32>
      %132 = vector.broadcast %131 : vector<8x1xf32> to vector<8x32xf32>
      %133 = arith.mulf %130, %132 : vector<8x32xf32>
      %c0_76 = arith.constant 0 : index
      %c96_77 = arith.constant 96 : index
      %134 = vector.load %arg9[%c0_76, %c96_77] : memref<8x128xf32, #tpu.memory_space<vmem>>, vector<8x32xf32>
      %135 = vector.extract_strided_slice %121 {offsets = [0, 3], sizes = [8, 1], strides = [1, 1]} : vector<8x4xf32> to vector<8x1xf32>
      %136 = vector.broadcast %135 : vector<8x1xf32> to vector<8x32xf32>
      %137 = arith.mulf %134, %136 : vector<8x32xf32>
      %138 = tpu.concatenate %125, %129, %133, %137 in 1 : vector<8x32xf32>, vector<8x32xf32>, vector<8x32xf32>, vector<8x32xf32> -> vector<8x128xf32>
      %139 = arith.truncf %138 : vector<8x128xf32> to vector<8x128xbf16>
      %c0_78 = arith.constant 0 : index
      %c0_79 = arith.constant 0 : index
      %c0_80 = arith.constant 0 : index
      %140 = vector.load %arg6[%c0_78, %c0_79, %c0_80] : memref<1x8x128xbf16, #tpu.memory_space<vmem>>, vector<1x8x128xbf16>
      %141 = vector.shape_cast %140 : vector<1x8x128xbf16> to vector<8x128xbf16>
      %142 = vector.shape_cast %139 : vector<8x128xbf16> to vector<1x8x128xbf16>
      tpu.vector_store %arg6[%c0_78, %c0_79, %c0_80], %142 {strides = array<i32>} : memref<1x8x128xbf16, #tpu.memory_space<vmem>>, vector<1x8x128xbf16>,
    } else {
    }
    return
  }
  func.func @transform_0(%arg0: i32, %arg1: i32, %arg2: i32) -> (i32, i32, i32) {
    %c0_i32 = arith.constant 0 : i32
    %c0_i32_0 = arith.constant 0 : i32
    return %arg0, %arg1, %c0_i32 : i32, i32, i32
  }
  func.func @transform_1(%arg0: i32, %arg1: i32, %arg2: i32) -> (i32, i32, i32) {
    %c0_i32 = arith.constant 0 : i32
    %c0_i32_0 = arith.constant 0 : i32
    return %arg0, %arg2, %c0_i32 : i32, i32, i32
  }
  func.func @transform_2(%arg0: i32, %arg1: i32, %arg2: i32) -> (i32, i32, i32) {
    %c1_i32 = arith.constant 1 : i32
    %c0_i32 = arith.constant 0 : i32
    return %arg0, %arg2, %c1_i32 : i32, i32, i32
  }
  func.func @transform_3(%arg0: i32, %arg1: i32, %arg2: i32) -> (i32, i32, i32) {
    %c0_i32 = arith.constant 0 : i32
    %c0_i32_0 = arith.constant 0 : i32
    return %arg0, %arg1, %c0_i32 : i32, i32, i32
  }
}

</mosaic_0001>

<llo_original>
// kernel: decoder_layer_forward.8
$region0: #{decoder_layer_forward.8}
  #allocation0 [shape = 'u32[]', space=smem, size = 0x4, offset = 0x4, fixed_abs, tag = 'smem constant byte address 0x4 - core index']
  #allocation1 [shape = 'u32[144,128]{1,0:T(1,128)}', space=vmem, size = 0x12000, scoped, tag = 'internal scratch']
  #allocation2 [shape = 'f32[16,128]{1,0:T(8,128)}', space=vmem, size = 0x2000, scoped, tag = 'scratch operand']
  %s0 = inlined_call_operand.vmem [shape: bf16[16,128], index: 0, kind: input, shape index: {}]
  %s1 = inlined_call_operand.hbm [shape: bf16[128,384], index: 1, kind: input, shape index: {}]
  %s2 = inlined_call_operand.vmem [shape: f32[1,384], index: 2, kind: input, shape index: {}]
  %s3 = inlined_call_operand.vmem [shape: bf16[16,384], index: 3, kind: output, shape index: {}]
  %s4 = sld [smem:[#allocation0]]
  $region94: #{decoder_layer_forward.8} parent=0
    _
  %s6 = ssub.s32 1, %s4
  %s7 = scalar_select 0, %s6, %s4
  $region1: #{decoder_layer_forward.8} parent=0
    #allocation3 [shape = 'u8[65536]{0}', space=vmem, size = 0x10000, scoped, tag = 'input window, operand 1']
    #allocation4 [shape = 's32[2]{0}', space=sflag, size = 0x8, scoped, tag = 'scoped memory for decoder_layer_forward.8']
    #allocation5 [shape = 'u8[8192]{0}', space=vmem, size = 0x2000, scoped, tag = 'output window, operand 0']
    %8 = vsyncpa [#allocation4], 0
    %s9 = scalar_lea.sflag [#allocation4], 1
    %10 = vsyncpa %s9, 0
    loop: start=0, step=1, limit=5
    $region2: #{decoder_layer_forward.8} parent=1 // loop_pre_header
      _
    $region3: #{decoder_layer_forward.8} parent=1 // loop_header
      %s12 = sphi 0, %s16
      %p13 = scmp.ge.s32.totalorder %s12, 5
      %s19 = sphi 0, %s38
      %s20 = sphi 0, %s34
      %s21 = sphi 0, %s30
      %s22 = sphi 0, %s19
      %s23 = sphi 0, %s20
      %s24 = sphi 0, %s21
      %s25 = sphi 0, %s22
      %s26 = sphi 0, %s23
      %s27 = sphi 0, %s24
      %s43 = sphi 0, %s45
      %s46 = sphi 0, %s43
      %s47 = sphi 0, %s46
      %s63 = sphi 0, %s47
      %s71 = sphi 0, %s73
      %s74 = sphi 0, %s71
      %s75 = sphi 0, %s74
      %s91 = sphi 0, %s75
      %s97 = sphi 0, %s99
      %s100 = sphi 0, %s97
      %s101 = sphi 0, %s100
      %s117 = sphi 0, %s101
      %s125 = sphi 0, %s127
      %s128 = sphi 0, %s125
      %s129 = sphi 0, %s128
      %s145 = sphi 0, %s129
    $region4: #{decoder_layer_forward.8} parent=1 // loop_header_branch
      %15 = sbr.rel (%p13) target = $region8
    $region5: #{decoder_layer_forward.8} parent=1 // loop_body
      %s17 = ssub.s32 %s12, 1
      %s18 = ssub.s32 %s12, 2
      %s28 = sadd.s32 1, %s21
      %p29 = scmp.ge.s32.totalorder %s28, 1
      %s30 = scalar_select %p29, 0, %s28
      %s31 = sadd.s32 1, %s20
      %s32 = scalar_select %p29, %s31, %s20
      %p33 = scmp.ge.s32.totalorder %s32, 3
      %s34 = scalar_select %p33, 0, %s32
      %s35 = sadd.s32 1, %s19
      %s36 = scalar_select %p33, %s35, %s19
      %p37 = scmp.ge.s32.totalorder %s36, 1
      %s38 = scalar_select %p37, 0, %s36
      %s39 = ssub.s32 %s19, %s38
      %s40 = ssub.s32 %s21, %s30
      %s41 = sor.u32 %s39, %s40
      %p42 = scmp.eq.s32.totalorder %s41, 0
      %s44 = sadd.s32 %s43, 1
      %s45 = scalar_select %p42, %s43, %s44
      %p48 = pneg %p42
      %p49 = scmp.eq.s32.totalorder %s12, 2
      %p50 = por %p48, %p49
      %p51 = scmp.ne.s32.totalorder %s43, %s46
      %p52 = scmp.eq.s32.totalorder %s12, 0
      %p53 = por %p51, %p52
      %p54 = scmp.ne.s32.totalorder %s43, %s46
      %p55 = scmp.eq.s32.totalorder %s17, 2
      %p56 = por %p54, %p55
      %p57 = scmp.ne.s32.totalorder %s46, %s47
      %p58 = scmp.eq.s32.totalorder %s17, 0
      %p59 = por %p57, %p58
      %p60 = scmp.ne.s32.totalorder %s46, %s47
      %p61 = scmp.eq.s32.totalorder %s18, 2
      %p62 = por %p60, %p61
      %p64 = scmp.ne.s32.totalorder %s47, %s63
      %p65 = scmp.eq.s32.totalorder %s18, 0
      %p66 = por %p64, %p65
      %s67 = ssub.s32 %s21, %s30
      %s68 = ssub.s32 %s20, %s34
      %s69 = sor.u32 %s67, %s68
      %p70 = scmp.eq.s32.totalorder %s69, 0
      %s72 = sadd.s32 %s71, 1
      %s73 = scalar_select %p70, %s71, %s72
      %p76 = pneg %p70
      %p77 = scmp.eq.s32.totalorder %s12, 2
      %p78 = por %p76, %p77
      %p79 = scmp.ne.s32.totalorder %s71, %s74
      %p80 = scmp.eq.s32.totalorder %s12, 0
      %p81 = por %p79, %p80
      %p82 = scmp.ne.s32.totalorder %s71, %s74
      %p83 = scmp.eq.s32.totalorder %s17, 2
      %p84 = por %p82, %p83
      %p85 = scmp.ne.s32.totalorder %s74, %s75
      %p86 = scmp.eq.s32.totalorder %s17, 0
      %p87 = por %p85, %p86
      %p88 = scmp.ne.s32.totalorder %s74, %s75
      %p89 = scmp.eq.s32.totalorder %s18, 2
      %p90 = por %p88, %p89
      %p92 = scmp.ne.s32.totalorder %s75, %s91
      %p93 = scmp.eq.s32.totalorder %s18, 0
      %p94 = por %p92, %p93
      %s95 = ssub.s32 %s20, %s34
      %p96 = scmp.eq.s32.totalorder %s95, 0
      %s98 = sadd.s32 %s97, 1
      %s99 = scalar_select %p96, %s97, %s98
      %p102 = pneg %p96
      %p103 = scmp.eq.s32.totalorder %s12, 2
      %p104 = por %p102, %p103
      %p105 = scmp.ne.s32.totalorder %s97, %s100
      %p106 = scmp.eq.s32.totalorder %s12, 0
      %p107 = por %p105, %p106
      %p108 = scmp.ne.s32.totalorder %s97, %s100
      %p109 = scmp.eq.s32.totalorder %s17, 2
      %p110 = por %p108, %p109
      %p111 = scmp.ne.s32.totalorder %s100, %s101
      %p112 = scmp.eq.s32.totalorder %s17, 0
      %p113 = por %p111, %p112
      %p114 = scmp.ne.s32.totalorder %s100, %s101
      %p115 = scmp.eq.s32.totalorder %s18, 2
      %p116 = por %p114, %p115
      %p118 = scmp.ne.s32.totalorder %s101, %s117
      %p119 = scmp.eq.s32.totalorder %s18, 0
      %p120 = por %p118, %p119
      %s121 = ssub.s32 %s19, %s38
      %s122 = ssub.s32 %s20, %s34
      %s123 = sor.u32 %s121, %s122
      %p124 = scmp.eq.s32.totalorder %s123, 0
      %s126 = sadd.s32 %s125, 1
      %s127 = scalar_select %p124, %s125, %s126
      %p130 = pneg %p124
      %p131 = scmp.eq.s32.totalorder %s12, 2
      %p132 = por %p130, %p131
      %p133 = scmp.ne.s32.totalorder %s125, %s128
      %p134 = scmp.eq.s32.totalorder %s12, 0
      %p135 = por %p133, %p134
      %p136 = scmp.ne.s32.totalorder %s125, %s128
      %p137 = scmp.eq.s32.totalorder %s17, 2
      %p138 = por %p136, %p137
      %p139 = scmp.ne.s32.totalorder %s128, %s129
      %p140 = scmp.eq.s32.totalorder %s17, 0
      %p141 = por %p139, %p140
      %p142 = scmp.ne.s32.totalorder %s128, %s129
      %p143 = scmp.eq.s32.totalorder %s18, 2
      %p144 = por %p142, %p143
      %p146 = scmp.ne.s32.totalorder %s129, %s145
      %p147 = scmp.eq.s32.totalorder %s18, 0
      %p148 = por %p146, %p147
      %p149 = scmp.le.s32.totalorder 1, %s12
      %p150 = scmp.lt.s32.totalorder %s12, 4
      %p151 = pnand %p149, %p150
      %p152 = pneg %p151
      // Predicated region
      $region9: #{decoder_layer_forward.8} parent=5 // pred_check
        _
      $region10: #{decoder_layer_forward.8} parent=5 // pred_check_branch
        %154 = sbr.rel (%p151) target = $region12
      $region11: #{decoder_layer_forward.8} parent=5 // pred_region
        %s155 = ssub.s32 %s12, 1
        // Predicated region
        $region13: #{decoder_layer_forward.8} parent=11 // pred_check
          %p156 = pneg %p59
        $region14: #{decoder_layer_forward.8} parent=11 // pred_check_branch
          %158 = sbr.rel (%p156) target = $region16
        $region15: #{decoder_layer_forward.8} parent=11 // pred_region
          %s159 = smul.u32 2, %s22
          %p160 = scmp.lt.s32.totalorder %s159, 1
          %s161 = scalar_select %p160, %s159, 1
          %p162 = scmp.lt.s32.totalorder %s24, 0
          %s163 = scalar_select %p162, %s24, 0
          %s164 = sadd.s32 %s163, %s161
          %s165 = smul.addr %s164, 4
          %s166 = scalar_lea.vmem %s0, %s165
          %s167 = smul.u32 2, %s22
        $region16: #{decoder_layer_forward.8} parent=11 // pred_fallthru
          _
      $region12: #{decoder_layer_forward.8} parent=5 // pred_fallthru
        _
      %p168 = scmp.lt.s32.totalorder %s12, 3
      // Predicated region
      $region17: #{decoder_layer_forward.8} parent=5 // pred_check
        %p169 = pneg %p168
      $region18: #{decoder_layer_forward.8} parent=5 // pred_check_branch
        %171 = sbr.rel (%p169) target = $region20
      $region19: #{decoder_layer_forward.8} parent=5 // pred_region
        // Predicated region
        $region21: #{decoder_layer_forward.8} parent=19 // pred_check
          %p172 = pneg %p81
        $region22: #{decoder_layer_forward.8} parent=19 // pred_check_branch
          %174 = sbr.rel (%p172) target = $region24
        $region23: #{decoder_layer_forward.8} parent=19 // pred_region
          %s175 = sand.u32 %s71, 1
          %s176 = scalar_lea.sflag [#allocation4], %s175
          %s177 = sand.u32 %s71, 1
          %s178 = smul.addr %s177, 64
          %s179 = scalar_lea.vmem [#allocation3], %s178
          %s180 = smul.u32 16, %s21
          %s182 = ssub.s32 1024, 1024
          %183 = vsyncadd %s176, %s182
          %s184 = smul.addr %s180, 3
          %s185 = sadd.s32 %s20, %s184
          %s186 = smul.addr %s185, 64
          %s187 = scalar_lea.hbm %s1, %s186
          %s188 = sshll.u32 %s179, 4
          %s189 = int_to_ptr.vmem [resolvable:$true] %s188
          %194 = dma.hbm_to_vmem [thread:$0]  %s187, 1024, %s189, %s176, 192, 64, 4
        $region24: #{decoder_layer_forward.8} parent=19 // pred_fallthru
          _
        // Predicated region
        $region25: #{decoder_layer_forward.8} parent=19 // pred_check
          %p195 = pneg %p107
        $region26: #{decoder_layer_forward.8} parent=19 // pred_check_branch
          %197 = sbr.rel (%p195) target = $region28
        $region27: #{decoder_layer_forward.8} parent=19 // pred_region
          %p198 = scmp.lt.s32.totalorder %s20, 2
          %s199 = scalar_select %p198, %s20, 2
          %s200 = scalar_lea.vmem %s2, %s199
        $region28: #{decoder_layer_forward.8} parent=19 // pred_fallthru
          _
      $region20: #{decoder_layer_forward.8} parent=5 // pred_fallthru
        _
      %p201 = scmp.le.s32.totalorder 1, %s12
      %p202 = scmp.lt.s32.totalorder %s12, 4
      %p203 = pnand %p201, %p202
      %p204 = pneg %p203
      // Predicated region
      $region29: #{decoder_layer_forward.8} parent=5 // pred_check
        _
      $region30: #{decoder_layer_forward.8} parent=5 // pred_check_branch
        %206 = sbr.rel (%p203) target = $region32
      $region31: #{decoder_layer_forward.8} parent=5 // pred_region
        %s207 = ssub.s32 %s12, 1
        %s208 = sand.u32 %s74, 1
        %s209 = scalar_lea.sflag [#allocation4], %s208
        %s210 = sand.u32 %s74, 1
        %s211 = smul.addr %s210, 64
        %s212 = scalar_lea.vmem [#allocation3], %s211
        // Predicated region
        $region33: #{decoder_layer_forward.8} parent=31 // pred_check
          %p213 = pneg %p87
        $region34: #{decoder_layer_forward.8} parent=31 // pred_check_branch
          %215 = sbr.rel (%p213) target = $region36
        $region35: #{decoder_layer_forward.8} parent=31 // pred_region
          %216 = dma.done %s209, 1024
        $region36: #{decoder_layer_forward.8} parent=31 // pred_fallthru
          _
        %s217 = smul.u32 2, %s22
        %p218 = scmp.lt.s32.totalorder %s217, 1
        %s219 = scalar_select %p218, %s217, 1
        %p220 = scmp.lt.s32.totalorder %s24, 0
        %s221 = scalar_select %p220, %s24, 0
        %s222 = sadd.s32 %s221, %s219
        %s223 = smul.addr %s222, 4
        %s224 = scalar_lea.vmem %s0, %s223
        %p225 = pneg %p59
        %p226 = pneg %p56
        %s227 = sand.u32 %s74, 1
        %s228 = scalar_lea.sflag [#allocation4], %s227
        %s229 = sand.u32 %s74, 1
        %s230 = smul.addr %s229, 64
        %s231 = scalar_lea.vmem [#allocation3], %s230
        %p232 = pneg %p87
        %p233 = pneg %p84
        %p234 = scmp.lt.s32.totalorder %s23, 2
        %s235 = scalar_select %p234, %s23, 2
        %s236 = scalar_lea.vmem %s2, %s235
        %p237 = pneg %p113
        %p238 = pneg %p110
        %p239 = pneg %p141
        %p240 = pneg %p138
        %s241 = sand.u32 %s128, 1
        %s242 = sand.u32 %s128, 1
        %s243 = smul.addr %s242, 8
        %s244 = scalar_lea.vmem [#allocation5], %s243
        %s245 = smul.u32 2, %s22
        %p246 = scmp.lt.s32.totalorder %s245, 1
        %s247 = scalar_select %p246, %s245, 1
        %p248 = scmp.lt.s32.totalorder %s24, 0
        %s249 = scalar_select %p248, %s24, 0
        %s250 = sadd.s32 %s249, %s247
        %s251 = smul.addr %s250, 4
        %s252 = scalar_lea.vmem %s0, %s251
        %s253 = smul.u32 2, %s22
        %s254 = smul.u32 16, %s24
        %p255 = scmp.lt.s32.totalorder %s23, 2
        %s256 = scalar_select %p255, %s23, 2
        %s257 = scalar_lea.vmem %s2, %s256
        %s258 = smul.u32 2, %s22
        %p260 = scmp.eq.s32.totalorder %s24, 0
        // Predicated region
        $region37: #{decoder_layer_forward.8} parent=31 // pred_check
          %p261 = pneg %p260
        $region38: #{decoder_layer_forward.8} parent=31 // pred_check_branch
          %263 = sbr.rel (%p261) target = $region40
        $region39: #{decoder_layer_forward.8} parent=31 // pred_region
          %264 = vst [vmem:[#allocation2] sm:$0xff] 0.0
          %265 = vst [vmem:[#allocation2 + $0x8] sm:$0xff] 0.0
        $region40: #{decoder_layer_forward.8} parent=31 // pred_fallthru
          _
        %v266 = vld [vmem:[#allocation2] sm:$0xff]
        %v267 = vld [vmem:[#allocation2 + $0x8] sm:$0xff]
        %v268 = vld [vmem:[%s252] sm:$0xf]
        %v269 = vld [vmem:[%s252 + $0x4] sm:$0xf]
        %v270 = vld [vmem:[%s212] sm:$0xf]
        %v271 = vld [vmem:[%s212 + $0x4] sm:$0xf]
        %v272 = vld [vmem:[%s212 + $0x8] sm:$0xf]
        %v273 = vld [vmem:[%s212 + $0xc] sm:$0xf]
        %v274 = vld [vmem:[%s212 + $0x10] sm:$0xf]
        %v275 = vld [vmem:[%s212 + $0x14] sm:$0xf]
        %v276 = vld [vmem:[%s212 + $0x18] sm:$0xf]
        %v277 = vld [vmem:[%s212 + $0x1c] sm:$0xf]
        %v278 = vld [vmem:[%s212 + $0x20] sm:$0xf]
        %v279 = vld [vmem:[%s212 + $0x24] sm:$0xf]
        %v280 = vld [vmem:[%s212 + $0x28] sm:$0xf]
        %v281 = vld [vmem:[%s212 + $0x2c] sm:$0xf]
        %v282 = vld [vmem:[%s212 + $0x30] sm:$0xf]
        %v283 = vld [vmem:[%s212 + $0x34] sm:$0xf]
        %v284 = vld [vmem:[%s212 + $0x38] sm:$0xf]
        %v285 = vld [vmem:[%s212 + $0x3c] sm:$0xf]
        %v288 = vunpack.c.l.b16 %v268
        %v289 = vunpack.c.l.b16 %v269
        %v290 = vpack.c.b16 %v289, %v288
        %v308 = vunpack.c.l.b16 %v270
        %v309 = vunpack.c.l.b16 %v271
        %v310 = vunpack.c.l.b16 %v272
        %v311 = vunpack.c.l.b16 %v273
        %v312 = vunpack.c.l.b16 %v274
        %v313 = vunpack.c.l.b16 %v275
        %v314 = vunpack.c.l.b16 %v276
        %v315 = vunpack.c.l.b16 %v277
        %v316 = vunpack.c.l.b16 %v278
        %v317 = vunpack.c.l.b16 %v279
        %v318 = vunpack.c.l.b16 %v280
        %v319 = vunpack.c.l.b16 %v281
        %v320 = vunpack.c.l.b16 %v282
        %v321 = vunpack.c.l.b16 %v283
        %v322 = vunpack.c.l.b16 %v284
        %v323 = vunpack.c.l.b16 %v285
        %v324 = vpack.c.b16 %v309, %v308
        %v325 = vpack.c.b16 %v311, %v310
        %v326 = vpack.c.b16 %v313, %v312
        %v327 = vpack.c.b16 %v315, %v314
        %v328 = vpack.c.b16 %v317, %v316
        %v329 = vpack.c.b16 %v319, %v318
        %v330 = vpack.c.b16 %v321, %v320
        %v331 = vpack.c.b16 %v323, %v322
        %340 = vmatprep.subr.bf16.mxu0 0
        %341 = vmatpush1.bf16.msra.mxu0 %v331
        %342 = vmatprep.subr.bf16.mxu0 0
        %343 = vmatpush1.bf16.msra.mxu0 %v330
        %344 = vmatprep.subr.bf16.mxu0 0
        %345 = vmatpush1.bf16.msra.mxu0 %v329
        %346 = vmatprep.subr.bf16.mxu0 0
        %347 = vmatpush1.bf16.msra.mxu0 %v328
        %348 = vmatprep.subr.bf16.mxu0 0
        %349 = vmatpush1.bf16.msra.mxu0 %v327
        %350 = vmatprep.subr.bf16.mxu0 0
        %351 = vmatpush1.bf16.msra.mxu0 %v326
        %352 = vmatprep.subr.bf16.mxu0 0
        %353 = vmatpush1.bf16.msra.mxu0 %v325
        %354 = vmatprep.subr.bf16.mxu0 0
        %355 = vmatpush1.bf16.msra.mxu0 %v324
        %356 = vmatprep.subr.bf16.mxu0 0
        %357 = vmatpush2.bf16.msra.mxu0 0
        %358 = vmatprep.subr.bf16.mxu0 0
        %359 = vmatpush2.bf16.msra.mxu0 0
        %360 = vmatprep.subr.bf16.mxu0 0
        %361 = vmatpush2.bf16.msra.mxu0 0
        %362 = vmatprep.subr.bf16.mxu0 0
        %363 = vmatpush2.bf16.msra.mxu0 0
        %364 = vmatprep.subr.bf16.mxu0 0
        %365 = vmatpush2.bf16.msra.mxu0 0
        %366 = vmatprep.subr.bf16.mxu0 0
        %367 = vmatpush2.bf16.msra.mxu0 0
        %368 = vmatprep.subr.bf16.mxu0 0
        %369 = vmatpush2.bf16.msra.mxu0 0
        %370 = vmatprep.subr.bf16.mxu0 0
        %371 = vmatpush2.bf16.msra.mxu0 0
        %372 = vmatprep.mubr.bf16.mxu0 0
        %373 = vmatmul.mubr.bf16.gmra.mxu0 %v290
        %v374 = vpop.f32.mrf.mxu0
        %v375 = vadd.f32 0.0, %v374
        %v376 = vpop.f32.mrf.mxu0
        %v377 = vpop.f32.mrf.mxu0
        %v378 = vadd.f32 0.0, %v377
        %v379 = vpop.f32.mrf.mxu0
        %380 = vdwg.mxu0
        %v381 = vadd.f32 %v266, %v375
        %v382 = vadd.f32 %v267, %v378
        %383 = vst [vmem:[#allocation2] sm:$0xff] %v381
        %384 = vst [vmem:[#allocation2 + $0x8] sm:$0xff] %v382
        // Predicated region
        $region41: #{decoder_layer_forward.8} parent=31 // pred_check
          %p385 = pneg %p260
        $region42: #{decoder_layer_forward.8} parent=31 // pred_check_branch
          %387 = sbr.rel (%p385) target = $region44
        $region43: #{decoder_layer_forward.8} parent=31 // pred_region
          %v388 = vld [vmem:[#allocation2] sm:$0xff]
          %v389 = vld [vmem:[#allocation2 + $0x8] sm:$0xff]
          %v390 = vld [vmem:[%s257] sm:$0x1]
          %v392 = vlaneseq
          %v393 = vshrl.u32 %v392, 7
          %v394 = vsub.s32 0, %v393
          %v395 = vrot.slane %v390, %v394
          %v397 = vadd.f32 %v388, %v395
          %v398 = vadd.f32 %v389, %v395
          %v399 = vpack.c.bf16 %v398, %v397
          %v401 = vunpack.c.l.b16 %v399
          %v402 = vunpack.c.h.b16 %v399
          %v403 = vpack.c.b16 %v401, %v401
          %v404 = vpack.c.b16 %v402, %v402
          %407 = vst [vmem:[%s244] sm:$0xf] %v403
          %408 = vst [vmem:[%s244 + $0x4] sm:$0xf] %v404
        $region44: #{decoder_layer_forward.8} parent=31 // pred_fallthru
          _
        %s409 = sand.u32 %s128, 1
        %s410 = sand.u32 %s128, 1
        %s411 = smul.addr %s410, 8
        %s412 = scalar_lea.vmem [#allocation5], %s411
        // Predicated region
        $region45: #{decoder_layer_forward.8} parent=31 // pred_check
          %p413 = pneg %p138
        $region46: #{decoder_layer_forward.8} parent=31 // pred_check_branch
          %415 = sbr.rel (%p413) target = $region48
        $region47: #{decoder_layer_forward.8} parent=31 // pred_region
          %s416 = smul.u32 2, %s22
          %s417 = smul.addr %s416, 3
          %s418 = sadd.s32 %s23, %s417
          %s419 = smul.addr %s418, 4
          %s420 = scalar_lea.vmem %s3, %s419
          // Predicated region
          $region49: #{decoder_layer_forward.8} parent=47 // pred_check
            _
          $region50: #{decoder_layer_forward.8} parent=47 // pred_check_branch
            %422 = sbr.rel (0) target = $region52
          $region51: #{decoder_layer_forward.8} parent=47 // pred_region
            // Predicated region
            $region53: #{decoder_layer_forward.8} parent=51 // pred_check
              _
            $region54: #{decoder_layer_forward.8} parent=51 // pred_check_branch
              %424 = sbr.rel target = $region56
            $region55: #{decoder_layer_forward.8} parent=51 // pred_region
              // Predicated region
              $region68: #{decoder_layer_forward.8} parent=55 // pred_check
                _
              $region69: #{decoder_layer_forward.8} parent=55 // pred_check_branch
                %442 = sbr.rel (0) target = $region71
              $region70: #{decoder_layer_forward.8} parent=55 // pred_region
                loop: start=0, step=1, limit=1
                $region72: #{decoder_layer_forward.8} parent=70 // loop_pre_header
                  _
                $region73: #{decoder_layer_forward.8} parent=70 // loop_header
                  %s444 = sphi 0, %s448
                  %p445 = scmp.ge.s32.totalorder %s444, 1
                  %s449 = sphi %s412, %s412
                  %s450 = sphi %s420, %s420
                $region74: #{decoder_layer_forward.8} parent=70 // loop_header_branch
                  %447 = sbr.rel (%p445) target = $region78
                $region75: #{decoder_layer_forward.8} parent=70 // loop_body
                  _
                $region76: #{decoder_layer_forward.8} parent=70 // loop_footer
                  %s448 = sadd.s32 1, %s444
                $region77: #{decoder_layer_forward.8} parent=70 // loop_footer_branch
                  %443 = sbr.rel target = $region73
                $region78: #{decoder_layer_forward.8} parent=70 // loop_exit
                  _
                %s452 = ssub.s32 16, 1
                loop: start=0, step=1, limit=1
                $region79: #{decoder_layer_forward.8} parent=70 // loop_pre_header
                  _
                $region80: #{decoder_layer_forward.8} parent=70 // loop_header
                  %s454 = sphi 0, %s458
                  %p455 = scmp.ge.s32.totalorder %s454, 1
                  %s459 = sphi %s412, %s412
                  %s460 = sphi %s420, %s420
                $region81: #{decoder_layer_forward.8} parent=70 // loop_header_branch
                  %457 = sbr.rel (%p455) target = $region85
                $region82: #{decoder_layer_forward.8} parent=70 // loop_body
                  %v461 = vld [vmem:[%s459] sm:%s452]
                  %462 = vst [vmem:[%s460] sm:%s452] %v461
                  %v463 = vld [vmem:[%s459 + $0x4] sm:%s452]
                  %464 = vst [vmem:[%s460 + $0xc] sm:%s452] %v463
                $region83: #{decoder_layer_forward.8} parent=70 // loop_footer
                  %s458 = sadd.s32 1, %s454
                $region84: #{decoder_layer_forward.8} parent=70 // loop_footer_branch
                  %453 = sbr.rel target = $region80
                $region85: #{decoder_layer_forward.8} parent=70 // loop_exit
                  _
              $region71: #{decoder_layer_forward.8} parent=55 // pred_fallthru
                _
            $region56: #{decoder_layer_forward.8} parent=51 // pred_fallthru
              _
            // Predicated region
            $region57: #{decoder_layer_forward.8} parent=51 // pred_check
              _
            $region58: #{decoder_layer_forward.8} parent=51 // pred_check_branch
              %426 = sbr.rel (0) target = $region60
            $region59: #{decoder_layer_forward.8} parent=51 // pred_region
              %s428 = ssub.s32 16, 1
              loop: start=0, step=1, limit=1
              $region61: #{decoder_layer_forward.8} parent=59 // loop_pre_header
                _
              $region62: #{decoder_layer_forward.8} parent=59 // loop_header
                %s430 = sphi 0, %s434
                %p431 = scmp.ge.s32.totalorder %s430, 1
                %s435 = sphi %s412, %s412
                %s436 = sphi %s420, %s420
              $region63: #{decoder_layer_forward.8} parent=59 // loop_header_branch
                %433 = sbr.rel (%p431) target = $region67
              $region64: #{decoder_layer_forward.8} parent=59 // loop_body
                %v437 = vld [vmem:[%s435] sm:%s428]
                %438 = vst [vmem:[%s436] sm:%s428] %v437
                %v439 = vld [vmem:[%s435 + $0x4] sm:%s428]
                %440 = vst [vmem:[%s436 + $0xc] sm:%s428] %v439
              $region65: #{decoder_layer_forward.8} parent=59 // loop_footer
                %s434 = sadd.s32 1, %s430
              $region66: #{decoder_layer_forward.8} parent=59 // loop_footer_branch
                %429 = sbr.rel target = $region62
              $region67: #{decoder_layer_forward.8} parent=59 // loop_exit
                _
            $region60: #{decoder_layer_forward.8} parent=51 // pred_fallthru
              _
          $region52: #{decoder_layer_forward.8} parent=47 // pred_fallthru
            _
          %465 = vnop
        $region48: #{decoder_layer_forward.8} parent=31 // pred_fallthru
          _
      $region32: #{decoder_layer_forward.8} parent=5 // pred_fallthru
        _
      %p466 = scmp.le.s32.totalorder 2, %s12
      // Predicated region
      $region86: #{decoder_layer_forward.8} parent=5 // pred_check
        %p467 = pneg %p466
      $region87: #{decoder_layer_forward.8} parent=5 // pred_check_branch
        %469 = sbr.rel (%p467) target = $region89
      $region88: #{decoder_layer_forward.8} parent=5 // pred_region
        %s470 = ssub.s32 %s12, 2
        // Predicated region
        $region90: #{decoder_layer_forward.8} parent=88 // pred_check
          %p471 = pneg %p144
        $region91: #{decoder_layer_forward.8} parent=88 // pred_check_branch
          %473 = sbr.rel (%p471) target = $region93
        $region92: #{decoder_layer_forward.8} parent=88 // pred_region
          %s474 = sand.u32 %s129, 1
          %s475 = sand.u32 %s129, 1
          %s476 = smul.addr %s475, 8
          %s477 = scalar_lea.vmem [#allocation5], %s476
        $region93: #{decoder_layer_forward.8} parent=88 // pred_fallthru
          _
      $region89: #{decoder_layer_forward.8} parent=5 // pred_fallthru
        _
    $region6: #{decoder_layer_forward.8} parent=1 // loop_footer
      %s16 = sadd.s32 1, %s12
    $region7: #{decoder_layer_forward.8} parent=1 // loop_footer_branch
      %11 = sbr.rel target = $region3
    $region8: #{decoder_layer_forward.8} parent=1 // loop_exit
      _
    %478 = vsyncpa [#allocation4], 1
    %s479 = scalar_lea.sflag [#allocation4], 1
    %480 = vsyncpa %s479, 1

// kernel: decoder_layer_forward.11
$region0: #{decoder_layer_forward.11}
  #allocation0 [shape = 'u32[]', space=smem, size = 0x4, offset = 0x4, fixed_abs, tag = 'smem constant byte address 0x4 - core index']
  #allocation1 [shape = 'u32[144,128]{1,0:T(1,128)}', space=vmem, size = 0x12000, scoped, tag = 'internal scratch']
  #allocation2 [shape = 'f32[16,128]{1,0:T(8,128)}', space=vmem, size = 0x2000, scoped, tag = 'scratch operand']
  %s0 = inlined_call_operand.vmem [shape: bf16[16,128], index: 0, kind: input, shape index: {}]
  %s1 = inlined_call_operand.vmem [shape: bf16[128,128], index: 1, kind: input, shape index: {}]
  %s2 = inlined_call_operand.vmem [shape: f32[1,128], index: 2, kind: input, shape index: {}]
  %s3 = inlined_call_operand.vmem [shape: bf16[16,128], index: 3, kind: output, shape index: {}]
  %s4 = sld [smem:[#allocation0]]
  $region30: #{decoder_layer_forward.11} parent=0
    _
  %s6 = ssub.s32 1, %s4
  %s7 = scalar_select 0, %s6, %s4
  // Predicated region
  $region2: #{decoder_layer_forward.11} parent=0 // pred_check
    _
  $region3: #{decoder_layer_forward.11} parent=0 // pred_check_branch
    %9 = sbr.rel (0) target = $region5
  $region4: #{decoder_layer_forward.11} parent=0 // pred_region
    _
  $region5: #{decoder_layer_forward.11} parent=0 // pred_fallthru
    _
  // Predicated region
  $region6: #{decoder_layer_forward.11} parent=0 // pred_check
    _
  $region7: #{decoder_layer_forward.11} parent=0 // pred_check_branch
    %11 = sbr.rel (0) target = $region9
  $region8: #{decoder_layer_forward.11} parent=0 // pred_region
    _
  $region9: #{decoder_layer_forward.11} parent=0 // pred_fallthru
    _
  // Predicated region
  $region10: #{decoder_layer_forward.11} parent=0 // pred_check
    _
  $region11: #{decoder_layer_forward.11} parent=0 // pred_check_branch
    %13 = sbr.rel (0) target = $region13
  $region12: #{decoder_layer_forward.11} parent=0 // pred_region
    _
  $region13: #{decoder_layer_forward.11} parent=0 // pred_fallthru
    _
  %p15 = scmp.eq.s32.totalorder 0, 0
  // Predicated region
  $region14: #{decoder_layer_forward.11} parent=0 // pred_check
    %p16 = pneg %p15
  $region15: #{decoder_layer_forward.11} parent=0 // pred_check_branch
    %18 = sbr.rel (%p16) target = $region17
  $region16: #{decoder_layer_forward.11} parent=0 // pred_region
    %19 = vst [vmem:[#allocation2] sm:$0xff] 0.0
    %20 = vst [vmem:[#allocation2 + $0x8] sm:$0xff] 0.0
  $region17: #{decoder_layer_forward.11} parent=0 // pred_fallthru
    _
  %v21 = vld [vmem:[#allocation2] sm:$0xff]
  %v22 = vld [vmem:[#allocation2 + $0x8] sm:$0xff]
  %v23 = vld [vmem:[%s0] sm:$0xf]
  %v24 = vld [vmem:[%s0 + $0x4] sm:$0xf]
  %v25 = vld [vmem:[%s1] sm:$0xf]
  %v26 = vld [vmem:[%s1 + $0x4] sm:$0xf]
  %v27 = vld [vmem:[%s1 + $0x8] sm:$0xf]
  %v28 = vld [vmem:[%s1 + $0xc] sm:$0xf]
  %v29 = vld [vmem:[%s1 + $0x10] sm:$0xf]
  %v30 = vld [vmem:[%s1 + $0x14] sm:$0xf]
  %v31 = vld [vmem:[%s1 + $0x18] sm:$0xf]
  %v32 = vld [vmem:[%s1 + $0x1c] sm:$0xf]
  %v33 = vld [vmem:[%s1 + $0x20] sm:$0xf]
  %v34 = vld [vmem:[%s1 + $0x24] sm:$0xf]
  %v35 = vld [vmem:[%s1 + $0x28] sm:$0xf]
  %v36 = vld [vmem:[%s1 + $0x2c] sm:$0xf]
  %v37 = vld [vmem:[%s1 + $0x30] sm:$0xf]
  %v38 = vld [vmem:[%s1 + $0x34] sm:$0xf]
  %v39 = vld [vmem:[%s1 + $0x38] sm:$0xf]
  %v40 = vld [vmem:[%s1 + $0x3c] sm:$0xf]
  %v43 = vunpack.c.l.b16 %v23
  %v44 = vunpack.c.l.b16 %v24
  %v45 = vpack.c.b16 %v44, %v43
  %v63 = vunpack.c.l.b16 %v25
  %v64 = vunpack.c.l.b16 %v26
  %v65 = vunpack.c.l.b16 %v27
  %v66 = vunpack.c.l.b16 %v28
  %v67 = vunpack.c.l.b16 %v29
  %v68 = vunpack.c.l.b16 %v30
  %v69 = vunpack.c.l.b16 %v31
  %v70 = vunpack.c.l.b16 %v32
  %v71 = vunpack.c.l.b16 %v33
  %v72 = vunpack.c.l.b16 %v34
  %v73 = vunpack.c.l.b16 %v35
  %v74 = vunpack.c.l.b16 %v36
  %v75 = vunpack.c.l.b16 %v37
  %v76 = vunpack.c.l.b16 %v38
  %v77 = vunpack.c.l.b16 %v39
  %v78 = vunpack.c.l.b16 %v40
  %v79 = vpack.c.b16 %v64, %v63
  %v80 = vpack.c.b16 %v66, %v65
  %v81 = vpack.c.b16 %v68, %v67
  %v82 = vpack.c.b16 %v70, %v69
  %v83 = vpack.c.b16 %v72, %v71
  %v84 = vpack.c.b16 %v74, %v73
  %v85 = vpack.c.b16 %v76, %v75
  %v86 = vpack.c.b16 %v78, %v77
  %95 = vmatprep.subr.bf16.mxu0 0
  %96 = vmatpush1.bf16.msra.mxu0 %v86
  %97 = vmatprep.subr.bf16.mxu0 0
  %98 = vmatpush1.bf16.msra.mxu0 %v85
  %99 = vmatprep.subr.bf16.mxu0 0
  %100 = vmatpush1.bf16.msra.mxu0 %v84
  %101 = vmatprep.subr.bf16.mxu0 0
  %102 = vmatpush1.bf16.msra.mxu0 %v83
  %103 = vmatprep.subr.bf16.mxu0 0
  %104 = vmatpush1.bf16.msra.mxu0 %v82
  %105 = vmatprep.subr.bf16.mxu0 0
  %106 = vmatpush1.bf16.msra.mxu0 %v81
  %107 = vmatprep.subr.bf16.mxu0 0
  %108 = vmatpush1.bf16.msra.mxu0 %v80
  %109 = vmatprep.subr.bf16.mxu0 0
  %110 = vmatpush1.bf16.msra.mxu0 %v79
  %111 = vmatprep.subr.bf16.mxu0 0
  %112 = vmatpush2.bf16.msra.mxu0 0
  %113 = vmatprep.subr.bf16.mxu0 0
  %114 = vmatpush2.bf16.msra.mxu0 0
  %115 = vmatprep.subr.bf16.mxu0 0
  %116 = vmatpush2.bf16.msra.mxu0 0
  %117 = vmatprep.subr.bf16.mxu0 0
  %118 = vmatpush2.bf16.msra.mxu0 0
  %119 = vmatprep.subr.bf16.mxu0 0
  %120 = vmatpush2.bf16.msra.mxu0 0
  %121 = vmatprep.subr.bf16.mxu0 0
  %122 = vmatpush2.bf16.msra.mxu0 0
  %123 = vmatprep.subr.bf16.mxu0 0
  %124 = vmatpush2.bf16.msra.mxu0 0
  %125 = vmatprep.subr.bf16.mxu0 0
  %126 = vmatpush2.bf16.msra.mxu0 0
  %127 = vmatprep.mubr.bf16.mxu0 0
  %128 = vmatmul.mubr.bf16.gmra.mxu0 %v45
  %v129 = vpop.f32.mrf.mxu0
  %v130 = vadd.f32 0.0, %v129
  %v131 = vpop.f32.mrf.mxu0
  %v132 = vpop.f32.mrf.mxu0
  %v133 = vadd.f32 0.0, %v132
  %v134 = vpop.f32.mrf.mxu0
  %135 = vdwg.mxu0
  %v136 = vadd.f32 %v21, %v130
  %v137 = vadd.f32 %v22, %v133
  %138 = vst [vmem:[#allocation2] sm:$0xff] %v136
  %139 = vst [vmem:[#allocation2 + $0x8] sm:$0xff] %v137
  // Predicated region
  $region18: #{decoder_layer_forward.11} parent=0 // pred_check
    %p140 = pneg %p15
  $region19: #{decoder_layer_forward.11} parent=0 // pred_check_branch
    %142 = sbr.rel (%p140) target = $region21
  $region20: #{decoder_layer_forward.11} parent=0 // pred_region
    %v143 = vld [vmem:[#allocation2] sm:$0xff]
    %v144 = vld [vmem:[#allocation2 + $0x8] sm:$0xff]
    %v145 = vld [vmem:[%s2] sm:$0x1]
    %v147 = vlaneseq
    %v148 = vshrl.u32 %v147, 7
    %v149 = vsub.s32 0, %v148
    %v150 = vrot.slane %v145, %v149
    %v152 = vadd.f32 %v143, %v150
    %v153 = vadd.f32 %v144, %v150
    %v154 = vpack.c.bf16 %v153, %v152
    %v156 = vunpack.c.l.b16 %v154
    %v157 = vunpack.c.h.b16 %v154
    %v158 = vpack.c.b16 %v156, %v156
    %v159 = vpack.c.b16 %v157, %v157
    %162 = vst [vmem:[%s3] sm:$0xf] %v158
    %163 = vst [vmem:[%s3 + $0x4] sm:$0xf] %v159
  $region21: #{decoder_layer_forward.11} parent=0 // pred_fallthru
    _
  // Predicated region
  $region22: #{decoder_layer_forward.11} parent=0 // pred_check
    _
  $region23: #{decoder_layer_forward.11} parent=0 // pred_check_branch
    %165 = sbr.rel (0) target = $region25
  $region24: #{decoder_layer_forward.11} parent=0 // pred_region
    _
  $region25: #{decoder_layer_forward.11} parent=0 // pred_fallthru
    _
  // Predicated region
  $region26: #{decoder_layer_forward.11} parent=0 // pred_check
    _
  $region27: #{decoder_layer_forward.11} parent=0 // pred_check_branch
    %167 = sbr.rel (0) target = $region29
  $region28: #{decoder_layer_forward.11} parent=0 // pred_region
    _
  $region29: #{decoder_layer_forward.11} parent=0 // pred_fallthru
    _

// kernel: decoder_layer_forward.10
$region0: #{decoder_layer_forward.10}
  #allocation0 [shape = 'u32[]', space=smem, size = 0x4, offset = 0x4, fixed_abs, tag = 'smem constant byte address 0x4 - core index']
  #allocation1 [shape = 'u32[144,128]{1,0:T(1,128)}', space=vmem, size = 0x12000, scoped, tag = 'internal scratch']
  #allocation2 [shape = 'f32[16,128]{1,0:T(8,128)}', space=vmem, size = 0x2000, scoped, tag = 'scratch operand']
  %s0 = inlined_call_operand.vmem [shape: bf16[16,128], index: 0, kind: input, shape index: {}]
  %s1 = inlined_call_operand.vmem [shape: bf16[128,128], index: 1, kind: input, shape index: {}]
  %s2 = inlined_call_operand.vmem [shape: f32[1,128], index: 2, kind: input, shape index: {}]
  %s3 = inlined_call_operand.vmem [shape: bf16[16,128], index: 3, kind: input, shape index: {}]
  %s4 = inlined_call_operand.vmem [shape: f32[1,128], index: 4, kind: input, shape index: {}]
  %s5 = inlined_call_operand.vmem [shape: f32[1,128], index: 5, kind: input, shape index: {}]
  %s6 = inlined_call_operand.vmem [shape: bf16[16,128], index: 6, kind: output, shape index: {}]
  %s7 = sld [smem:[#allocation0]]
  $region42: #{decoder_layer_forward.10} parent=0
    _
  %s9 = ssub.s32 1, %s7
  %s10 = scalar_select 0, %s9, %s7
  // Predicated region
  $region2: #{decoder_layer_forward.10} parent=0 // pred_check
    _
  $region3: #{decoder_layer_forward.10} parent=0 // pred_check_branch
    %12 = sbr.rel (0) target = $region5
  $region4: #{decoder_layer_forward.10} parent=0 // pred_region
    _
  $region5: #{decoder_layer_forward.10} parent=0 // pred_fallthru
    _
  // Predicated region
  $region6: #{decoder_layer_forward.10} parent=0 // pred_check
    _
  $region7: #{decoder_layer_forward.10} parent=0 // pred_check_branch
    %14 = sbr.rel (0) target = $region9
  $region8: #{decoder_layer_forward.10} parent=0 // pred_region
    _
  $region9: #{decoder_layer_forward.10} parent=0 // pred_fallthru
    _
  // Predicated region
  $region10: #{decoder_layer_forward.10} parent=0 // pred_check
    _
  $region11: #{decoder_layer_forward.10} parent=0 // pred_check_branch
    %16 = sbr.rel (0) target = $region13
  $region12: #{decoder_layer_forward.10} parent=0 // pred_region
    _
  $region13: #{decoder_layer_forward.10} parent=0 // pred_fallthru
    _
  // Predicated region
  $region14: #{decoder_layer_forward.10} parent=0 // pred_check
    _
  $region15: #{decoder_layer_forward.10} parent=0 // pred_check_branch
    %18 = sbr.rel (0) target = $region17
  $region16: #{decoder_layer_forward.10} parent=0 // pred_region
    _
  $region17: #{decoder_layer_forward.10} parent=0 // pred_fallthru
    _
  // Predicated region
  $region18: #{decoder_layer_forward.10} parent=0 // pred_check
    _
  $region19: #{decoder_layer_forward.10} parent=0 // pred_check_branch
    %20 = sbr.rel (0) target = $region21
  $region20: #{decoder_layer_forward.10} parent=0 // pred_region
    _
  $region21: #{decoder_layer_forward.10} parent=0 // pred_fallthru
    _
  // Predicated region
  $region22: #{decoder_layer_forward.10} parent=0 // pred_check
    _
  $region23: #{decoder_layer_forward.10} parent=0 // pred_check_branch
    %22 = sbr.rel (0) target = $region25
  $region24: #{decoder_layer_forward.10} parent=0 // pred_region
    _
  $region25: #{decoder_layer_forward.10} parent=0 // pred_fallthru
    _
  %p24 = scmp.eq.s32.totalorder 0, 0
  // Predicated region
  $region26: #{decoder_layer_forward.10} parent=0 // pred_check
    %p25 = pneg %p24
  $region27: #{decoder_layer_forward.10} parent=0 // pred_check_branch
    %27 = sbr.rel (%p25) target = $region29
  $region28: #{decoder_layer_forward.10} parent=0 // pred_region
    %28 = vst [vmem:[#allocation2] sm:$0xff] 0.0
    %29 = vst [vmem:[#allocation2 + $0x8] sm:$0xff] 0.0
  $region29: #{decoder_layer_forward.10} parent=0 // pred_fallthru
    _
  %v30 = vld [vmem:[#allocation2] sm:$0xff]
  %v31 = vld [vmem:[#allocation2 + $0x8] sm:$0xff]
  %v32 = vld [vmem:[%s0] sm:$0xf]
  %v33 = vld [vmem:[%s0 + $0x4] sm:$0xf]
  %v34 = vld [vmem:[%s1] sm:$0xf]
  %v35 = vld [vmem:[%s1 + $0x4] sm:$0xf]
  %v36 = vld [vmem:[%s1 + $0x8] sm:$0xf]
  %v37 = vld [vmem:[%s1 + $0xc] sm:$0xf]
  %v38 = vld [vmem:[%s1 + $0x10] sm:$0xf]
  %v39 = vld [vmem:[%s1 + $0x14] sm:$0xf]
  %v40 = vld [vmem:[%s1 + $0x18] sm:$0xf]
  %v41 = vld [vmem:[%s1 + $0x1c] sm:$0xf]
  %v42 = vld [vmem:[%s1 + $0x20] sm:$0xf]
  %v43 = vld [vmem:[%s1 + $0x24] sm:$0xf]
  %v44 = vld [vmem:[%s1 + $0x28] sm:$0xf]
  %v45 = vld [vmem:[%s1 + $0x2c] sm:$0xf]
  %v46 = vld [vmem:[%s1 + $0x30] sm:$0xf]
  %v47 = vld [vmem:[%s1 + $0x34] sm:$0xf]
  %v48 = vld [vmem:[%s1 + $0x38] sm:$0xf]
  %v49 = vld [vmem:[%s1 + $0x3c] sm:$0xf]
  %v52 = vunpack.c.l.b16 %v32
  %v53 = vunpack.c.l.b16 %v33
  %v54 = vpack.c.b16 %v53, %v52
  %v72 = vunpack.c.l.b16 %v34
  %v73 = vunpack.c.l.b16 %v35
  %v74 = vunpack.c.l.b16 %v36
  %v75 = vunpack.c.l.b16 %v37
  %v76 = vunpack.c.l.b16 %v38
  %v77 = vunpack.c.l.b16 %v39
  %v78 = vunpack.c.l.b16 %v40
  %v79 = vunpack.c.l.b16 %v41
  %v80 = vunpack.c.l.b16 %v42
  %v81 = vunpack.c.l.b16 %v43
  %v82 = vunpack.c.l.b16 %v44
  %v83 = vunpack.c.l.b16 %v45
  %v84 = vunpack.c.l.b16 %v46
  %v85 = vunpack.c.l.b16 %v47
  %v86 = vunpack.c.l.b16 %v48
  %v87 = vunpack.c.l.b16 %v49
  %v88 = vpack.c.b16 %v73, %v72
  %v89 = vpack.c.b16 %v75, %v74
  %v90 = vpack.c.b16 %v77, %v76
  %v91 = vpack.c.b16 %v79, %v78
  %v92 = vpack.c.b16 %v81, %v80
  %v93 = vpack.c.b16 %v83, %v82
  %v94 = vpack.c.b16 %v85, %v84
  %v95 = vpack.c.b16 %v87, %v86
  %104 = vmatprep.subr.bf16.mxu0 0
  %105 = vmatpush1.bf16.msra.mxu0 %v95
  %106 = vmatprep.subr.bf16.mxu0 0
  %107 = vmatpush1.bf16.msra.mxu0 %v94
  %108 = vmatprep.subr.bf16.mxu0 0
  %109 = vmatpush1.bf16.msra.mxu0 %v93
  %110 = vmatprep.subr.bf16.mxu0 0
  %111 = vmatpush1.bf16.msra.mxu0 %v92
  %112 = vmatprep.subr.bf16.mxu0 0
  %113 = vmatpush1.bf16.msra.mxu0 %v91
  %114 = vmatprep.subr.bf16.mxu0 0
  %115 = vmatpush1.bf16.msra.mxu0 %v90
  %116 = vmatprep.subr.bf16.mxu0 0
  %117 = vmatpush1.bf16.msra.mxu0 %v89
  %118 = vmatprep.subr.bf16.mxu0 0
  %119 = vmatpush1.bf16.msra.mxu0 %v88
  %120 = vmatprep.subr.bf16.mxu0 0
  %121 = vmatpush2.bf16.msra.mxu0 0
  %122 = vmatprep.subr.bf16.mxu0 0
  %123 = vmatpush2.bf16.msra.mxu0 0
  %124 = vmatprep.subr.bf16.mxu0 0
  %125 = vmatpush2.bf16.msra.mxu0 0
  %126 = vmatprep.subr.bf16.mxu0 0
  %127 = vmatpush2.bf16.msra.mxu0 0
  %128 = vmatprep.subr.bf16.mxu0 0
  %129 = vmatpush2.bf16.msra.mxu0 0
  %130 = vmatprep.subr.bf16.mxu0 0
  %131 = vmatpush2.bf16.msra.mxu0 0
  %132 = vmatprep.subr.bf16.mxu0 0
  %133 = vmatpush2.bf16.msra.mxu0 0
  %134 = vmatprep.subr.bf16.mxu0 0
  %135 = vmatpush2.bf16.msra.mxu0 0
  %136 = vmatprep.mubr.bf16.mxu0 0
  %137 = vmatmul.mubr.bf16.gmra.mxu0 %v54
  %v138 = vpop.f32.mrf.mxu0
  %v139 = vadd.f32 0.0, %v138
  %v140 = vpop.f32.mrf.mxu0
  %v141 = vpop.f32.mrf.mxu0
  %v142 = vadd.f32 0.0, %v141
  %v143 = vpop.f32.mrf.mxu0
  %144 = vdwg.mxu0
  %v145 = vadd.f32 %v30, %v139
  %v146 = vadd.f32 %v31, %v142
  %147 = vst [vmem:[#allocation2] sm:$0xff] %v145
  %148 = vst [vmem:[#allocation2 + $0x8] sm:$0xff] %v146
  // Predicated region
  $region30: #{decoder_layer_forward.10} parent=0 // pred_check
    %p149 = pneg %p24
  $region31: #{decoder_layer_forward.10} parent=0 // pred_check_branch
    %151 = sbr.rel (%p149) target = $region33
  $region32: #{decoder_layer_forward.10} parent=0 // pred_region
    %v152 = vld [vmem:[#allocation2] sm:$0xff]
    %v153 = vld [vmem:[#allocation2 + $0x8] sm:$0xff]
    %v154 = vld [vmem:[%s2] sm:$0x1]
    %v156 = vlaneseq
    %v157 = vshrl.u32 %v156, 7
    %v158 = vsub.s32 0, %v157
    %v159 = vrot.slane %v154, %v158
    %v161 = vadd.f32 %v152, %v159
    %v162 = vadd.f32 %v153, %v159
    %v163 = vld [vmem:[%s3] sm:$0xf]
    %v164 = vld [vmem:[%s3 + $0x4] sm:$0xf]
    %v165 = vunpack.c.l.bf16 %v163
    %v166 = vunpack.c.l.bf16 %v164
    %v167 = vadd.f32 %v161, %v165
    %v168 = vadd.f32 %v162, %v166
    %169 = vadd.xlane.f32.xlu0 %v167
    %v170 = vpop.xlane.xlu0 %169
    %171 = vadd.xlane.f32.xlu0 %v168
    %v172 = vpop.xlane.xlu0 %171
    %v173 = vrcp.pop 128.0
    %v174 = vmul.f32 %v170, %v173
    %v175 = vmul.f32 %v172, %v173
    %v176 = vsub.f32 %v167, %v174
    %v177 = vsub.f32 %v168, %v175
    %v178 = vmul.f32 %v176, %v176
    %v179 = vmul.f32 %v177, %v177
    %180 = vadd.xlane.f32.xlu0 %v178
    %v181 = vpop.xlane.xlu0 %180
    %182 = vadd.xlane.f32.xlu0 %v179
    %v183 = vpop.xlane.xlu0 %182
    %v184 = vmul.f32 %v181, %v173
    %v185 = vmul.f32 %v183, %v173
    %v186 = vadd.f32 %v184, 1e-05
    %v187 = vadd.f32 %v185, 1e-05
    %v188 = vrsqrt.pop %v186
    %v189 = vrsqrt.pop %v187
    %v190 = vmul.f32 %v176, %v188
    %v191 = vmul.f32 %v177, %v189
    %v192 = vld [vmem:[%s4] sm:$0x1]
    %v194 = vlaneseq
    %v195 = vshrl.u32 %v194, 7
    %v196 = vsub.s32 0, %v195
    %v197 = vrot.slane %v192, %v196
    %v199 = vmul.f32 %v190, %v197
    %v200 = vmul.f32 %v191, %v197
    %v201 = vld [vmem:[%s5] sm:$0x1]
    %v203 = vlaneseq
    %v204 = vshrl.u32 %v203, 7
    %v205 = vsub.s32 0, %v204
    %v206 = vrot.slane %v201, %v205
    %v208 = vadd.f32 %v199, %v206
    %v209 = vadd.f32 %v200, %v206
    %v210 = vpack.c.bf16 %v209, %v208
    %v212 = vunpack.c.l.b16 %v210
    %v213 = vunpack.c.h.b16 %v210
    %v214 = vpack.c.b16 %v212, %v212
    %v215 = vpack.c.b16 %v213, %v213
    %218 = vst [vmem:[%s6] sm:$0xf] %v214
    %219 = vst [vmem:[%s6 + $0x4] sm:$0xf] %v215
  $region33: #{decoder_layer_forward.10} parent=0 // pred_fallthru
    _
  // Predicated region
  $region34: #{decoder_layer_forward.10} parent=0 // pred_check
    _
  $region35: #{decoder_layer_forward.10} parent=0 // pred_check_branch
    %221 = sbr.rel (0) target = $region37
  $region36: #{decoder_layer_forward.10} parent=0 // pred_region
    _
  $region37: #{decoder_layer_forward.10} parent=0 // pred_fallthru
    _
  // Predicated region
  $region38: #{decoder_layer_forward.10} parent=0 // pred_check
    _
  $region39: #{decoder_layer_forward.10} parent=0 // pred_check_branch
    %223 = sbr.rel (0) target = $region41
  $region40: #{decoder_layer_forward.10} parent=0 // pred_region
    _
  $region41: #{decoder_layer_forward.10} parent=0 // pred_fallthru
    _

// kernel: decoder_layer_forward.9
$region0: #{decoder_layer_forward.9}
  #allocation0 [shape = 'u32[]', space=smem, size = 0x4, offset = 0x4, fixed_abs, tag = 'smem constant byte address 0x4 - core index']
  #allocation1 [shape = 'u32[144,128]{1,0:T(1,128)}', space=vmem, size = 0x12000, scoped, tag = 'internal scratch']
  #allocation2 [shape = 'f32[8,4]{1,0:T(8,128)}', space=vmem, size = 0x1000, scoped, tag = 'scratch operand']
  #allocation3 [shape = 'f32[8,4]{1,0:T(8,128)}', space=vmem, size = 0x1000, scoped, tag = 'scratch operand']
  #allocation4 [shape = 'f32[8,128]{1,0:T(8,128)}', space=vmem, size = 0x1000, scoped, tag = 'scratch operand']
  %s0 = inlined_call_operand.vmem [shape: bf16[2,8,384], index: 0, kind: input, shape index: {}, may-alias: {0,1,2}]
  %s1 = inlined_call_operand.vmem [shape: bf16[2,8,384], index: 1, kind: input, shape index: {}, may-alias: {0,1,2}]
  %s2 = inlined_call_operand.vmem [shape: bf16[2,8,384], index: 2, kind: input, shape index: {}, may-alias: {0,1,2}]
  %s3 = inlined_call_operand.vmem [shape: bf16[2,8,128], index: 3, kind: output, shape index: {}]
  %s4 = sld [smem:[#allocation0]]
  $region53: #{decoder_layer_forward.9} parent=0
    _
  %s6 = ssub.s32 1, %s4
  %s7 = scalar_select 0, %s6, %s4
  loop: start=0, step=1, limit=4
  $region2: #{decoder_layer_forward.9} parent=0 // loop_pre_header
    _
  $region3: #{decoder_layer_forward.9} parent=0 // loop_header
    %s9 = sphi 0, %s13
    %p10 = scmp.ge.s32.totalorder %s9, 4
    %s16 = sphi 0, %s35
    %s17 = sphi 0, %s31
    %s18 = sphi 0, %s27
    %s19 = sphi 0, %s16
    %s20 = sphi 0, %s17
    %s21 = sphi 0, %s18
    %s22 = sphi 0, %s19
    %s23 = sphi 0, %s20
    %s24 = sphi 0, %s21
    %s40 = sphi 0, %s42
    %s43 = sphi 0, %s40
    %s44 = sphi 0, %s43
    %s60 = sphi 0, %s44
    %s68 = sphi 0, %s70
    %s71 = sphi 0, %s68
    %s72 = sphi 0, %s71
    %s88 = sphi 0, %s72
    %s96 = sphi 0, %s98
    %s99 = sphi 0, %s96
    %s100 = sphi 0, %s99
    %s116 = sphi 0, %s100
    %s124 = sphi 0, %s126
    %s127 = sphi 0, %s124
    %s128 = sphi 0, %s127
    %s144 = sphi 0, %s128
  $region4: #{decoder_layer_forward.9} parent=0 // loop_header_branch
    %12 = sbr.rel (%p10) target = $region8
  $region5: #{decoder_layer_forward.9} parent=0 // loop_body
    %s14 = ssub.s32 %s9, 1
    %s15 = ssub.s32 %s9, 2
    %s25 = sadd.s32 1, %s18
    %p26 = scmp.ge.s32.totalorder %s25, 1
    %s27 = scalar_select %p26, 0, %s25
    %s28 = sadd.s32 1, %s17
    %s29 = scalar_select %p26, %s28, %s17
    %p30 = scmp.ge.s32.totalorder %s29, 1
    %s31 = scalar_select %p30, 0, %s29
    %s32 = sadd.s32 1, %s16
    %s33 = scalar_select %p30, %s32, %s16
    %p34 = scmp.ge.s32.totalorder %s33, 2
    %s35 = scalar_select %p34, 0, %s33
    %s36 = ssub.s32 %s16, %s35
    %s37 = ssub.s32 %s17, %s31
    %s38 = sor.u32 %s36, %s37
    %p39 = scmp.eq.s32.totalorder %s38, 0
    %s41 = sadd.s32 %s40, 1
    %s42 = scalar_select %p39, %s40, %s41
    %p45 = pneg %p39
    %p46 = scmp.eq.s32.totalorder %s9, 1
    %p47 = por %p45, %p46
    %p48 = scmp.ne.s32.totalorder %s40, %s43
    %p49 = scmp.eq.s32.totalorder %s9, 0
    %p50 = por %p48, %p49
    %p51 = scmp.ne.s32.totalorder %s40, %s43
    %p52 = scmp.eq.s32.totalorder %s14, 1
    %p53 = por %p51, %p52
    %p54 = scmp.ne.s32.totalorder %s43, %s44
    %p55 = scmp.eq.s32.totalorder %s14, 0
    %p56 = por %p54, %p55
    %p57 = scmp.ne.s32.totalorder %s43, %s44
    %p58 = scmp.eq.s32.totalorder %s15, 1
    %p59 = por %p57, %p58
    %p61 = scmp.ne.s32.totalorder %s44, %s60
    %p62 = scmp.eq.s32.totalorder %s15, 0
    %p63 = por %p61, %p62
    %s64 = ssub.s32 %s16, %s35
    %s65 = ssub.s32 %s18, %s27
    %s66 = sor.u32 %s64, %s65
    %p67 = scmp.eq.s32.totalorder %s66, 0
    %s69 = sadd.s32 %s68, 1
    %s70 = scalar_select %p67, %s68, %s69
    %p73 = pneg %p67
    %p74 = scmp.eq.s32.totalorder %s9, 1
    %p75 = por %p73, %p74
    %p76 = scmp.ne.s32.totalorder %s68, %s71
    %p77 = scmp.eq.s32.totalorder %s9, 0
    %p78 = por %p76, %p77
    %p79 = scmp.ne.s32.totalorder %s68, %s71
    %p80 = scmp.eq.s32.totalorder %s14, 1
    %p81 = por %p79, %p80
    %p82 = scmp.ne.s32.totalorder %s71, %s72
    %p83 = scmp.eq.s32.totalorder %s14, 0
    %p84 = por %p82, %p83
    %p85 = scmp.ne.s32.totalorder %s71, %s72
    %p86 = scmp.eq.s32.totalorder %s15, 1
    %p87 = por %p85, %p86
    %p89 = scmp.ne.s32.totalorder %s72, %s88
    %p90 = scmp.eq.s32.totalorder %s15, 0
    %p91 = por %p89, %p90
    %s92 = ssub.s32 %s16, %s35
    %s93 = ssub.s32 %s18, %s27
    %s94 = sor.u32 %s92, %s93
    %p95 = scmp.eq.s32.totalorder %s94, 0
    %s97 = sadd.s32 %s96, 1
    %s98 = scalar_select %p95, %s96, %s97
    %p101 = pneg %p95
    %p102 = scmp.eq.s32.totalorder %s9, 1
    %p103 = por %p101, %p102
    %p104 = scmp.ne.s32.totalorder %s96, %s99
    %p105 = scmp.eq.s32.totalorder %s9, 0
    %p106 = por %p104, %p105
    %p107 = scmp.ne.s32.totalorder %s96, %s99
    %p108 = scmp.eq.s32.totalorder %s14, 1
    %p109 = por %p107, %p108
    %p110 = scmp.ne.s32.totalorder %s99, %s100
    %p111 = scmp.eq.s32.totalorder %s14, 0
    %p112 = por %p110, %p111
    %p113 = scmp.ne.s32.totalorder %s99, %s100
    %p114 = scmp.eq.s32.totalorder %s15, 1
    %p115 = por %p113, %p114
    %p117 = scmp.ne.s32.totalorder %s100, %s116
    %p118 = scmp.eq.s32.totalorder %s15, 0
    %p119 = por %p117, %p118
    %s120 = ssub.s32 %s16, %s35
    %s121 = ssub.s32 %s17, %s31
    %s122 = sor.u32 %s120, %s121
    %p123 = scmp.eq.s32.totalorder %s122, 0
    %s125 = sadd.s32 %s124, 1
    %s126 = scalar_select %p123, %s124, %s125
    %p129 = pneg %p123
    %p130 = scmp.eq.s32.totalorder %s9, 1
    %p131 = por %p129, %p130
    %p132 = scmp.ne.s32.totalorder %s124, %s127
    %p133 = scmp.eq.s32.totalorder %s9, 0
    %p134 = por %p132, %p133
    %p135 = scmp.ne.s32.totalorder %s124, %s127
    %p136 = scmp.eq.s32.totalorder %s14, 1
    %p137 = por %p135, %p136
    %p138 = scmp.ne.s32.totalorder %s127, %s128
    %p139 = scmp.eq.s32.totalorder %s14, 0
    %p140 = por %p138, %p139
    %p141 = scmp.ne.s32.totalorder %s127, %s128
    %p142 = scmp.eq.s32.totalorder %s15, 1
    %p143 = por %p141, %p142
    %p145 = scmp.ne.s32.totalorder %s128, %s144
    %p146 = scmp.eq.s32.totalorder %s15, 0
    %p147 = por %p145, %p146
    %p148 = scmp.le.s32.totalorder 1, %s9
    %p149 = scmp.lt.s32.totalorder %s9, 3
    %p150 = pnand %p148, %p149
    %p151 = pneg %p150
    // Predicated region
    $region9: #{decoder_layer_forward.9} parent=5 // pred_check
      _
    $region10: #{decoder_layer_forward.9} parent=5 // pred_check_branch
      %153 = sbr.rel (%p150) target = $region12
    $region11: #{decoder_layer_forward.9} parent=5 // pred_region
      %s154 = ssub.s32 %s9, 1
    $region12: #{decoder_layer_forward.9} parent=5 // pred_fallthru
      _
    %p155 = scmp.lt.s32.totalorder %s9, 2
    // Predicated region
    $region13: #{decoder_layer_forward.9} parent=5 // pred_check
      %p156 = pneg %p155
    $region14: #{decoder_layer_forward.9} parent=5 // pred_check_branch
      %158 = sbr.rel (%p156) target = $region16
    $region15: #{decoder_layer_forward.9} parent=5 // pred_region
      // Predicated region
      $region17: #{decoder_layer_forward.9} parent=15 // pred_check
        %p159 = pneg %p50
      $region18: #{decoder_layer_forward.9} parent=15 // pred_check_branch
        %161 = sbr.rel (%p159) target = $region20
      $region19: #{decoder_layer_forward.9} parent=15 // pred_region
        %p162 = scmp.lt.s32.totalorder %s16, 1
        %s163 = scalar_select %p162, %s16, 1
        %p164 = scmp.lt.s32.totalorder %s17, 0
        %s165 = scalar_select %p164, %s17, 0
        %s166 = smul.addr %s165, 3
        %s167 = smul.addr %s163, 3
        %s168 = sadd.s32 %s166, %s167
        %s169 = smul.addr %s168, 4
        %s170 = scalar_lea.vmem %s0, %s169
      $region20: #{decoder_layer_forward.9} parent=15 // pred_fallthru
        _
      // Predicated region
      $region21: #{decoder_layer_forward.9} parent=15 // pred_check
        %p171 = pneg %p78
      $region22: #{decoder_layer_forward.9} parent=15 // pred_check_branch
        %173 = sbr.rel (%p171) target = $region24
      $region23: #{decoder_layer_forward.9} parent=15 // pred_region
        %p174 = scmp.lt.s32.totalorder %s16, 1
        %s175 = scalar_select %p174, %s16, 1
        %p176 = scmp.lt.s32.totalorder %s18, 0
        %s177 = scalar_select %p176, %s18, 0
        %s178 = smul.addr %s177, 3
        %s179 = sadd.s32 1, %s178
        %s180 = smul.addr %s175, 3
        %s181 = sadd.s32 %s179, %s180
        %s182 = smul.addr %s181, 4
        %s183 = scalar_lea.vmem %s1, %s182
      $region24: #{decoder_layer_forward.9} parent=15 // pred_fallthru
        _
      // Predicated region
      $region25: #{decoder_layer_forward.9} parent=15 // pred_check
        %p184 = pneg %p106
      $region26: #{decoder_layer_forward.9} parent=15 // pred_check_branch
        %186 = sbr.rel (%p184) target = $region28
      $region27: #{decoder_layer_forward.9} parent=15 // pred_region
        %p187 = scmp.lt.s32.totalorder %s16, 1
        %s188 = scalar_select %p187, %s16, 1
        %p189 = scmp.lt.s32.totalorder %s18, 0
        %s190 = scalar_select %p189, %s18, 0
        %s191 = smul.addr %s190, 3
        %s192 = sadd.s32 2, %s191
        %s193 = smul.addr %s188, 3
        %s194 = sadd.s32 %s192, %s193
        %s195 = smul.addr %s194, 4
        %s196 = scalar_lea.vmem %s2, %s195
      $region28: #{decoder_layer_forward.9} parent=15 // pred_fallthru
        _
    $region16: #{decoder_layer_forward.9} parent=5 // pred_fallthru
      _
    %p197 = scmp.le.s32.totalorder 1, %s9
    %p198 = scmp.lt.s32.totalorder %s9, 3
    %p199 = pnand %p197, %p198
    %p200 = pneg %p199
    // Predicated region
    $region29: #{decoder_layer_forward.9} parent=5 // pred_check
      _
    $region30: #{decoder_layer_forward.9} parent=5 // pred_check_branch
      %202 = sbr.rel (%p199) target = $region32
    $region31: #{decoder_layer_forward.9} parent=5 // pred_region
      %s203 = ssub.s32 %s9, 1
      %p204 = scmp.lt.s32.totalorder %s19, 1
      %s205 = scalar_select %p204, %s19, 1
      %p206 = scmp.lt.s32.totalorder %s20, 0
      %s207 = scalar_select %p206, %s20, 0
      %s208 = smul.addr %s207, 3
      %s209 = smul.addr %s205, 3
      %s210 = sadd.s32 %s208, %s209
      %s211 = smul.addr %s210, 4
      %s212 = scalar_lea.vmem %s0, %s211
      %p213 = pneg %p56
      %p214 = pneg %p53
      %p215 = scmp.lt.s32.totalorder %s19, 1
      %s216 = scalar_select %p215, %s19, 1
      %p217 = scmp.lt.s32.totalorder %s21, 0
      %s218 = scalar_select %p217, %s21, 0
      %s219 = smul.addr %s218, 3
      %s220 = sadd.s32 1, %s219
      %s221 = smul.addr %s216, 3
      %s222 = sadd.s32 %s220, %s221
      %s223 = smul.addr %s222, 4
      %s224 = scalar_lea.vmem %s1, %s223
      %p225 = pneg %p84
      %p226 = pneg %p81
      %p227 = scmp.lt.s32.totalorder %s19, 1
      %s228 = scalar_select %p227, %s19, 1
      %p229 = scmp.lt.s32.totalorder %s21, 0
      %s230 = scalar_select %p229, %s21, 0
      %s231 = smul.addr %s230, 3
      %s232 = sadd.s32 2, %s231
      %s233 = smul.addr %s228, 3
      %s234 = sadd.s32 %s232, %s233
      %s235 = smul.addr %s234, 4
      %s236 = scalar_lea.vmem %s2, %s235
      %p237 = pneg %p112
      %p238 = pneg %p109
      %p239 = pneg %p140
      %p240 = pneg %p137
      %p241 = scmp.lt.s32.totalorder %s19, 1
      %s242 = scalar_select %p241, %s19, 1
      %p243 = scmp.lt.s32.totalorder %s20, 0
      %s244 = scalar_select %p243, %s20, 0
      %s245 = sadd.s32 %s244, %s242
      %s246 = smul.addr %s245, 4
      %s247 = scalar_lea.vmem %s3, %s246
      %p248 = scmp.lt.s32.totalorder %s19, 1
      %s249 = scalar_select %p248, %s19, 1
      %p250 = scmp.lt.s32.totalorder %s20, 0
      %s251 = scalar_select %p250, %s20, 0
      %s252 = smul.addr %s251, 3
      %s253 = smul.addr %s249, 3
      %s254 = sadd.s32 %s252, %s253
      %s255 = smul.addr %s254, 4
      %s256 = scalar_lea.vmem %s0, %s255
      %p257 = scmp.lt.s32.totalorder %s19, 1
      %s258 = scalar_select %p257, %s19, 1
      %p259 = scmp.lt.s32.totalorder %s21, 0
      %s260 = scalar_select %p259, %s21, 0
      %s261 = smul.addr %s260, 3
      %s262 = sadd.s32 1, %s261
      %s263 = smul.addr %s258, 3
      %s264 = sadd.s32 %s262, %s263
      %s265 = smul.addr %s264, 4
      %s266 = scalar_lea.vmem %s1, %s265
      %p267 = scmp.lt.s32.totalorder %s19, 1
      %s268 = scalar_select %p267, %s19, 1
      %p269 = scmp.lt.s32.totalorder %s21, 0
      %s270 = scalar_select %p269, %s21, 0
      %s271 = smul.addr %s270, 3
      %s272 = sadd.s32 2, %s271
      %s273 = smul.addr %s268, 3
      %s274 = sadd.s32 %s272, %s273
      %s275 = smul.addr %s274, 4
      %s276 = scalar_lea.vmem %s2, %s275
      %p277 = scmp.lt.s32.totalorder %s19, 1
      %s278 = scalar_select %p277, %s19, 1
      %p279 = scmp.lt.s32.totalorder %s20, 0
      %s280 = scalar_select %p279, %s20, 0
      %s281 = sadd.s32 %s280, %s278
      %s282 = smul.addr %s281, 4
      %s283 = scalar_lea.vmem %s3, %s282
      %p285 = scmp.eq.s32.totalorder %s21, 0
      // Predicated region
      $region33: #{decoder_layer_forward.9} parent=31 // pred_check
        %p286 = pneg %p285
      $region34: #{decoder_layer_forward.9} parent=31 // pred_check_branch
        %288 = sbr.rel (%p286) target = $region36
      $region35: #{decoder_layer_forward.9} parent=31 // pred_region
        %vm289 = vcmask 31744
        %290 = vst.msk [vmem:[#allocation2] sm:$0xff] %vm289, -inf
        %291 = vst.msk [vmem:[#allocation3] sm:$0xff] %vm289, 0.0
        %292 = vst [vmem:[#allocation4] sm:$0xff] 0.0
      $region36: #{decoder_layer_forward.9} parent=31 // pred_fallthru
        _
      %v293 = vld [vmem:[%s256] sm:$0xf]
      %v294 = vld [vmem:[%s266] sm:$0xf]
      %v295 = vld [vmem:[%s276] sm:$0xf]
      %vm296 = vcmask 261120
      %v298 = vsel %vm296, %v293, 0
      %v301 = vsel %vm296, %v294, 0
      %303 = vmatprep.subr.bf16.mxu0 0
      %304 = vmatpush1.bf16.xpose.msra.mxu0 0
      %305 = vmatprep.subr.bf16.mxu0 0
      %306 = vmatpush1.bf16.xpose.msra.mxu0 0
      %307 = vmatprep.subr.bf16.mxu0 0
      %308 = vmatpush1.bf16.xpose.msra.mxu0 0
      %309 = vmatprep.subr.bf16.mxu0 0
      %310 = vmatpush1.bf16.xpose.msra.mxu0 0
      %311 = vmatprep.subr.bf16.mxu0 0
      %312 = vmatpush1.bf16.xpose.msra.mxu0 0
      %313 = vmatprep.subr.bf16.mxu0 0
      %314 = vmatpush1.bf16.xpose.msra.mxu0 0
      %315 = vmatprep.subr.bf16.mxu0 0
      %316 = vmatpush1.bf16.xpose.msra.mxu0 0
      %317 = vmatprep.subr.bf16.mxu0 0
      %318 = vmatpush1.bf16.xpose.msra.mxu0 %v301
      %319 = vmatprep.subr.bf16.mxu0 0
      %320 = vmatpush2.bf16.xpose.msra.mxu0 0
      %321 = vmatprep.subr.bf16.mxu0 0
      %322 = vmatpush2.bf16.xpose.msra.mxu0 0
      %323 = vmatprep.subr.bf16.mxu0 0
      %324 = vmatpush2.bf16.xpose.msra.mxu0 0
      %325 = vmatprep.subr.bf16.mxu0 0
      %326 = vmatpush2.bf16.xpose.msra.mxu0 0
      %327 = vmatprep.subr.bf16.mxu0 0
      %328 = vmatpush2.bf16.xpose.msra.mxu0 0
      %329 = vmatprep.subr.bf16.mxu0 0
      %330 = vmatpush2.bf16.xpose.msra.mxu0 0
      %331 = vmatprep.subr.bf16.mxu0 0
      %332 = vmatpush2.bf16.xpose.msra.mxu0 0
      %333 = vmatprep.subr.bf16.mxu0 0
      %334 = vmatpush2.bf16.xpose.msra.mxu0 0
      %335 = vmatprep.mubr.bf16.mxu0 0
      %336 = vmatmul.mubr.bf16.gmra.mxu0 %v298
      %v337 = vpop.f32.mrf.mxu0
      %v338 = vadd.f32 0.0, %v337
      %v339 = vpop.f32.mrf.mxu0
      %v340 = vpop.f32.mrf.mxu0
      %v341 = vpop.f32.mrf.mxu0
      %342 = vdwg.mxu0
      %v343 = vld [vmem:[#allocation2] sm:$0xff]
      %vm344 = vcmask 64512
      %v345 = vsel %vm344, %v338, -inf
      %346 = vmax.xlane.f32.xlu0 %v345
      %v347 = vpop.xlane.xlu0 %346
      %v348 = vmax.f32 %v343, %v347
      %v349 = vsub.f32 %v343, %v348
      %v350 = vmul.f32 %v349, 1.442695
      %v351 = vpow.pop %v350
      %353 = vset.pattern.permute.xlu0 0
      %354 = vperm.xlu0 %353, %v348
      %v355 = vpop.permute.xlu0 %354
      %v357 = vsub.f32 %v338, %v355
      %v358 = vmul.f32 %v357, 1.442695
      %v359 = vpow.pop %v358
      %v360 = vld [vmem:[#allocation3] sm:$0xff]
      %v361 = vmul.f32 %v351, %v360
      %v362 = vsel %vm344, %v359, 0.0
      %363 = vadd.xlane.f32.xlu0 %v362
      %v364 = vpop.xlane.xlu0 %363
      %v365 = vadd.f32 %v361, %v364
      %vm366 = vcmask 7168
      %367 = vst.msk [vmem:[#allocation3] sm:$0xff] %vm366, %v365
      %v368 = vld [vmem:[#allocation4] sm:$0xff]
      %370 = vset.pattern.permute.xlu0 0
      %371 = vperm.xlu0 %370, %v351
      %v372 = vpop.permute.xlu0 %371
      %v374 = vmul.f32 %v372, %v368
      %v375 = vpack.c.bf16 %v359, %v359
      %v377 = vsel %vm344, %v375, 0
      %vm379 = vcmask 1043456
      %v381 = vsel %vm379, %v295, 0
      %383 = vmatprep.subr.bf16.mxu0 0
      %384 = vmatpush1.bf16.msra.mxu0 0
      %385 = vmatprep.subr.bf16.mxu0 0
      %386 = vmatpush1.bf16.msra.mxu0 0
      %387 = vmatprep.subr.bf16.mxu0 0
      %388 = vmatpush1.bf16.msra.mxu0 0
      %389 = vmatprep.subr.bf16.mxu0 0
      %390 = vmatpush1.bf16.msra.mxu0 0
      %391 = vmatprep.subr.bf16.mxu0 0
      %392 = vmatpush1.bf16.msra.mxu0 0
      %393 = vmatprep.subr.bf16.mxu0 0
      %394 = vmatpush1.bf16.msra.mxu0 0
      %395 = vmatprep.subr.bf16.mxu0 0
      %396 = vmatpush1.bf16.msra.mxu0 0
      %397 = vmatprep.subr.bf16.mxu0 0
      %398 = vmatpush1.bf16.msra.mxu0 %v381
      %399 = vmatprep.subr.bf16.mxu0 0
      %400 = vmatpush2.bf16.msra.mxu0 0
      %401 = vmatprep.subr.bf16.mxu0 0
      %402 = vmatpush2.bf16.msra.mxu0 0
      %403 = vmatprep.subr.bf16.mxu0 0
      %404 = vmatpush2.bf16.msra.mxu0 0
      %405 = vmatprep.subr.bf16.mxu0 0
      %406 = vmatpush2.bf16.msra.mxu0 0
      %407 = vmatprep.subr.bf16.mxu0 0
      %408 = vmatpush2.bf16.msra.mxu0 0
      %409 = vmatprep.subr.bf16.mxu0 0
      %410 = vmatpush2.bf16.msra.mxu0 0
      %411 = vmatprep.subr.bf16.mxu0 0
      %412 = vmatpush2.bf16.msra.mxu0 0
      %413 = vmatprep.subr.bf16.mxu0 0
      %414 = vmatpush2.bf16.msra.mxu0 0
      %415 = vmatprep.mubr.bf16.mxu0 0
      %416 = vmatmul.mubr.bf16.gmra.mxu0 %v377
      %v417 = vpop.f32.mrf.mxu0
      %v418 = vadd.f32 0.0, %v417
      %v419 = vpop.f32.mrf.mxu0
      %v420 = vpop.f32.mrf.mxu0
      %v421 = vpop.f32.mrf.mxu0
      %422 = vdwg.mxu0
      %v423 = vadd.f32 %v374, %v418
      %424 = vst.msk [vmem:[#allocation4] sm:$0xff] %vm296, %v423
      %425 = vst.msk [vmem:[#allocation2] sm:$0xff] %vm366, %v348
      %v427 = vunpack.c.l.b16 %v293
      %v428 = vpack.c.b16 %v427, %v427
      %429 = vrot.lane.b32.xlu0 %v428, 96
      %v430 = vpop.permute.xlu0 %429
      %v432 = vunpack.c.l.b16 %v294
      %v433 = vpack.c.b16 %v432, %v432
      %434 = vrot.lane.b32.xlu0 %v433, 96
      %v435 = vpop.permute.xlu0 %434
      %v437 = vsel %vm296, %v430, 0
      %v440 = vsel %vm296, %v435, 0
      %442 = vmatprep.subr.bf16.mxu0 0
      %443 = vmatpush1.bf16.xpose.msra.mxu0 0
      %444 = vmatprep.subr.bf16.mxu0 0
      %445 = vmatpush1.bf16.xpose.msra.mxu0 0
      %446 = vmatprep.subr.bf16.mxu0 0
      %447 = vmatpush1.bf16.xpose.msra.mxu0 0
      %448 = vmatprep.subr.bf16.mxu0 0
      %449 = vmatpush1.bf16.xpose.msra.mxu0 0
      %450 = vmatprep.subr.bf16.mxu0 0
      %451 = vmatpush1.bf16.xpose.msra.mxu0 0
      %452 = vmatprep.subr.bf16.mxu0 0
      %453 = vmatpush1.bf16.xpose.msra.mxu0 0
      %454 = vmatprep.subr.bf16.mxu0 0
      %455 = vmatpush1.bf16.xpose.msra.mxu0 0
      %456 = vmatprep.subr.bf16.mxu0 0
      %457 = vmatpush1.bf16.xpose.msra.mxu0 %v440
      %458 = vmatprep.subr.bf16.mxu0 0
      %459 = vmatpush2.bf16.xpose.msra.mxu0 0
      %460 = vmatprep.subr.bf16.mxu0 0
      %461 = vmatpush2.bf16.xpose.msra.mxu0 0
      %462 = vmatprep.subr.bf16.mxu0 0
      %463 = vmatpush2.bf16.xpose.msra.mxu0 0
      %464 = vmatprep.subr.bf16.mxu0 0
      %465 = vmatpush2.bf16.xpose.msra.mxu0 0
      %466 = vmatprep.subr.bf16.mxu0 0
      %467 = vmatpush2.bf16.xpose.msra.mxu0 0
      %468 = vmatprep.subr.bf16.mxu0 0
      %469 = vmatpush2.bf16.xpose.msra.mxu0 0
      %470 = vmatprep.subr.bf16.mxu0 0
      %471 = vmatpush2.bf16.xpose.msra.mxu0 0
      %472 = vmatprep.subr.bf16.mxu0 0
      %473 = vmatpush2.bf16.xpose.msra.mxu0 0
      %474 = vmatprep.mubr.bf16.mxu0 0
      %475 = vmatmul.mubr.bf16.gmra.mxu0 %v437
      %v476 = vpop.f32.mrf.mxu0
      %v477 = vadd.f32 0.0, %v476
      %v478 = vpop.f32.mrf.mxu0
      %v479 = vpop.f32.mrf.mxu0
      %v480 = vpop.f32.mrf.mxu0
      %481 = vdwg.mxu0
      %v482 = vld [vmem:[#allocation2] sm:$0xff]
      %v483 = vsel %vm344, %v477, -inf
      %484 = vmax.xlane.f32.xlu0 %v483
      %v485 = vpop.xlane.xlu0 %484
      %v486 = vmax.f32 %v482, %v485
      %v487 = vsub.f32 %v482, %v486
      %v488 = vmul.f32 %v487, 1.442695
      %v489 = vpow.pop %v488
      %491 = vset.pattern.permute.xlu0 1
      %492 = vperm.xlu0 %491, %v486
      %v493 = vpop.permute.xlu0 %492
      %v495 = vsub.f32 %v477, %v493
      %v496 = vmul.f32 %v495, 1.442695
      %v497 = vpow.pop %v496
      %v498 = vld [vmem:[#allocation3] sm:$0xff]
      %v499 = vmul.f32 %v489, %v498
      %v500 = vsel %vm344, %v497, 0.0
      %501 = vadd.xlane.f32.xlu0 %v500
      %v502 = vpop.xlane.xlu0 %501
      %v503 = vadd.f32 %v499, %v502
      %vm504 = vcmask 15368
      %505 = vst.msk [vmem:[#allocation3] sm:$0xff] %vm504, %v503
      %v506 = vld [vmem:[#allocation4] sm:$0xff]
      %508 = vset.pattern.permute.xlu0 1
      %509 = vperm.xlu0 %508, %v489
      %v510 = vpop.permute.xlu0 %509
      %v512 = vmul.f32 %v510, %v506
      %v513 = vpack.c.bf16 %v497, %v497
      %v515 = vunpack.c.l.b16 %v295
      %v516 = vpack.c.b16 %v515, %v515
      %517 = vrot.lane.b32.xlu0 %v516, 96
      %v518 = vpop.permute.xlu0 %517
      %v520 = vsel %vm344, %v513, 0
      %v523 = vsel %vm379, %v518, 0
      %525 = vmatprep.subr.bf16.mxu0 0
      %526 = vmatpush1.bf16.msra.mxu0 0
      %527 = vmatprep.subr.bf16.mxu0 0
      %528 = vmatpush1.bf16.msra.mxu0 0
      %529 = vmatprep.subr.bf16.mxu0 0
      %530 = vmatpush1.bf16.msra.mxu0 0
      %531 = vmatprep.subr.bf16.mxu0 0
      %532 = vmatpush1.bf16.msra.mxu0 0
      %533 = vmatprep.subr.bf16.mxu0 0
      %534 = vmatpush1.bf16.msra.mxu0 0
      %535 = vmatprep.subr.bf16.mxu0 0
      %536 = vmatpush1.bf16.msra.mxu0 0
      %537 = vmatprep.subr.bf16.mxu0 0
      %538 = vmatpush1.bf16.msra.mxu0 0
      %539 = vmatprep.subr.bf16.mxu0 0
      %540 = vmatpush1.bf16.msra.mxu0 %v523
      %541 = vmatprep.subr.bf16.mxu0 0
      %542 = vmatpush2.bf16.msra.mxu0 0
      %543 = vmatprep.subr.bf16.mxu0 0
      %544 = vmatpush2.bf16.msra.mxu0 0
      %545 = vmatprep.subr.bf16.mxu0 0
      %546 = vmatpush2.bf16.msra.mxu0 0
      %547 = vmatprep.subr.bf16.mxu0 0
      %548 = vmatpush2.bf16.msra.mxu0 0
      %549 = vmatprep.subr.bf16.mxu0 0
      %550 = vmatpush2.bf16.msra.mxu0 0
      %551 = vmatprep.subr.bf16.mxu0 0
      %552 = vmatpush2.bf16.msra.mxu0 0
      %553 = vmatprep.subr.bf16.mxu0 0
      %554 = vmatpush2.bf16.msra.mxu0 0
      %555 = vmatprep.subr.bf16.mxu0 0
      %556 = vmatpush2.bf16.msra.mxu0 0
      %557 = vmatprep.mubr.bf16.mxu0 0
      %558 = vmatmul.mubr.bf16.gmra.mxu0 %v520
      %v559 = vpop.f32.mrf.mxu0
      %v560 = vadd.f32 0.0, %v559
      %v561 = vpop.f32.mrf.mxu0
      %v562 = vpop.f32.mrf.mxu0
      %v563 = vpop.f32.mrf.mxu0
      %564 = vdwg.mxu0
      %566 = vrot.lane.b32.xlu0 %v560, 32
      %v567 = vpop.permute.xlu0 %566
      %v569 = vadd.f32 %v512, %v567
      %vm570 = vcmask 523520
      %571 = vst.msk [vmem:[#allocation4] sm:$0xff] %vm570, %v569
      %572 = vst.msk [vmem:[#allocation2] sm:$0xff] %vm504, %v486
      %573 = vrot.lane.b32.xlu0 %v428, 64
      %v574 = vpop.permute.xlu0 %573
      %575 = vrot.lane.b32.xlu0 %v433, 64
      %v576 = vpop.permute.xlu0 %575
      %v578 = vsel %vm296, %v574, 0
      %v581 = vsel %vm296, %v576, 0
      %583 = vmatprep.subr.bf16.mxu0 0
      %584 = vmatpush1.bf16.xpose.msra.mxu0 0
      %585 = vmatprep.subr.bf16.mxu0 0
      %586 = vmatpush1.bf16.xpose.msra.mxu0 0
      %587 = vmatprep.subr.bf16.mxu0 0
      %588 = vmatpush1.bf16.xpose.msra.mxu0 0
      %589 = vmatprep.subr.bf16.mxu0 0
      %590 = vmatpush1.bf16.xpose.msra.mxu0 0
      %591 = vmatprep.subr.bf16.mxu0 0
      %592 = vmatpush1.bf16.xpose.msra.mxu0 0
      %593 = vmatprep.subr.bf16.mxu0 0
      %594 = vmatpush1.bf16.xpose.msra.mxu0 0
      %595 = vmatprep.subr.bf16.mxu0 0
      %596 = vmatpush1.bf16.xpose.msra.mxu0 0
      %597 = vmatprep.subr.bf16.mxu0 0
      %598 = vmatpush1.bf16.xpose.msra.mxu0 %v581
      %599 = vmatprep.subr.bf16.mxu0 0
      %600 = vmatpush2.bf16.xpose.msra.mxu0 0
      %601 = vmatprep.subr.bf16.mxu0 0
      %602 = vmatpush2.bf16.xpose.msra.mxu0 0
      %603 = vmatprep.subr.bf16.mxu0 0
      %604 = vmatpush2.bf16.xpose.msra.mxu0 0
      %605 = vmatprep.subr.bf16.mxu0 0
      %606 = vmatpush2.bf16.xpose.msra.mxu0 0
      %607 = vmatprep.subr.bf16.mxu0 0
      %608 = vmatpush2.bf16.xpose.msra.mxu0 0
      %609 = vmatprep.subr.bf16.mxu0 0
      %610 = vmatpush2.bf16.xpose.msra.mxu0 0
      %611 = vmatprep.subr.bf16.mxu0 0
      %612 = vmatpush2.bf16.xpose.msra.mxu0 0
      %613 = vmatprep.subr.bf16.mxu0 0
      %614 = vmatpush2.bf16.xpose.msra.mxu0 0
      %615 = vmatprep.mubr.bf16.mxu0 0
      %616 = vmatmul.mubr.bf16.gmra.mxu0 %v578
      %v617 = vpop.f32.mrf.mxu0
      %v618 = vadd.f32 0.0, %v617
      %v619 = vpop.f32.mrf.mxu0
      %v620 = vpop.f32.mrf.mxu0
      %v621 = vpop.f32.mrf.mxu0
      %622 = vdwg.mxu0
      %v623 = vld [vmem:[#allocation2] sm:$0xff]
      %v624 = vsel %vm344, %v618, -inf
      %625 = vmax.xlane.f32.xlu0 %v624
      %v626 = vpop.xlane.xlu0 %625
      %v627 = vmax.f32 %v623, %v626
      %v628 = vsub.f32 %v623, %v627
      %v629 = vmul.f32 %v628, 1.442695
      %v630 = vpow.pop %v629
      %632 = vset.pattern.permute.xlu0 2
      %633 = vperm.xlu0 %632, %v627
      %v634 = vpop.permute.xlu0 %633
      %v636 = vsub.f32 %v618, %v634
      %v637 = vmul.f32 %v636, 1.442695
      %v638 = vpow.pop %v637
      %v639 = vld [vmem:[#allocation3] sm:$0xff]
      %v640 = vmul.f32 %v630, %v639
      %v641 = vsel %vm344, %v638, 0.0
      %642 = vadd.xlane.f32.xlu0 %v641
      %v643 = vpop.xlane.xlu0 %642
      %v644 = vadd.f32 %v640, %v643
      %vm645 = vcmask 23568
      %646 = vst.msk [vmem:[#allocation3] sm:$0xff] %vm645, %v644
      %v647 = vld [vmem:[#allocation4] sm:$0xff]
      %649 = vset.pattern.permute.xlu0 2
      %650 = vperm.xlu0 %649, %v630
      %v651 = vpop.permute.xlu0 %650
      %v653 = vmul.f32 %v651, %v647
      %v654 = vpack.c.bf16 %v638, %v638
      %655 = vrot.lane.b32.xlu0 %v516, 64
      %v656 = vpop.permute.xlu0 %655
      %v658 = vsel %vm344, %v654, 0
      %v661 = vsel %vm379, %v656, 0
      %663 = vmatprep.subr.bf16.mxu0 0
      %664 = vmatpush1.bf16.msra.mxu0 0
      %665 = vmatprep.subr.bf16.mxu0 0
      %666 = vmatpush1.bf16.msra.mxu0 0
      %667 = vmatprep.subr.bf16.mxu0 0
      %668 = vmatpush1.bf16.msra.mxu0 0
      %669 = vmatprep.subr.bf16.mxu0 0
      %670 = vmatpush1.bf16.msra.mxu0 0
      %671 = vmatprep.subr.bf16.mxu0 0
      %672 = vmatpush1.bf16.msra.mxu0 0
      %673 = vmatprep.subr.bf16.mxu0 0
      %674 = vmatpush1.bf16.msra.mxu0 0
      %675 = vmatprep.subr.bf16.mxu0 0
      %676 = vmatpush1.bf16.msra.mxu0 0
      %677 = vmatprep.subr.bf16.mxu0 0
      %678 = vmatpush1.bf16.msra.mxu0 %v661
      %679 = vmatprep.subr.bf16.mxu0 0
      %680 = vmatpush2.bf16.msra.mxu0 0
      %681 = vmatprep.subr.bf16.mxu0 0
      %682 = vmatpush2.bf16.msra.mxu0 0
      %683 = vmatprep.subr.bf16.mxu0 0
      %684 = vmatpush2.bf16.msra.mxu0 0
      %685 = vmatprep.subr.bf16.mxu0 0
      %686 = vmatpush2.bf16.msra.mxu0 0
      %687 = vmatprep.subr.bf16.mxu0 0
      %688 = vmatpush2.bf16.msra.mxu0 0
      %689 = vmatprep.subr.bf16.mxu0 0
      %690 = vmatpush2.bf16.msra.mxu0 0
      %691 = vmatprep.subr.bf16.mxu0 0
      %692 = vmatpush2.bf16.msra.mxu0 0
      %693 = vmatprep.subr.bf16.mxu0 0
      %694 = vmatpush2.bf16.msra.mxu0 0
      %695 = vmatprep.mubr.bf16.mxu0 0
      %696 = vmatmul.mubr.bf16.gmra.mxu0 %v658
      %v697 = vpop.f32.mrf.mxu0
      %v698 = vadd.f32 0.0, %v697
      %v699 = vpop.f32.mrf.mxu0
      %v700 = vpop.f32.mrf.mxu0
      %v701 = vpop.f32.mrf.mxu0
      %702 = vdwg.mxu0
      %704 = vrot.lane.b32.xlu0 %v698, 64
      %v705 = vpop.permute.xlu0 %704
      %v707 = vadd.f32 %v653, %v705
      %vm708 = vcmask 785920
      %709 = vst.msk [vmem:[#allocation4] sm:$0xff] %vm708, %v707
      %710 = vst.msk [vmem:[#allocation2] sm:$0xff] %vm645, %v627
      %711 = vrot.lane.b32.xlu0 %v428, 32
      %v712 = vpop.permute.xlu0 %711
      %713 = vrot.lane.b32.xlu0 %v433, 32
      %v714 = vpop.permute.xlu0 %713
      %v716 = vsel %vm296, %v712, 0
      %v719 = vsel %vm296, %v714, 0
      %721 = vmatprep.subr.bf16.mxu0 0
      %722 = vmatpush1.bf16.xpose.msra.mxu0 0
      %723 = vmatprep.subr.bf16.mxu0 0
      %724 = vmatpush1.bf16.xpose.msra.mxu0 0
      %725 = vmatprep.subr.bf16.mxu0 0
      %726 = vmatpush1.bf16.xpose.msra.mxu0 0
      %727 = vmatprep.subr.bf16.mxu0 0
      %728 = vmatpush1.bf16.xpose.msra.mxu0 0
      %729 = vmatprep.subr.bf16.mxu0 0
      %730 = vmatpush1.bf16.xpose.msra.mxu0 0
      %731 = vmatprep.subr.bf16.mxu0 0
      %732 = vmatpush1.bf16.xpose.msra.mxu0 0
      %733 = vmatprep.subr.bf16.mxu0 0
      %734 = vmatpush1.bf16.xpose.msra.mxu0 0
      %735 = vmatprep.subr.bf16.mxu0 0
      %736 = vmatpush1.bf16.xpose.msra.mxu0 %v719
      %737 = vmatprep.subr.bf16.mxu0 0
      %738 = vmatpush2.bf16.xpose.msra.mxu0 0
      %739 = vmatprep.subr.bf16.mxu0 0
      %740 = vmatpush2.bf16.xpose.msra.mxu0 0
      %741 = vmatprep.subr.bf16.mxu0 0
      %742 = vmatpush2.bf16.xpose.msra.mxu0 0
      %743 = vmatprep.subr.bf16.mxu0 0
      %744 = vmatpush2.bf16.xpose.msra.mxu0 0
      %745 = vmatprep.subr.bf16.mxu0 0
      %746 = vmatpush2.bf16.xpose.msra.mxu0 0
      %747 = vmatprep.subr.bf16.mxu0 0
      %748 = vmatpush2.bf16.xpose.msra.mxu0 0
      %749 = vmatprep.subr.bf16.mxu0 0
      %750 = vmatpush2.bf16.xpose.msra.mxu0 0
      %751 = vmatprep.subr.bf16.mxu0 0
      %752 = vmatpush2.bf16.xpose.msra.mxu0 0
      %753 = vmatprep.mubr.bf16.mxu0 0
      %754 = vmatmul.mubr.bf16.gmra.mxu0 %v716
      %v755 = vpop.f32.mrf.mxu0
      %v756 = vadd.f32 0.0, %v755
      %v757 = vpop.f32.mrf.mxu0
      %v758 = vpop.f32.mrf.mxu0
      %v759 = vpop.f32.mrf.mxu0
      %760 = vdwg.mxu0
      %v761 = vld [vmem:[#allocation2] sm:$0xff]
      %v762 = vsel %vm344, %v756, -inf
      %763 = vmax.xlane.f32.xlu0 %v762
      %v764 = vpop.xlane.xlu0 %763
      %v765 = vmax.f32 %v761, %v764
      %v766 = vsub.f32 %v761, %v765
      %v767 = vmul.f32 %v766, 1.442695
      %v768 = vpow.pop %v767
      %770 = vset.pattern.permute.xlu0 3
      %771 = vperm.xlu0 %770, %v765
      %v772 = vpop.permute.xlu0 %771
      %v774 = vsub.f32 %v756, %v772
      %v775 = vmul.f32 %v774, 1.442695
      %v776 = vpow.pop %v775
      %v777 = vld [vmem:[#allocation3] sm:$0xff]
      %v778 = vmul.f32 %v768, %v777
      %v779 = vsel %vm344, %v776, 0.0
      %780 = vadd.xlane.f32.xlu0 %v779
      %v781 = vpop.xlane.xlu0 %780
      %v782 = vadd.f32 %v778, %v781
      %vm783 = vcmask 31768
      %784 = vst.msk [vmem:[#allocation3] sm:$0xff] %vm783, %v782
      %v785 = vld [vmem:[#allocation4] sm:$0xff]
      %787 = vset.pattern.permute.xlu0 3
      %788 = vperm.xlu0 %787, %v768
      %v789 = vpop.permute.xlu0 %788
      %v791 = vmul.f32 %v789, %v785
      %v792 = vpack.c.bf16 %v776, %v776
      %793 = vrot.lane.b32.xlu0 %v516, 32
      %v794 = vpop.permute.xlu0 %793
      %v796 = vsel %vm344, %v792, 0
      %v799 = vsel %vm379, %v794, 0
      %801 = vmatprep.subr.bf16.mxu0 0
      %802 = vmatpush1.bf16.msra.mxu0 0
      %803 = vmatprep.subr.bf16.mxu0 0
      %804 = vmatpush1.bf16.msra.mxu0 0
      %805 = vmatprep.subr.bf16.mxu0 0
      %806 = vmatpush1.bf16.msra.mxu0 0
      %807 = vmatprep.subr.bf16.mxu0 0
      %808 = vmatpush1.bf16.msra.mxu0 0
      %809 = vmatprep.subr.bf16.mxu0 0
      %810 = vmatpush1.bf16.msra.mxu0 0
      %811 = vmatprep.subr.bf16.mxu0 0
      %812 = vmatpush1.bf16.msra.mxu0 0
      %813 = vmatprep.subr.bf16.mxu0 0
      %814 = vmatpush1.bf16.msra.mxu0 0
      %815 = vmatprep.subr.bf16.mxu0 0
      %816 = vmatpush1.bf16.msra.mxu0 %v799
      %817 = vmatprep.subr.bf16.mxu0 0
      %818 = vmatpush2.bf16.msra.mxu0 0
      %819 = vmatprep.subr.bf16.mxu0 0
      %820 = vmatpush2.bf16.msra.mxu0 0
      %821 = vmatprep.subr.bf16.mxu0 0
      %822 = vmatpush2.bf16.msra.mxu0 0
      %823 = vmatprep.subr.bf16.mxu0 0
      %824 = vmatpush2.bf16.msra.mxu0 0
      %825 = vmatprep.subr.bf16.mxu0 0
      %826 = vmatpush2.bf16.msra.mxu0 0
      %827 = vmatprep.subr.bf16.mxu0 0
      %828 = vmatpush2.bf16.msra.mxu0 0
      %829 = vmatprep.subr.bf16.mxu0 0
      %830 = vmatpush2.bf16.msra.mxu0 0
      %831 = vmatprep.subr.bf16.mxu0 0
      %832 = vmatpush2.bf16.msra.mxu0 0
      %833 = vmatprep.mubr.bf16.mxu0 0
      %834 = vmatmul.mubr.bf16.gmra.mxu0 %v796
      %v835 = vpop.f32.mrf.mxu0
      %v836 = vadd.f32 0.0, %v835
      %v837 = vpop.f32.mrf.mxu0
      %v838 = vpop.f32.mrf.mxu0
      %v839 = vpop.f32.mrf.mxu0
      %840 = vdwg.mxu0
      %842 = vrot.lane.b32.xlu0 %v836, 96
      %v843 = vpop.permute.xlu0 %842
      %v845 = vadd.f32 %v791, %v843
      %vm846 = vcmask 1048320
      %847 = vst.msk [vmem:[#allocation4] sm:$0xff] %vm846, %v845
      %848 = vst.msk [vmem:[#allocation2] sm:$0xff] %vm783, %v765
      // Predicated region
      $region37: #{decoder_layer_forward.9} parent=31 // pred_check
        %p849 = pneg %p285
      $region38: #{decoder_layer_forward.9} parent=31 // pred_check_branch
        %851 = sbr.rel (%p849) target = $region40
      $region39: #{decoder_layer_forward.9} parent=31 // pred_region
        %v852 = vld [vmem:[#allocation3] sm:$0xff]
        %v853 = vrcp.pop %v852
        %v854 = vld [vmem:[#allocation4] sm:$0xff]
        %856 = vset.pattern.permute.xlu0 0
        %857 = vperm.xlu0 %856, %v853
        %v858 = vpop.permute.xlu0 %857
        %v860 = vmul.f32 %v854, %v858
        %861 = vset.pattern.permute.xlu0 1
        %862 = vperm.xlu0 %861, %v853
        %v863 = vpop.permute.xlu0 %862
        %v865 = vmul.f32 %v854, %v863
        %866 = vset.pattern.permute.xlu0 2
        %867 = vperm.xlu0 %866, %v853
        %v868 = vpop.permute.xlu0 %867
        %v870 = vmul.f32 %v854, %v868
        %871 = vset.pattern.permute.xlu0 3
        %872 = vperm.xlu0 %871, %v853
        %v873 = vpop.permute.xlu0 %872
        %v875 = vmul.f32 %v854, %v873
        %v876 = vsel %vm296, %v860, %v865
        %vm877 = vcmask 523264
        %v878 = vsel %vm877, %v876, %v870
        %vm879 = vcmask 785408
        %v880 = vsel %vm879, %v878, %v875
        %v881 = vpack.c.bf16 %v880, %v880
        %882 = vst [vmem:[%s283] sm:$0xf] %v881
      $region40: #{decoder_layer_forward.9} parent=31 // pred_fallthru
        _
      %p883 = scmp.lt.s32.totalorder %s19, 1
      %s884 = scalar_select %p883, %s19, 1
      %p885 = scmp.lt.s32.totalorder %s20, 0
      %s886 = scalar_select %p885, %s20, 0
      %s887 = sadd.s32 %s886, %s884
      %s888 = smul.addr %s887, 4
      %s889 = scalar_lea.vmem %s3, %s888
      // Predicated region
      $region41: #{decoder_layer_forward.9} parent=31 // pred_check
        %p890 = pneg %p137
      $region42: #{decoder_layer_forward.9} parent=31 // pred_check_branch
        %892 = sbr.rel (%p890) target = $region44
      $region43: #{decoder_layer_forward.9} parent=31 // pred_region
        _
      $region44: #{decoder_layer_forward.9} parent=31 // pred_fallthru
        _
    $region32: #{decoder_layer_forward.9} parent=5 // pred_fallthru
      _
    %p893 = scmp.le.s32.totalorder 2, %s9
    // Predicated region
    $region45: #{decoder_layer_forward.9} parent=5 // pred_check
      %p894 = pneg %p893
    $region46: #{decoder_layer_forward.9} parent=5 // pred_check_branch
      %896 = sbr.rel (%p894) target = $region48
    $region47: #{decoder_layer_forward.9} parent=5 // pred_region
      %s897 = ssub.s32 %s9, 2
      // Predicated region
      $region49: #{decoder_layer_forward.9} parent=47 // pred_check
        %p898 = pneg %p143
      $region50: #{decoder_layer_forward.9} parent=47 // pred_check_branch
        %900 = sbr.rel (%p898) target = $region52
      $region51: #{decoder_layer_forward.9} parent=47 // pred_region
        %p901 = scmp.lt.s32.totalorder %s22, 1
        %s902 = scalar_select %p901, %s22, 1
        %p903 = scmp.lt.s32.totalorder %s23, 0
        %s904 = scalar_select %p903, %s23, 0
        %s905 = sadd.s32 %s904, %s902
        %s906 = smul.addr %s905, 4
        %s907 = scalar_lea.vmem %s3, %s906
      $region52: #{decoder_layer_forward.9} parent=47 // pred_fallthru
        _
    $region48: #{decoder_layer_forward.9} parent=5 // pred_fallthru
      _
  $region6: #{decoder_layer_forward.9} parent=0 // loop_footer
    %s13 = sadd.s32 1, %s9
  $region7: #{decoder_layer_forward.9} parent=0 // loop_footer_branch
    %8 = sbr.rel target = $region3
  $region8: #{decoder_layer_forward.9} parent=0 // loop_exit
    _

// kernel: decoder_layer_forward.12
$region0: #{decoder_layer_forward.12}
  #allocation0 [shape = 'u32[]', space=smem, size = 0x4, offset = 0x4, fixed_abs, tag = 'smem constant byte address 0x4 - core index']
  #allocation1 [shape = 'u32[144,128]{1,0:T(1,128)}', space=vmem, size = 0x12000, scoped, tag = 'internal scratch']
  #allocation2 [shape = 'f32[32,256]{1,0:T(8,128)}', space=vmem, size = 0x8000, scoped, tag = 'scratch operand']
  %s0 = inlined_call_operand.vmem [shape: bf16[32,128], index: 0, kind: input, shape index: {}]
  %s1 = inlined_call_operand.vmem [shape: bf16[128,256], index: 1, kind: input, shape index: {}]
  %s2 = inlined_call_operand.vmem [shape: f32[1,256], index: 2, kind: input, shape index: {}]
  %s3 = inlined_call_operand.vmem [shape: bf16[32,256], index: 3, kind: output, shape index: {}]
  %s4 = sld [smem:[#allocation0]]
  $region30: #{decoder_layer_forward.12} parent=0
    _
  %s6 = ssub.s32 1, %s4
  %s7 = scalar_select 0, %s6, %s4
  // Predicated region
  $region2: #{decoder_layer_forward.12} parent=0 // pred_check
    _
  $region3: #{decoder_layer_forward.12} parent=0 // pred_check_branch
    %9 = sbr.rel (0) target = $region5
  $region4: #{decoder_layer_forward.12} parent=0 // pred_region
    _
  $region5: #{decoder_layer_forward.12} parent=0 // pred_fallthru
    _
  // Predicated region
  $region6: #{decoder_layer_forward.12} parent=0 // pred_check
    _
  $region7: #{decoder_layer_forward.12} parent=0 // pred_check_branch
    %11 = sbr.rel (0) target = $region9
  $region8: #{decoder_layer_forward.12} parent=0 // pred_region
    _
  $region9: #{decoder_layer_forward.12} parent=0 // pred_fallthru
    _
  // Predicated region
  $region10: #{decoder_layer_forward.12} parent=0 // pred_check
    _
  $region11: #{decoder_layer_forward.12} parent=0 // pred_check_branch
    %13 = sbr.rel (0) target = $region13
  $region12: #{decoder_layer_forward.12} parent=0 // pred_region
    _
  $region13: #{decoder_layer_forward.12} parent=0 // pred_fallthru
    _
  %p15 = scmp.eq.s32.totalorder 0, 0
  // Predicated region
  $region14: #{decoder_layer_forward.12} parent=0 // pred_check
    %p16 = pneg %p15
  $region15: #{decoder_layer_forward.12} parent=0 // pred_check_branch
    %18 = sbr.rel (%p16) target = $region17
  $region16: #{decoder_layer_forward.12} parent=0 // pred_region
    %19 = vst [vmem:[#allocation2] sm:$0xff] 0.0
    %20 = vst [vmem:[#allocation2 + $0x8] sm:$0xff] 0.0
    %21 = vst [vmem:[#allocation2 + $0x10] sm:$0xff] 0.0
    %22 = vst [vmem:[#allocation2 + $0x18] sm:$0xff] 0.0
    %23 = vst [vmem:[#allocation2 + $0x20] sm:$0xff] 0.0
    %24 = vst [vmem:[#allocation2 + $0x28] sm:$0xff] 0.0
    %25 = vst [vmem:[#allocation2 + $0x30] sm:$0xff] 0.0
    %26 = vst [vmem:[#allocation2 + $0x38] sm:$0xff] 0.0
  $region17: #{decoder_layer_forward.12} parent=0 // pred_fallthru
    _
  %v27 = vld [vmem:[#allocation2] sm:$0xff]
  %v28 = vld [vmem:[#allocation2 + $0x8] sm:$0xff]
  %v29 = vld [vmem:[#allocation2 + $0x10] sm:$0xff]
  %v30 = vld [vmem:[#allocation2 + $0x18] sm:$0xff]
  %v31 = vld [vmem:[#allocation2 + $0x20] sm:$0xff]
  %v32 = vld [vmem:[#allocation2 + $0x28] sm:$0xff]
  %v33 = vld [vmem:[#allocation2 + $0x30] sm:$0xff]
  %v34 = vld [vmem:[#allocation2 + $0x38] sm:$0xff]
  %v35 = vld [vmem:[%s0] sm:$0xf]
  %v36 = vld [vmem:[%s0 + $0x4] sm:$0xf]
  %v37 = vld [vmem:[%s0 + $0x8] sm:$0xf]
  %v38 = vld [vmem:[%s0 + $0xc] sm:$0xf]
  %v39 = vld [vmem:[%s1] sm:$0xff]
  %v40 = vld [vmem:[%s1 + $0x8] sm:$0xff]
  %v41 = vld [vmem:[%s1 + $0x10] sm:$0xff]
  %v42 = vld [vmem:[%s1 + $0x18] sm:$0xff]
  %v43 = vld [vmem:[%s1 + $0x20] sm:$0xff]
  %v44 = vld [vmem:[%s1 + $0x28] sm:$0xff]
  %v45 = vld [vmem:[%s1 + $0x30] sm:$0xff]
  %v46 = vld [vmem:[%s1 + $0x38] sm:$0xff]
  %v47 = vld [vmem:[%s1 + $0x40] sm:$0xff]
  %v48 = vld [vmem:[%s1 + $0x48] sm:$0xff]
  %v49 = vld [vmem:[%s1 + $0x50] sm:$0xff]
  %v50 = vld [vmem:[%s1 + $0x58] sm:$0xff]
  %v51 = vld [vmem:[%s1 + $0x60] sm:$0xff]
  %v52 = vld [vmem:[%s1 + $0x68] sm:$0xff]
  %v53 = vld [vmem:[%s1 + $0x70] sm:$0xff]
  %v54 = vld [vmem:[%s1 + $0x78] sm:$0xff]
  %v59 = vunpack.c.l.b16 %v35
  %v60 = vunpack.c.l.b16 %v36
  %v61 = vunpack.c.l.b16 %v37
  %v62 = vunpack.c.l.b16 %v38
  %v63 = vpack.c.b16 %v60, %v59
  %v64 = vpack.c.b16 %v62, %v61
  %v83 = vunpack.c.l.b16 %v39
  %v84 = vunpack.c.h.b16 %v39
  %v85 = vunpack.c.l.b16 %v40
  %v86 = vunpack.c.h.b16 %v40
  %v87 = vunpack.c.l.b16 %v41
  %v88 = vunpack.c.h.b16 %v41
  %v89 = vunpack.c.l.b16 %v42
  %v90 = vunpack.c.h.b16 %v42
  %v91 = vunpack.c.l.b16 %v43
  %v92 = vunpack.c.h.b16 %v43
  %v93 = vunpack.c.l.b16 %v44
  %v94 = vunpack.c.h.b16 %v44
  %v95 = vunpack.c.l.b16 %v45
  %v96 = vunpack.c.h.b16 %v45
  %v97 = vunpack.c.l.b16 %v46
  %v98 = vunpack.c.h.b16 %v46
  %v99 = vunpack.c.l.b16 %v47
  %v100 = vunpack.c.h.b16 %v47
  %v101 = vunpack.c.l.b16 %v48
  %v102 = vunpack.c.h.b16 %v48
  %v103 = vunpack.c.l.b16 %v49
  %v104 = vunpack.c.h.b16 %v49
  %v105 = vunpack.c.l.b16 %v50
  %v106 = vunpack.c.h.b16 %v50
  %v107 = vunpack.c.l.b16 %v51
  %v108 = vunpack.c.h.b16 %v51
  %v109 = vunpack.c.l.b16 %v52
  %v110 = vunpack.c.h.b16 %v52
  %v111 = vunpack.c.l.b16 %v53
  %v112 = vunpack.c.h.b16 %v53
  %v113 = vunpack.c.l.b16 %v54
  %v114 = vunpack.c.h.b16 %v54
  %v115 = vpack.c.b16 %v85, %v83
  %v116 = vpack.c.b16 %v86, %v84
  %v117 = vpack.c.b16 %v89, %v87
  %v118 = vpack.c.b16 %v90, %v88
  %v119 = vpack.c.b16 %v93, %v91
  %v120 = vpack.c.b16 %v94, %v92
  %v121 = vpack.c.b16 %v97, %v95
  %v122 = vpack.c.b16 %v98, %v96
  %v123 = vpack.c.b16 %v101, %v99
  %v124 = vpack.c.b16 %v102, %v100
  %v125 = vpack.c.b16 %v105, %v103
  %v126 = vpack.c.b16 %v106, %v104
  %v127 = vpack.c.b16 %v109, %v107
  %v128 = vpack.c.b16 %v110, %v108
  %v129 = vpack.c.b16 %v113, %v111
  %v130 = vpack.c.b16 %v114, %v112
  %147 = vmatprep.subr.bf16.mxu0 %v130
  %148 = vmatpush1.bf16.msra.mxu0 %v129
  %149 = vmatprep.subr.bf16.mxu0 %v128
  %150 = vmatpush1.bf16.msra.mxu0 %v127
  %151 = vmatprep.subr.bf16.mxu0 %v126
  %152 = vmatpush1.bf16.msra.mxu0 %v125
  %153 = vmatprep.subr.bf16.mxu0 %v124
  %154 = vmatpush1.bf16.msra.mxu0 %v123
  %155 = vmatprep.subr.bf16.mxu0 %v122
  %156 = vmatpush1.bf16.msra.mxu0 %v121
  %157 = vmatprep.subr.bf16.mxu0 %v120
  %158 = vmatpush1.bf16.msra.mxu0 %v119
  %159 = vmatprep.subr.bf16.mxu0 %v118
  %160 = vmatpush1.bf16.msra.mxu0 %v117
  %161 = vmatprep.subr.bf16.mxu0 %v116
  %162 = vmatpush1.bf16.msra.mxu0 %v115
  %163 = vmatprep.subr.bf16.mxu0 0
  %164 = vmatpush2.bf16.msra.mxu0 0
  %165 = vmatprep.subr.bf16.mxu0 0
  %166 = vmatpush2.bf16.msra.mxu0 0
  %167 = vmatprep.subr.bf16.mxu0 0
  %168 = vmatpush2.bf16.msra.mxu0 0
  %169 = vmatprep.subr.bf16.mxu0 0
  %170 = vmatpush2.bf16.msra.mxu0 0
  %171 = vmatprep.subr.bf16.mxu0 0
  %172 = vmatpush2.bf16.msra.mxu0 0
  %173 = vmatprep.subr.bf16.mxu0 0
  %174 = vmatpush2.bf16.msra.mxu0 0
  %175 = vmatprep.subr.bf16.mxu0 0
  %176 = vmatpush2.bf16.msra.mxu0 0
  %177 = vmatprep.subr.bf16.mxu0 0
  %178 = vmatpush2.bf16.msra.mxu0 0
  %179 = vmatprep.mubr.bf16.mxu0 0
  %180 = vmatmul.mubr.bf16.gmra.mxu0 %v63
  %v181 = vpop.f32.mrf.mxu0
  %v182 = vadd.f32 0.0, %v181
  %v183 = vpop.f32.mrf.mxu0
  %v184 = vadd.f32 0.0, %v183
  %v185 = vpop.f32.mrf.mxu0
  %v186 = vadd.f32 0.0, %v185
  %v187 = vpop.f32.mrf.mxu0
  %v188 = vadd.f32 0.0, %v187
  %189 = vmatprep.mubr.bf16.mxu0 0
  %190 = vmatmul.mubr.bf16.gmra.mxu0 %v64
  %v191 = vpop.f32.mrf.mxu0
  %v192 = vadd.f32 0.0, %v191
  %v193 = vpop.f32.mrf.mxu0
  %v194 = vadd.f32 0.0, %v193
  %v195 = vpop.f32.mrf.mxu0
  %v196 = vadd.f32 0.0, %v195
  %v197 = vpop.f32.mrf.mxu0
  %v198 = vadd.f32 0.0, %v197
  %199 = vdwg.mxu0
  %v200 = vadd.f32 %v27, %v182
  %v201 = vadd.f32 %v28, %v184
  %v202 = vadd.f32 %v29, %v186
  %v203 = vadd.f32 %v30, %v188
  %v204 = vadd.f32 %v31, %v192
  %v205 = vadd.f32 %v32, %v194
  %v206 = vadd.f32 %v33, %v196
  %v207 = vadd.f32 %v34, %v198
  %208 = vst [vmem:[#allocation2] sm:$0xff] %v200
  %209 = vst [vmem:[#allocation2 + $0x8] sm:$0xff] %v201
  %210 = vst [vmem:[#allocation2 + $0x10] sm:$0xff] %v202
  %211 = vst [vmem:[#allocation2 + $0x18] sm:$0xff] %v203
  %212 = vst [vmem:[#allocation2 + $0x20] sm:$0xff] %v204
  %213 = vst [vmem:[#allocation2 + $0x28] sm:$0xff] %v205
  %214 = vst [vmem:[#allocation2 + $0x30] sm:$0xff] %v206
  %215 = vst [vmem:[#allocation2 + $0x38] sm:$0xff] %v207
  // Predicated region
  $region18: #{decoder_layer_forward.12} parent=0 // pred_check
    %p216 = pneg %p15
  $region19: #{decoder_layer_forward.12} parent=0 // pred_check_branch
    %218 = sbr.rel (%p216) target = $region21
  $region20: #{decoder_layer_forward.12} parent=0 // pred_region
    %v219 = vld [vmem:[#allocation2] sm:$0xff]
    %v220 = vld [vmem:[#allocation2 + $0x8] sm:$0xff]
    %v221 = vld [vmem:[#allocation2 + $0x10] sm:$0xff]
    %v222 = vld [vmem:[#allocation2 + $0x18] sm:$0xff]
    %v223 = vld [vmem:[#allocation2 + $0x20] sm:$0xff]
    %v224 = vld [vmem:[#allocation2 + $0x28] sm:$0xff]
    %v225 = vld [vmem:[#allocation2 + $0x30] sm:$0xff]
    %v226 = vld [vmem:[#allocation2 + $0x38] sm:$0xff]
    %v227 = vld [vmem:[%s2] sm:$0x3]
    %v229 = vlaneseq
    %v230 = vshrl.u32 %v229, 7
    %v231 = vsub.s32 0, %v230
    %v232 = vrot.slane %v227, %v231
    %v233 = vlaneseq
    %v234 = vshrl.u32 %v233, 7
    %v235 = vsub.s32 1, %v234
    %v236 = vrot.slane %v227, %v235
    %v239 = vadd.f32 %v219, %v232
    %v240 = vadd.f32 %v220, %v236
    %v241 = vadd.f32 %v221, %v232
    %v242 = vadd.f32 %v222, %v236
    %v243 = vadd.f32 %v223, %v232
    %v244 = vadd.f32 %v224, %v236
    %v245 = vadd.f32 %v225, %v232
    %v246 = vadd.f32 %v226, %v236
    %v247 = vpack.c.bf16 %v241, %v239
    %v248 = vpack.c.bf16 %v242, %v240
    %v249 = vpack.c.bf16 %v245, %v243
    %v250 = vpack.c.bf16 %v246, %v244
    %v255 = vunpack.c.l.b16 %v247
    %v256 = vunpack.c.l.b16 %v248
    %v257 = vunpack.c.h.b16 %v247
    %v258 = vunpack.c.h.b16 %v248
    %v259 = vunpack.c.l.b16 %v249
    %v260 = vunpack.c.l.b16 %v250
    %v261 = vunpack.c.h.b16 %v249
    %v262 = vunpack.c.h.b16 %v250
    %v263 = vpack.c.b16 %v256, %v255
    %v264 = vpack.c.b16 %v258, %v257
    %v265 = vpack.c.b16 %v260, %v259
    %v266 = vpack.c.b16 %v262, %v261
    %271 = vst [vmem:[%s3] sm:$0xff] %v263
    %272 = vst [vmem:[%s3 + $0x8] sm:$0xff] %v264
    %273 = vst [vmem:[%s3 + $0x10] sm:$0xff] %v265
    %274 = vst [vmem:[%s3 + $0x18] sm:$0xff] %v266
  $region21: #{decoder_layer_forward.12} parent=0 // pred_fallthru
    _
  // Predicated region
  $region22: #{decoder_layer_forward.12} parent=0 // pred_check
    _
  $region23: #{decoder_layer_forward.12} parent=0 // pred_check_branch
    %276 = sbr.rel (0) target = $region25
  $region24: #{decoder_layer_forward.12} parent=0 // pred_region
    _
  $region25: #{decoder_layer_forward.12} parent=0 // pred_fallthru
    _
  // Predicated region
  $region26: #{decoder_layer_forward.12} parent=0 // pred_check
    _
  $region27: #{decoder_layer_forward.12} parent=0 // pred_check_branch
    %278 = sbr.rel (0) target = $region29
  $region28: #{decoder_layer_forward.12} parent=0 // pred_region
    _
  $region29: #{decoder_layer_forward.12} parent=0 // pred_fallthru
    _

// kernel: decoder_layer_forward.15
$region0: #{decoder_layer_forward.15}
  #allocation0 [shape = 'u32[]', space=smem, size = 0x4, offset = 0x4, fixed_abs, tag = 'smem constant byte address 0x4 - core index']
  #allocation1 [shape = 'u32[144,128]{1,0:T(1,128)}', space=vmem, size = 0x12000, scoped, tag = 'internal scratch']
  #allocation2 [shape = 'f32[16,128]{1,0:T(8,128)}', space=vmem, size = 0x2000, scoped, tag = 'scratch operand']
  %s0 = inlined_call_operand.vmem [shape: bf16[16,128], index: 0, kind: input, shape index: {}]
  %s1 = inlined_call_operand.vmem [shape: bf16[128,256], index: 1, kind: input, shape index: {}]
  %s2 = inlined_call_operand.vmem [shape: f32[1,256], index: 2, kind: input, shape index: {}]
  %s3 = inlined_call_operand.vmem [shape: bf16[256,128], index: 3, kind: input, shape index: {}]
  %s4 = inlined_call_operand.vmem [shape: f32[1,128], index: 4, kind: input, shape index: {}]
  %s5 = inlined_call_operand.vmem [shape: f32[1,128], index: 5, kind: input, shape index: {}]
  %s6 = inlined_call_operand.vmem [shape: f32[1,128], index: 6, kind: input, shape index: {}]
  %s7 = inlined_call_operand.vmem [shape: bf16[16,128], index: 7, kind: output, shape index: {}]
  %s8 = sld [smem:[#allocation0]]
  $region46: #{decoder_layer_forward.15} parent=0
    _
  %s10 = ssub.s32 1, %s8
  %s11 = scalar_select 0, %s10, %s8
  // Predicated region
  $region2: #{decoder_layer_forward.15} parent=0 // pred_check
    _
  $region3: #{decoder_layer_forward.15} parent=0 // pred_check_branch
    %13 = sbr.rel (0) target = $region5
  $region4: #{decoder_layer_forward.15} parent=0 // pred_region
    _
  $region5: #{decoder_layer_forward.15} parent=0 // pred_fallthru
    _
  // Predicated region
  $region6: #{decoder_layer_forward.15} parent=0 // pred_check
    _
  $region7: #{decoder_layer_forward.15} parent=0 // pred_check_branch
    %15 = sbr.rel (0) target = $region9
  $region8: #{decoder_layer_forward.15} parent=0 // pred_region
    _
  $region9: #{decoder_layer_forward.15} parent=0 // pred_fallthru
    _
  // Predicated region
  $region10: #{decoder_layer_forward.15} parent=0 // pred_check
    _
  $region11: #{decoder_layer_forward.15} parent=0 // pred_check_branch
    %17 = sbr.rel (0) target = $region13
  $region12: #{decoder_layer_forward.15} parent=0 // pred_region
    _
  $region13: #{decoder_layer_forward.15} parent=0 // pred_fallthru
    _
  // Predicated region
  $region14: #{decoder_layer_forward.15} parent=0 // pred_check
    _
  $region15: #{decoder_layer_forward.15} parent=0 // pred_check_branch
    %19 = sbr.rel (0) target = $region17
  $region16: #{decoder_layer_forward.15} parent=0 // pred_region
    _
  $region17: #{decoder_layer_forward.15} parent=0 // pred_fallthru
    _
  // Predicated region
  $region18: #{decoder_layer_forward.15} parent=0 // pred_check
    _
  $region19: #{decoder_layer_forward.15} parent=0 // pred_check_branch
    %21 = sbr.rel (0) target = $region21
  $region20: #{decoder_layer_forward.15} parent=0 // pred_region
    _
  $region21: #{decoder_layer_forward.15} parent=0 // pred_fallthru
    _
  // Predicated region
  $region22: #{decoder_layer_forward.15} parent=0 // pred_check
    _
  $region23: #{decoder_layer_forward.15} parent=0 // pred_check_branch
    %23 = sbr.rel (0) target = $region25
  $region24: #{decoder_layer_forward.15} parent=0 // pred_region
    _
  $region25: #{decoder_layer_forward.15} parent=0 // pred_fallthru
    _
  // Predicated region
  $region26: #{decoder_layer_forward.15} parent=0 // pred_check
    _
  $region27: #{decoder_layer_forward.15} parent=0 // pred_check_branch
    %25 = sbr.rel (0) target = $region29
  $region28: #{decoder_layer_forward.15} parent=0 // pred_region
    _
  $region29: #{decoder_layer_forward.15} parent=0 // pred_fallthru
    _
  %p27 = scmp.eq.s32.totalorder 0, 0
  // Predicated region
  $region30: #{decoder_layer_forward.15} parent=0 // pred_check
    %p28 = pneg %p27
  $region31: #{decoder_layer_forward.15} parent=0 // pred_check_branch
    %30 = sbr.rel (%p28) target = $region33
  $region32: #{decoder_layer_forward.15} parent=0 // pred_region
    %31 = vst [vmem:[#allocation2] sm:$0xff] 0.0
    %32 = vst [vmem:[#allocation2 + $0x8] sm:$0xff] 0.0
  $region33: #{decoder_layer_forward.15} parent=0 // pred_fallthru
    _
  %v33 = vld [vmem:[%s0] sm:$0xf]
  %v34 = vld [vmem:[%s0 + $0x4] sm:$0xf]
  %v35 = vld [vmem:[%s1] sm:$0xff]
  %v36 = vld [vmem:[%s1 + $0x8] sm:$0xff]
  %v37 = vld [vmem:[%s1 + $0x10] sm:$0xff]
  %v38 = vld [vmem:[%s1 + $0x18] sm:$0xff]
  %v39 = vld [vmem:[%s1 + $0x20] sm:$0xff]
  %v40 = vld [vmem:[%s1 + $0x28] sm:$0xff]
  %v41 = vld [vmem:[%s1 + $0x30] sm:$0xff]
  %v42 = vld [vmem:[%s1 + $0x38] sm:$0xff]
  %v43 = vld [vmem:[%s1 + $0x40] sm:$0xff]
  %v44 = vld [vmem:[%s1 + $0x48] sm:$0xff]
  %v45 = vld [vmem:[%s1 + $0x50] sm:$0xff]
  %v46 = vld [vmem:[%s1 + $0x58] sm:$0xff]
  %v47 = vld [vmem:[%s1 + $0x60] sm:$0xff]
  %v48 = vld [vmem:[%s1 + $0x68] sm:$0xff]
  %v49 = vld [vmem:[%s1 + $0x70] sm:$0xff]
  %v50 = vld [vmem:[%s1 + $0x78] sm:$0xff]
  %v51 = vld [vmem:[%s2] sm:$0x3]
  %v53 = vlaneseq
  %v54 = vshrl.u32 %v53, 7
  %v55 = vsub.s32 0, %v54
  %v56 = vrot.slane %v51, %v55
  %v57 = vlaneseq
  %v58 = vshrl.u32 %v57, 7
  %v59 = vsub.s32 1, %v58
  %v60 = vrot.slane %v51, %v59
  %v65 = vunpack.c.l.b16 %v33
  %v66 = vunpack.c.l.b16 %v34
  %v67 = vpack.c.b16 %v66, %v65
  %v85 = vunpack.c.l.b16 %v35
  %v86 = vunpack.c.h.b16 %v35
  %v87 = vunpack.c.l.b16 %v36
  %v88 = vunpack.c.h.b16 %v36
  %v89 = vunpack.c.l.b16 %v37
  %v90 = vunpack.c.h.b16 %v37
  %v91 = vunpack.c.l.b16 %v38
  %v92 = vunpack.c.h.b16 %v38
  %v93 = vunpack.c.l.b16 %v39
  %v94 = vunpack.c.h.b16 %v39
  %v95 = vunpack.c.l.b16 %v40
  %v96 = vunpack.c.h.b16 %v40
  %v97 = vunpack.c.l.b16 %v41
  %v98 = vunpack.c.h.b16 %v41
  %v99 = vunpack.c.l.b16 %v42
  %v100 = vunpack.c.h.b16 %v42
  %v101 = vunpack.c.l.b16 %v43
  %v102 = vunpack.c.h.b16 %v43
  %v103 = vunpack.c.l.b16 %v44
  %v104 = vunpack.c.h.b16 %v44
  %v105 = vunpack.c.l.b16 %v45
  %v106 = vunpack.c.h.b16 %v45
  %v107 = vunpack.c.l.b16 %v46
  %v108 = vunpack.c.h.b16 %v46
  %v109 = vunpack.c.l.b16 %v47
  %v110 = vunpack.c.h.b16 %v47
  %v111 = vunpack.c.l.b16 %v48
  %v112 = vunpack.c.h.b16 %v48
  %v113 = vunpack.c.l.b16 %v49
  %v114 = vunpack.c.h.b16 %v49
  %v115 = vunpack.c.l.b16 %v50
  %v116 = vunpack.c.h.b16 %v50
  %v117 = vpack.c.b16 %v87, %v85
  %v118 = vpack.c.b16 %v88, %v86
  %v119 = vpack.c.b16 %v91, %v89
  %v120 = vpack.c.b16 %v92, %v90
  %v121 = vpack.c.b16 %v95, %v93
  %v122 = vpack.c.b16 %v96, %v94
  %v123 = vpack.c.b16 %v99, %v97
  %v124 = vpack.c.b16 %v100, %v98
  %v125 = vpack.c.b16 %v103, %v101
  %v126 = vpack.c.b16 %v104, %v102
  %v127 = vpack.c.b16 %v107, %v105
  %v128 = vpack.c.b16 %v108, %v106
  %v129 = vpack.c.b16 %v111, %v109
  %v130 = vpack.c.b16 %v112, %v110
  %v131 = vpack.c.b16 %v115, %v113
  %v132 = vpack.c.b16 %v116, %v114
  %149 = vmatprep.subr.bf16.mxu0 %v132
  %150 = vmatpush1.bf16.msra.mxu0 %v131
  %151 = vmatprep.subr.bf16.mxu0 %v130
  %152 = vmatpush1.bf16.msra.mxu0 %v129
  %153 = vmatprep.subr.bf16.mxu0 %v128
  %154 = vmatpush1.bf16.msra.mxu0 %v127
  %155 = vmatprep.subr.bf16.mxu0 %v126
  %156 = vmatpush1.bf16.msra.mxu0 %v125
  %157 = vmatprep.subr.bf16.mxu0 %v124
  %158 = vmatpush1.bf16.msra.mxu0 %v123
  %159 = vmatprep.subr.bf16.mxu0 %v122
  %160 = vmatpush1.bf16.msra.mxu0 %v121
  %161 = vmatprep.subr.bf16.mxu0 %v120
  %162 = vmatpush1.bf16.msra.mxu0 %v119
  %163 = vmatprep.subr.bf16.mxu0 %v118
  %164 = vmatpush1.bf16.msra.mxu0 %v117
  %165 = vmatprep.subr.bf16.mxu0 0
  %166 = vmatpush2.bf16.msra.mxu0 0
  %167 = vmatprep.subr.bf16.mxu0 0
  %168 = vmatpush2.bf16.msra.mxu0 0
  %169 = vmatprep.subr.bf16.mxu0 0
  %170 = vmatpush2.bf16.msra.mxu0 0
  %171 = vmatprep.subr.bf16.mxu0 0
  %172 = vmatpush2.bf16.msra.mxu0 0
  %173 = vmatprep.subr.bf16.mxu0 0
  %174 = vmatpush2.bf16.msra.mxu0 0
  %175 = vmatprep.subr.bf16.mxu0 0
  %176 = vmatpush2.bf16.msra.mxu0 0
  %177 = vmatprep.subr.bf16.mxu0 0
  %178 = vmatpush2.bf16.msra.mxu0 0
  %179 = vmatprep.subr.bf16.mxu0 0
  %180 = vmatpush2.bf16.msra.mxu0 0
  %181 = vmatprep.mubr.bf16.mxu0 0
  %182 = vmatmul.mubr.bf16.gmra.mxu0 %v67
  %v183 = vpop.f32.mrf.mxu0
  %v184 = vadd.f32 %v56, %v183
  %v185 = vpop.f32.mrf.mxu0
  %v186 = vadd.f32 %v60, %v185
  %v187 = vpop.f32.mrf.mxu0
  %v188 = vadd.f32 %v56, %v187
  %v189 = vpop.f32.mrf.mxu0
  %v190 = vadd.f32 %v60, %v189
  %191 = vdwg.mxu0
  %v192 = vmax.f32 %v184, 0.0
  %v193 = vmax.f32 %v186, 0.0
  %v194 = vmax.f32 %v188, 0.0
  %v195 = vmax.f32 %v190, 0.0
  %v196 = vld [vmem:[#allocation2] sm:$0xff]
  %v197 = vld [vmem:[#allocation2 + $0x8] sm:$0xff]
  %v198 = vpack.c.bf16 %v194, %v192
  %v199 = vpack.c.bf16 %v195, %v193
  %v200 = vld [vmem:[%s3] sm:$0xf]
  %v201 = vld [vmem:[%s3 + $0x4] sm:$0xf]
  %v202 = vld [vmem:[%s3 + $0x8] sm:$0xf]
  %v203 = vld [vmem:[%s3 + $0xc] sm:$0xf]
  %v204 = vld [vmem:[%s3 + $0x10] sm:$0xf]
  %v205 = vld [vmem:[%s3 + $0x14] sm:$0xf]
  %v206 = vld [vmem:[%s3 + $0x18] sm:$0xf]
  %v207 = vld [vmem:[%s3 + $0x1c] sm:$0xf]
  %v208 = vld [vmem:[%s3 + $0x20] sm:$0xf]
  %v209 = vld [vmem:[%s3 + $0x24] sm:$0xf]
  %v210 = vld [vmem:[%s3 + $0x28] sm:$0xf]
  %v211 = vld [vmem:[%s3 + $0x2c] sm:$0xf]
  %v212 = vld [vmem:[%s3 + $0x30] sm:$0xf]
  %v213 = vld [vmem:[%s3 + $0x34] sm:$0xf]
  %v214 = vld [vmem:[%s3 + $0x38] sm:$0xf]
  %v215 = vld [vmem:[%s3 + $0x3c] sm:$0xf]
  %v216 = vld [vmem:[%s3 + $0x40] sm:$0xf]
  %v217 = vld [vmem:[%s3 + $0x44] sm:$0xf]
  %v218 = vld [vmem:[%s3 + $0x48] sm:$0xf]
  %v219 = vld [vmem:[%s3 + $0x4c] sm:$0xf]
  %v220 = vld [vmem:[%s3 + $0x50] sm:$0xf]
  %v221 = vld [vmem:[%s3 + $0x54] sm:$0xf]
  %v222 = vld [vmem:[%s3 + $0x58] sm:$0xf]
  %v223 = vld [vmem:[%s3 + $0x5c] sm:$0xf]
  %v224 = vld [vmem:[%s3 + $0x60] sm:$0xf]
  %v225 = vld [vmem:[%s3 + $0x64] sm:$0xf]
  %v226 = vld [vmem:[%s3 + $0x68] sm:$0xf]
  %v227 = vld [vmem:[%s3 + $0x6c] sm:$0xf]
  %v228 = vld [vmem:[%s3 + $0x70] sm:$0xf]
  %v229 = vld [vmem:[%s3 + $0x74] sm:$0xf]
  %v230 = vld [vmem:[%s3 + $0x78] sm:$0xf]
  %v231 = vld [vmem:[%s3 + $0x7c] sm:$0xf]
  %v264 = vunpack.c.l.b16 %v200
  %v265 = vunpack.c.l.b16 %v201
  %v266 = vunpack.c.l.b16 %v202
  %v267 = vunpack.c.l.b16 %v203
  %v268 = vunpack.c.l.b16 %v204
  %v269 = vunpack.c.l.b16 %v205
  %v270 = vunpack.c.l.b16 %v206
  %v271 = vunpack.c.l.b16 %v207
  %v272 = vunpack.c.l.b16 %v208
  %v273 = vunpack.c.l.b16 %v209
  %v274 = vunpack.c.l.b16 %v210
  %v275 = vunpack.c.l.b16 %v211
  %v276 = vunpack.c.l.b16 %v212
  %v277 = vunpack.c.l.b16 %v213
  %v278 = vunpack.c.l.b16 %v214
  %v279 = vunpack.c.l.b16 %v215
  %v280 = vunpack.c.l.b16 %v216
  %v281 = vunpack.c.l.b16 %v217
  %v282 = vunpack.c.l.b16 %v218
  %v283 = vunpack.c.l.b16 %v219
  %v284 = vunpack.c.l.b16 %v220
  %v285 = vunpack.c.l.b16 %v221
  %v286 = vunpack.c.l.b16 %v222
  %v287 = vunpack.c.l.b16 %v223
  %v288 = vunpack.c.l.b16 %v224
  %v289 = vunpack.c.l.b16 %v225
  %v290 = vunpack.c.l.b16 %v226
  %v291 = vunpack.c.l.b16 %v227
  %v292 = vunpack.c.l.b16 %v228
  %v293 = vunpack.c.l.b16 %v229
  %v294 = vunpack.c.l.b16 %v230
  %v295 = vunpack.c.l.b16 %v231
  %v296 = vpack.c.b16 %v265, %v264
  %v297 = vpack.c.b16 %v267, %v266
  %v298 = vpack.c.b16 %v269, %v268
  %v299 = vpack.c.b16 %v271, %v270
  %v300 = vpack.c.b16 %v273, %v272
  %v301 = vpack.c.b16 %v275, %v274
  %v302 = vpack.c.b16 %v277, %v276
  %v303 = vpack.c.b16 %v279, %v278
  %v304 = vpack.c.b16 %v281, %v280
  %v305 = vpack.c.b16 %v283, %v282
  %v306 = vpack.c.b16 %v285, %v284
  %v307 = vpack.c.b16 %v287, %v286
  %v308 = vpack.c.b16 %v289, %v288
  %v309 = vpack.c.b16 %v291, %v290
  %v310 = vpack.c.b16 %v293, %v292
  %v311 = vpack.c.b16 %v295, %v294
  %328 = vmatprep.subr.bf16.mxu0 0
  %329 = vmatpush1.bf16.msra.mxu0 %v303
  %330 = vmatprep.subr.bf16.mxu0 0
  %331 = vmatpush1.bf16.msra.mxu0 %v302
  %332 = vmatprep.subr.bf16.mxu0 0
  %333 = vmatpush1.bf16.msra.mxu0 %v301
  %334 = vmatprep.subr.bf16.mxu0 0
  %335 = vmatpush1.bf16.msra.mxu0 %v300
  %336 = vmatprep.subr.bf16.mxu0 0
  %337 = vmatpush1.bf16.msra.mxu0 %v299
  %338 = vmatprep.subr.bf16.mxu0 0
  %339 = vmatpush1.bf16.msra.mxu0 %v298
  %340 = vmatprep.subr.bf16.mxu0 0
  %341 = vmatpush1.bf16.msra.mxu0 %v297
  %342 = vmatprep.subr.bf16.mxu0 0
  %343 = vmatpush1.bf16.msra.mxu0 %v296
  %344 = vmatprep.subr.bf16.mxu0 0
  %345 = vmatpush2.bf16.msra.mxu0 %v311
  %346 = vmatprep.subr.bf16.mxu0 0
  %347 = vmatpush2.bf16.msra.mxu0 %v310
  %348 = vmatprep.subr.bf16.mxu0 0
  %349 = vmatpush2.bf16.msra.mxu0 %v309
  %350 = vmatprep.subr.bf16.mxu0 0
  %351 = vmatpush2.bf16.msra.mxu0 %v308
  %352 = vmatprep.subr.bf16.mxu0 0
  %353 = vmatpush2.bf16.msra.mxu0 %v307
  %354 = vmatprep.subr.bf16.mxu0 0
  %355 = vmatpush2.bf16.msra.mxu0 %v306
  %356 = vmatprep.subr.bf16.mxu0 0
  %357 = vmatpush2.bf16.msra.mxu0 %v305
  %358 = vmatprep.subr.bf16.mxu0 0
  %359 = vmatpush2.bf16.msra.mxu0 %v304
  %360 = vmatprep.mubr.bf16.mxu0 %v199
  %361 = vmatmul.mubr.bf16.gmra.mxu0 %v198
  %v362 = vpop.f32.mrf.mxu0
  %v363 = vadd.f32 0.0, %v362
  %v364 = vpop.f32.mrf.mxu0
  %v365 = vpop.f32.mrf.mxu0
  %v366 = vadd.f32 0.0, %v365
  %v367 = vpop.f32.mrf.mxu0
  %368 = vdwg.mxu0
  %v369 = vadd.f32 %v196, %v363
  %v370 = vadd.f32 %v197, %v366
  %371 = vst [vmem:[#allocation2] sm:$0xff] %v369
  %372 = vst [vmem:[#allocation2 + $0x8] sm:$0xff] %v370
  // Predicated region
  $region34: #{decoder_layer_forward.15} parent=0 // pred_check
    %p373 = pneg %p27
  $region35: #{decoder_layer_forward.15} parent=0 // pred_check_branch
    %375 = sbr.rel (%p373) target = $region37
  $region36: #{decoder_layer_forward.15} parent=0 // pred_region
    %v376 = vld [vmem:[#allocation2] sm:$0xff]
    %v377 = vld [vmem:[#allocation2 + $0x8] sm:$0xff]
    %v378 = vld [vmem:[%s4] sm:$0x1]
    %v380 = vlaneseq
    %v381 = vshrl.u32 %v380, 7
    %v382 = vsub.s32 0, %v381
    %v383 = vrot.slane %v378, %v382
    %v385 = vadd.f32 %v376, %v383
    %v386 = vadd.f32 %v377, %v383
    %v387 = vld [vmem:[%s0] sm:$0xf]
    %v388 = vld [vmem:[%s0 + $0x4] sm:$0xf]
    %v389 = vunpack.c.l.bf16 %v387
    %v390 = vunpack.c.l.bf16 %v388
    %v391 = vadd.f32 %v385, %v389
    %v392 = vadd.f32 %v386, %v390
    %393 = vadd.xlane.f32.xlu0 %v391
    %v394 = vpop.xlane.xlu0 %393
    %395 = vadd.xlane.f32.xlu0 %v392
    %v396 = vpop.xlane.xlu0 %395
    %v397 = vrcp.pop 128.0
    %v398 = vmul.f32 %v394, %v397
    %v399 = vmul.f32 %v396, %v397
    %v400 = vsub.f32 %v391, %v398
    %v401 = vsub.f32 %v392, %v399
    %v402 = vmul.f32 %v400, %v400
    %v403 = vmul.f32 %v401, %v401
    %404 = vadd.xlane.f32.xlu0 %v402
    %v405 = vpop.xlane.xlu0 %404
    %406 = vadd.xlane.f32.xlu0 %v403
    %v407 = vpop.xlane.xlu0 %406
    %v408 = vmul.f32 %v405, %v397
    %v409 = vmul.f32 %v407, %v397
    %v410 = vadd.f32 %v408, 1e-05
    %v411 = vadd.f32 %v409, 1e-05
    %v412 = vrsqrt.pop %v410
    %v413 = vrsqrt.pop %v411
    %v414 = vmul.f32 %v400, %v412
    %v415 = vmul.f32 %v401, %v413
    %v416 = vld [vmem:[%s5] sm:$0x1]
    %v418 = vlaneseq
    %v419 = vshrl.u32 %v418, 7
    %v420 = vsub.s32 0, %v419
    %v421 = vrot.slane %v416, %v420
    %v423 = vmul.f32 %v414, %v421
    %v424 = vmul.f32 %v415, %v421
    %v425 = vld [vmem:[%s6] sm:$0x1]
    %v427 = vlaneseq
    %v428 = vshrl.u32 %v427, 7
    %v429 = vsub.s32 0, %v428
    %v430 = vrot.slane %v425, %v429
    %v432 = vadd.f32 %v423, %v430
    %v433 = vadd.f32 %v424, %v430
    %v434 = vpack.c.bf16 %v433, %v432
    %v436 = vunpack.c.l.b16 %v434
    %v437 = vunpack.c.h.b16 %v434
    %v438 = vpack.c.b16 %v436, %v436
    %v439 = vpack.c.b16 %v437, %v437
    %442 = vst [vmem:[%s7] sm:$0xf] %v438
    %443 = vst [vmem:[%s7 + $0x4] sm:$0xf] %v439
  $region37: #{decoder_layer_forward.15} parent=0 // pred_fallthru
    _
  // Predicated region
  $region38: #{decoder_layer_forward.15} parent=0 // pred_check
    _
  $region39: #{decoder_layer_forward.15} parent=0 // pred_check_branch
    %445 = sbr.rel (0) target = $region41
  $region40: #{decoder_layer_forward.15} parent=0 // pred_region
    _
  $region41: #{decoder_layer_forward.15} parent=0 // pred_fallthru
    _
  // Predicated region
  $region42: #{decoder_layer_forward.15} parent=0 // pred_check
    _
  $region43: #{decoder_layer_forward.15} parent=0 // pred_check_branch
    %447 = sbr.rel (0) target = $region45
  $region44: #{decoder_layer_forward.15} parent=0 // pred_region
    _
  $region45: #{decoder_layer_forward.15} parent=0 // pred_fallthru
    _

// kernel: decoder_layer_forward.13
$region0: #{decoder_layer_forward.13}
  #allocation0 [shape = 'u32[]', space=smem, size = 0x4, offset = 0x4, fixed_abs, tag = 'smem constant byte address 0x4 - core index']
  #allocation1 [shape = 'u32[144,128]{1,0:T(1,128)}', space=vmem, size = 0x12000, scoped, tag = 'internal scratch']
  #allocation2 [shape = 'f32[8,4]{1,0:T(8,128)}', space=vmem, size = 0x1000, scoped, tag = 'scratch operand']
  #allocation3 [shape = 'f32[8,4]{1,0:T(8,128)}', space=vmem, size = 0x1000, scoped, tag = 'scratch operand']
  #allocation4 [shape = 'f32[8,128]{1,0:T(8,128)}', space=vmem, size = 0x1000, scoped, tag = 'scratch operand']
  %s0 = inlined_call_operand.vmem [shape: bf16[2,8,128], index: 0, kind: input, shape index: {}]
  %s1 = inlined_call_operand.vmem [shape: bf16[2,16,256], index: 1, kind: input, shape index: {}, may-alias: {1,2}]
  %s2 = inlined_call_operand.vmem [shape: bf16[2,16,256], index: 2, kind: input, shape index: {}, may-alias: {1,2}]
  %s3 = inlined_call_operand.vmem [shape: bf16[2,8,128], index: 3, kind: output, shape index: {}]
  %s4 = sld [smem:[#allocation0]]
  $region135: #{decoder_layer_forward.13} parent=0
    _
  %s6 = ssub.s32 1, %s4
  %s7 = scalar_select 0, %s6, %s4
  $region1: #{decoder_layer_forward.13} parent=0
    #allocation5 [shape = 'u8[8192]{0}', space=vmem, size = 0x2000, scoped, tag = 'input window, operand 1']
    #allocation6 [shape = 'u8[8192]{0}', space=vmem, size = 0x2000, scoped, tag = 'input window, operand 2']
    loop: start=0, step=1, limit=4
    $region2: #{decoder_layer_forward.13} parent=1 // loop_pre_header
      _
    $region3: #{decoder_layer_forward.13} parent=1 // loop_header
      %s9 = sphi 0, %s13
      %p10 = scmp.ge.s32.totalorder %s9, 4
      %s16 = sphi 0, %s35
      %s17 = sphi 0, %s31
      %s18 = sphi 0, %s27
      %s19 = sphi 0, %s16
      %s20 = sphi 0, %s17
      %s21 = sphi 0, %s18
      %s22 = sphi 0, %s19
      %s23 = sphi 0, %s20
      %s24 = sphi 0, %s21
      %s40 = sphi 0, %s42
      %s43 = sphi 0, %s40
      %s44 = sphi 0, %s43
      %s60 = sphi 0, %s44
      %s68 = sphi 0, %s70
      %s71 = sphi 0, %s68
      %s72 = sphi 0, %s71
      %s88 = sphi 0, %s72
      %s96 = sphi 0, %s98
      %s99 = sphi 0, %s96
      %s100 = sphi 0, %s99
      %s116 = sphi 0, %s100
      %s124 = sphi 0, %s126
      %s127 = sphi 0, %s124
      %s128 = sphi 0, %s127
      %s144 = sphi 0, %s128
    $region4: #{decoder_layer_forward.13} parent=1 // loop_header_branch
      %12 = sbr.rel (%p10) target = $region8
    $region5: #{decoder_layer_forward.13} parent=1 // loop_body
      %s14 = ssub.s32 %s9, 1
      %s15 = ssub.s32 %s9, 2
      %s25 = sadd.s32 1, %s18
      %p26 = scmp.ge.s32.totalorder %s25, 1
      %s27 = scalar_select %p26, 0, %s25
      %s28 = sadd.s32 1, %s17
      %s29 = scalar_select %p26, %s28, %s17
      %p30 = scmp.ge.s32.totalorder %s29, 1
      %s31 = scalar_select %p30, 0, %s29
      %s32 = sadd.s32 1, %s16
      %s33 = scalar_select %p30, %s32, %s16
      %p34 = scmp.ge.s32.totalorder %s33, 2
      %s35 = scalar_select %p34, 0, %s33
      %s36 = ssub.s32 %s16, %s35
      %s37 = ssub.s32 %s17, %s31
      %s38 = sor.u32 %s36, %s37
      %p39 = scmp.eq.s32.totalorder %s38, 0
      %s41 = sadd.s32 %s40, 1
      %s42 = scalar_select %p39, %s40, %s41
      %p45 = pneg %p39
      %p46 = scmp.eq.s32.totalorder %s9, 1
      %p47 = por %p45, %p46
      %p48 = scmp.ne.s32.totalorder %s40, %s43
      %p49 = scmp.eq.s32.totalorder %s9, 0
      %p50 = por %p48, %p49
      %p51 = scmp.ne.s32.totalorder %s40, %s43
      %p52 = scmp.eq.s32.totalorder %s14, 1
      %p53 = por %p51, %p52
      %p54 = scmp.ne.s32.totalorder %s43, %s44
      %p55 = scmp.eq.s32.totalorder %s14, 0
      %p56 = por %p54, %p55
      %p57 = scmp.ne.s32.totalorder %s43, %s44
      %p58 = scmp.eq.s32.totalorder %s15, 1
      %p59 = por %p57, %p58
      %p61 = scmp.ne.s32.totalorder %s44, %s60
      %p62 = scmp.eq.s32.totalorder %s15, 0
      %p63 = por %p61, %p62
      %s64 = ssub.s32 %s16, %s35
      %s65 = ssub.s32 %s18, %s27
      %s66 = sor.u32 %s64, %s65
      %p67 = scmp.eq.s32.totalorder %s66, 0
      %s69 = sadd.s32 %s68, 1
      %s70 = scalar_select %p67, %s68, %s69
      %p73 = pneg %p67
      %p74 = scmp.eq.s32.totalorder %s9, 1
      %p75 = por %p73, %p74
      %p76 = scmp.ne.s32.totalorder %s68, %s71
      %p77 = scmp.eq.s32.totalorder %s9, 0
      %p78 = por %p76, %p77
      %p79 = scmp.ne.s32.totalorder %s68, %s71
      %p80 = scmp.eq.s32.totalorder %s14, 1
      %p81 = por %p79, %p80
      %p82 = scmp.ne.s32.totalorder %s71, %s72
      %p83 = scmp.eq.s32.totalorder %s14, 0
      %p84 = por %p82, %p83
      %p85 = scmp.ne.s32.totalorder %s71, %s72
      %p86 = scmp.eq.s32.totalorder %s15, 1
      %p87 = por %p85, %p86
      %p89 = scmp.ne.s32.totalorder %s72, %s88
      %p90 = scmp.eq.s32.totalorder %s15, 0
      %p91 = por %p89, %p90
      %s92 = ssub.s32 %s16, %s35
      %s93 = ssub.s32 %s18, %s27
      %s94 = sor.u32 %s92, %s93
      %p95 = scmp.eq.s32.totalorder %s94, 0
      %s97 = sadd.s32 %s96, 1
      %s98 = scalar_select %p95, %s96, %s97
      %p101 = pneg %p95
      %p102 = scmp.eq.s32.totalorder %s9, 1
      %p103 = por %p101, %p102
      %p104 = scmp.ne.s32.totalorder %s96, %s99
      %p105 = scmp.eq.s32.totalorder %s9, 0
      %p106 = por %p104, %p105
      %p107 = scmp.ne.s32.totalorder %s96, %s99
      %p108 = scmp.eq.s32.totalorder %s14, 1
      %p109 = por %p107, %p108
      %p110 = scmp.ne.s32.totalorder %s99, %s100
      %p111 = scmp.eq.s32.totalorder %s14, 0
      %p112 = por %p110, %p111
      %p113 = scmp.ne.s32.totalorder %s99, %s100
      %p114 = scmp.eq.s32.totalorder %s15, 1
      %p115 = por %p113, %p114
      %p117 = scmp.ne.s32.totalorder %s100, %s116
      %p118 = scmp.eq.s32.totalorder %s15, 0
      %p119 = por %p117, %p118
      %s120 = ssub.s32 %s16, %s35
      %s121 = ssub.s32 %s17, %s31
      %s122 = sor.u32 %s120, %s121
      %p123 = scmp.eq.s32.totalorder %s122, 0
      %s125 = sadd.s32 %s124, 1
      %s126 = scalar_select %p123, %s124, %s125
      %p129 = pneg %p123
      %p130 = scmp.eq.s32.totalorder %s9, 1
      %p131 = por %p129, %p130
      %p132 = scmp.ne.s32.totalorder %s124, %s127
      %p133 = scmp.eq.s32.totalorder %s9, 0
      %p134 = por %p132, %p133
      %p135 = scmp.ne.s32.totalorder %s124, %s127
      %p136 = scmp.eq.s32.totalorder %s14, 1
      %p137 = por %p135, %p136
      %p138 = scmp.ne.s32.totalorder %s127, %s128
      %p139 = scmp.eq.s32.totalorder %s14, 0
      %p140 = por %p138, %p139
      %p141 = scmp.ne.s32.totalorder %s127, %s128
      %p142 = scmp.eq.s32.totalorder %s15, 1
      %p143 = por %p141, %p142
      %p145 = scmp.ne.s32.totalorder %s128, %s144
      %p146 = scmp.eq.s32.totalorder %s15, 0
      %p147 = por %p145, %p146
      %p148 = scmp.le.s32.totalorder 1, %s9
      %p149 = scmp.lt.s32.totalorder %s9, 3
      %p150 = pnand %p148, %p149
      %p151 = pneg %p150
      // Predicated region
      $region9: #{decoder_layer_forward.13} parent=5 // pred_check
        _
      $region10: #{decoder_layer_forward.13} parent=5 // pred_check_branch
        %153 = sbr.rel (%p150) target = $region12
      $region11: #{decoder_layer_forward.13} parent=5 // pred_region
        %s154 = ssub.s32 %s9, 1
      $region12: #{decoder_layer_forward.13} parent=5 // pred_fallthru
        _
      %p155 = scmp.lt.s32.totalorder %s9, 2
      // Predicated region
      $region13: #{decoder_layer_forward.13} parent=5 // pred_check
        %p156 = pneg %p155
      $region14: #{decoder_layer_forward.13} parent=5 // pred_check_branch
        %158 = sbr.rel (%p156) target = $region16
      $region15: #{decoder_layer_forward.13} parent=5 // pred_region
        // Predicated region
        $region17: #{decoder_layer_forward.13} parent=15 // pred_check
          %p159 = pneg %p50
        $region18: #{decoder_layer_forward.13} parent=15 // pred_check_branch
          %161 = sbr.rel (%p159) target = $region20
        $region19: #{decoder_layer_forward.13} parent=15 // pred_region
          %p162 = scmp.lt.s32.totalorder %s16, 1
          %s163 = scalar_select %p162, %s16, 1
          %p164 = scmp.lt.s32.totalorder %s17, 0
          %s165 = scalar_select %p164, %s17, 0
          %s166 = sadd.s32 %s165, %s163
          %s167 = smul.addr %s166, 4
          %s168 = scalar_lea.vmem %s0, %s167
        $region20: #{decoder_layer_forward.13} parent=15 // pred_fallthru
          _
        // Predicated region
        $region21: #{decoder_layer_forward.13} parent=15 // pred_check
          %p169 = pneg %p78
        $region22: #{decoder_layer_forward.13} parent=15 // pred_check_branch
          %171 = sbr.rel (%p169) target = $region24
        $region23: #{decoder_layer_forward.13} parent=15 // pred_region
          %s172 = sand.u32 %s68, 1
          %s173 = sand.u32 %s68, 1
          %s174 = smul.addr %s173, 8
          %s175 = scalar_lea.vmem [#allocation5], %s174
          %s176 = smul.u32 2, %s18
          %s177 = smul.addr %s176, 2
          %s178 = smul.addr %s16, 4
          %s179 = sadd.s32 %s177, %s178
          %s180 = smul.addr %s179, 4
          %s181 = scalar_lea.vmem %s1, %s180
          // Predicated region
          $region25: #{decoder_layer_forward.13} parent=23 // pred_check
            _
          $region26: #{decoder_layer_forward.13} parent=23 // pred_check_branch
            %183 = sbr.rel (0) target = $region28
          $region27: #{decoder_layer_forward.13} parent=23 // pred_region
            // Predicated region
            $region29: #{decoder_layer_forward.13} parent=27 // pred_check
              _
            $region30: #{decoder_layer_forward.13} parent=27 // pred_check_branch
              %185 = sbr.rel target = $region32
            $region31: #{decoder_layer_forward.13} parent=27 // pred_region
              // Predicated region
              $region44: #{decoder_layer_forward.13} parent=31 // pred_check
                _
              $region45: #{decoder_layer_forward.13} parent=31 // pred_check_branch
                %203 = sbr.rel (0) target = $region47
              $region46: #{decoder_layer_forward.13} parent=31 // pred_region
                loop: start=0, step=1, limit=1
                $region48: #{decoder_layer_forward.13} parent=46 // loop_pre_header
                  _
                $region49: #{decoder_layer_forward.13} parent=46 // loop_header
                  %s205 = sphi 0, %s209
                  %p206 = scmp.ge.s32.totalorder %s205, 1
                  %s210 = sphi %s181, %s181
                  %s211 = sphi %s175, %s175
                $region50: #{decoder_layer_forward.13} parent=46 // loop_header_branch
                  %208 = sbr.rel (%p206) target = $region54
                $region51: #{decoder_layer_forward.13} parent=46 // loop_body
                  _
                $region52: #{decoder_layer_forward.13} parent=46 // loop_footer
                  %s209 = sadd.s32 1, %s205
                $region53: #{decoder_layer_forward.13} parent=46 // loop_footer_branch
                  %204 = sbr.rel target = $region49
                $region54: #{decoder_layer_forward.13} parent=46 // loop_exit
                  _
                %s213 = ssub.s32 16, 1
                loop: start=0, step=1, limit=1
                $region55: #{decoder_layer_forward.13} parent=46 // loop_pre_header
                  _
                $region56: #{decoder_layer_forward.13} parent=46 // loop_header
                  %s215 = sphi 0, %s219
                  %p216 = scmp.ge.s32.totalorder %s215, 1
                  %s220 = sphi %s181, %s181
                  %s221 = sphi %s175, %s175
                $region57: #{decoder_layer_forward.13} parent=46 // loop_header_branch
                  %218 = sbr.rel (%p216) target = $region61
                $region58: #{decoder_layer_forward.13} parent=46 // loop_body
                  %v222 = vld [vmem:[%s220] sm:%s213]
                  %223 = vst [vmem:[%s221] sm:%s213] %v222
                  %v224 = vld [vmem:[%s220 + $0x8] sm:%s213]
                  %225 = vst [vmem:[%s221 + $0x4] sm:%s213] %v224
                $region59: #{decoder_layer_forward.13} parent=46 // loop_footer
                  %s219 = sadd.s32 1, %s215
                $region60: #{decoder_layer_forward.13} parent=46 // loop_footer_branch
                  %214 = sbr.rel target = $region56
                $region61: #{decoder_layer_forward.13} parent=46 // loop_exit
                  _
              $region47: #{decoder_layer_forward.13} parent=31 // pred_fallthru
                _
            $region32: #{decoder_layer_forward.13} parent=27 // pred_fallthru
              _
            // Predicated region
            $region33: #{decoder_layer_forward.13} parent=27 // pred_check
              _
            $region34: #{decoder_layer_forward.13} parent=27 // pred_check_branch
              %187 = sbr.rel (0) target = $region36
            $region35: #{decoder_layer_forward.13} parent=27 // pred_region
              %s189 = ssub.s32 16, 1
              loop: start=0, step=1, limit=1
              $region37: #{decoder_layer_forward.13} parent=35 // loop_pre_header
                _
              $region38: #{decoder_layer_forward.13} parent=35 // loop_header
                %s191 = sphi 0, %s195
                %p192 = scmp.ge.s32.totalorder %s191, 1
                %s196 = sphi %s181, %s181
                %s197 = sphi %s175, %s175
              $region39: #{decoder_layer_forward.13} parent=35 // loop_header_branch
                %194 = sbr.rel (%p192) target = $region43
              $region40: #{decoder_layer_forward.13} parent=35 // loop_body
                %v198 = vld [vmem:[%s196] sm:%s189]
                %199 = vst [vmem:[%s197] sm:%s189] %v198
                %v200 = vld [vmem:[%s196 + $0x8] sm:%s189]
                %201 = vst [vmem:[%s197 + $0x4] sm:%s189] %v200
              $region41: #{decoder_layer_forward.13} parent=35 // loop_footer
                %s195 = sadd.s32 1, %s191
              $region42: #{decoder_layer_forward.13} parent=35 // loop_footer_branch
                %190 = sbr.rel target = $region38
              $region43: #{decoder_layer_forward.13} parent=35 // loop_exit
                _
            $region36: #{decoder_layer_forward.13} parent=27 // pred_fallthru
              _
          $region28: #{decoder_layer_forward.13} parent=23 // pred_fallthru
            _
          %226 = vnop
        $region24: #{decoder_layer_forward.13} parent=15 // pred_fallthru
          _
        // Predicated region
        $region62: #{decoder_layer_forward.13} parent=15 // pred_check
          %p227 = pneg %p106
        $region63: #{decoder_layer_forward.13} parent=15 // pred_check_branch
          %229 = sbr.rel (%p227) target = $region65
        $region64: #{decoder_layer_forward.13} parent=15 // pred_region
          %s230 = sand.u32 %s96, 1
          %s231 = sand.u32 %s96, 1
          %s232 = smul.addr %s231, 8
          %s233 = scalar_lea.vmem [#allocation6], %s232
          %s234 = smul.u32 2, %s18
          %s235 = smul.addr %s234, 2
          %s236 = sadd.s32 1, %s235
          %s237 = smul.addr %s16, 4
          %s238 = sadd.s32 %s236, %s237
          %s239 = smul.addr %s238, 4
          %s240 = scalar_lea.vmem %s2, %s239
          // Predicated region
          $region66: #{decoder_layer_forward.13} parent=64 // pred_check
            _
          $region67: #{decoder_layer_forward.13} parent=64 // pred_check_branch
            %242 = sbr.rel (0) target = $region69
          $region68: #{decoder_layer_forward.13} parent=64 // pred_region
            // Predicated region
            $region70: #{decoder_layer_forward.13} parent=68 // pred_check
              _
            $region71: #{decoder_layer_forward.13} parent=68 // pred_check_branch
              %244 = sbr.rel target = $region73
            $region72: #{decoder_layer_forward.13} parent=68 // pred_region
              // Predicated region
              $region85: #{decoder_layer_forward.13} parent=72 // pred_check
                _
              $region86: #{decoder_layer_forward.13} parent=72 // pred_check_branch
                %262 = sbr.rel (0) target = $region88
              $region87: #{decoder_layer_forward.13} parent=72 // pred_region
                loop: start=0, step=1, limit=1
                $region89: #{decoder_layer_forward.13} parent=87 // loop_pre_header
                  _
                $region90: #{decoder_layer_forward.13} parent=87 // loop_header
                  %s264 = sphi 0, %s268
                  %p265 = scmp.ge.s32.totalorder %s264, 1
                  %s269 = sphi %s240, %s240
                  %s270 = sphi %s233, %s233
                $region91: #{decoder_layer_forward.13} parent=87 // loop_header_branch
                  %267 = sbr.rel (%p265) target = $region95
                $region92: #{decoder_layer_forward.13} parent=87 // loop_body
                  _
                $region93: #{decoder_layer_forward.13} parent=87 // loop_footer
                  %s268 = sadd.s32 1, %s264
                $region94: #{decoder_layer_forward.13} parent=87 // loop_footer_branch
                  %263 = sbr.rel target = $region90
                $region95: #{decoder_layer_forward.13} parent=87 // loop_exit
                  _
                %s272 = ssub.s32 16, 1
                loop: start=0, step=1, limit=1
                $region96: #{decoder_layer_forward.13} parent=87 // loop_pre_header
                  _
                $region97: #{decoder_layer_forward.13} parent=87 // loop_header
                  %s274 = sphi 0, %s278
                  %p275 = scmp.ge.s32.totalorder %s274, 1
                  %s279 = sphi %s240, %s240
                  %s280 = sphi %s233, %s233
                $region98: #{decoder_layer_forward.13} parent=87 // loop_header_branch
                  %277 = sbr.rel (%p275) target = $region102
                $region99: #{decoder_layer_forward.13} parent=87 // loop_body
                  %v281 = vld [vmem:[%s279] sm:%s272]
                  %282 = vst [vmem:[%s280] sm:%s272] %v281
                  %v283 = vld [vmem:[%s279 + $0x8] sm:%s272]
                  %284 = vst [vmem:[%s280 + $0x4] sm:%s272] %v283
                $region100: #{decoder_layer_forward.13} parent=87 // loop_footer
                  %s278 = sadd.s32 1, %s274
                $region101: #{decoder_layer_forward.13} parent=87 // loop_footer_branch
                  %273 = sbr.rel target = $region97
                $region102: #{decoder_layer_forward.13} parent=87 // loop_exit
                  _
              $region88: #{decoder_layer_forward.13} parent=72 // pred_fallthru
                _
            $region73: #{decoder_layer_forward.13} parent=68 // pred_fallthru
              _
            // Predicated region
            $region74: #{decoder_layer_forward.13} parent=68 // pred_check
              _
            $region75: #{decoder_layer_forward.13} parent=68 // pred_check_branch
              %246 = sbr.rel (0) target = $region77
            $region76: #{decoder_layer_forward.13} parent=68 // pred_region
              %s248 = ssub.s32 16, 1
              loop: start=0, step=1, limit=1
              $region78: #{decoder_layer_forward.13} parent=76 // loop_pre_header
                _
              $region79: #{decoder_layer_forward.13} parent=76 // loop_header
                %s250 = sphi 0, %s254
                %p251 = scmp.ge.s32.totalorder %s250, 1
                %s255 = sphi %s240, %s240
                %s256 = sphi %s233, %s233
              $region80: #{decoder_layer_forward.13} parent=76 // loop_header_branch
                %253 = sbr.rel (%p251) target = $region84
              $region81: #{decoder_layer_forward.13} parent=76 // loop_body
                %v257 = vld [vmem:[%s255] sm:%s248]
                %258 = vst [vmem:[%s256] sm:%s248] %v257
                %v259 = vld [vmem:[%s255 + $0x8] sm:%s248]
                %260 = vst [vmem:[%s256 + $0x4] sm:%s248] %v259
              $region82: #{decoder_layer_forward.13} parent=76 // loop_footer
                %s254 = sadd.s32 1, %s250
              $region83: #{decoder_layer_forward.13} parent=76 // loop_footer_branch
                %249 = sbr.rel target = $region79
              $region84: #{decoder_layer_forward.13} parent=76 // loop_exit
                _
            $region77: #{decoder_layer_forward.13} parent=68 // pred_fallthru
              _
          $region69: #{decoder_layer_forward.13} parent=64 // pred_fallthru
            _
          %285 = vnop
        $region65: #{decoder_layer_forward.13} parent=15 // pred_fallthru
          _
      $region16: #{decoder_layer_forward.13} parent=5 // pred_fallthru
        _
      %p286 = scmp.le.s32.totalorder 1, %s9
      %p287 = scmp.lt.s32.totalorder %s9, 3
      %p288 = pnand %p286, %p287
      %p289 = pneg %p288
      // Predicated region
      $region103: #{decoder_layer_forward.13} parent=5 // pred_check
        _
      $region104: #{decoder_layer_forward.13} parent=5 // pred_check_branch
        %291 = sbr.rel (%p288) target = $region106
      $region105: #{decoder_layer_forward.13} parent=5 // pred_region
        %s292 = ssub.s32 %s9, 1
        %s293 = sand.u32 %s71, 1
        %s294 = sand.u32 %s71, 1
        %s295 = smul.addr %s294, 8
        %s296 = scalar_lea.vmem [#allocation5], %s295
        // Predicated region
        $region107: #{decoder_layer_forward.13} parent=105 // pred_check
          %p297 = pneg %p84
        $region108: #{decoder_layer_forward.13} parent=105 // pred_check_branch
          %299 = sbr.rel (%p297) target = $region110
        $region109: #{decoder_layer_forward.13} parent=105 // pred_region
          _
        $region110: #{decoder_layer_forward.13} parent=105 // pred_fallthru
          _
        %s300 = sand.u32 %s99, 1
        %s301 = sand.u32 %s99, 1
        %s302 = smul.addr %s301, 8
        %s303 = scalar_lea.vmem [#allocation6], %s302
        // Predicated region
        $region111: #{decoder_layer_forward.13} parent=105 // pred_check
          %p304 = pneg %p112
        $region112: #{decoder_layer_forward.13} parent=105 // pred_check_branch
          %306 = sbr.rel (%p304) target = $region114
        $region113: #{decoder_layer_forward.13} parent=105 // pred_region
          _
        $region114: #{decoder_layer_forward.13} parent=105 // pred_fallthru
          _
        %p307 = scmp.lt.s32.totalorder %s19, 1
        %s308 = scalar_select %p307, %s19, 1
        %p309 = scmp.lt.s32.totalorder %s20, 0
        %s310 = scalar_select %p309, %s20, 0
        %s311 = sadd.s32 %s310, %s308
        %s312 = smul.addr %s311, 4
        %s313 = scalar_lea.vmem %s0, %s312
        %p314 = pneg %p56
        %p315 = pneg %p53
        %s316 = sand.u32 %s71, 1
        %s317 = sand.u32 %s71, 1
        %s318 = smul.addr %s317, 8
        %s319 = scalar_lea.vmem [#allocation5], %s318
        %p320 = pneg %p84
        %p321 = pneg %p81
        %s322 = sand.u32 %s99, 1
        %s323 = sand.u32 %s99, 1
        %s324 = smul.addr %s323, 8
        %s325 = scalar_lea.vmem [#allocation6], %s324
        %p326 = pneg %p112
        %p327 = pneg %p109
        %p328 = pneg %p140
        %p329 = pneg %p137
        %p330 = scmp.lt.s32.totalorder %s19, 1
        %s331 = scalar_select %p330, %s19, 1
        %p332 = scmp.lt.s32.totalorder %s20, 0
        %s333 = scalar_select %p332, %s20, 0
        %s334 = sadd.s32 %s333, %s331
        %s335 = smul.addr %s334, 4
        %s336 = scalar_lea.vmem %s3, %s335
        %p337 = scmp.lt.s32.totalorder %s19, 1
        %s338 = scalar_select %p337, %s19, 1
        %p339 = scmp.lt.s32.totalorder %s20, 0
        %s340 = scalar_select %p339, %s20, 0
        %s341 = sadd.s32 %s340, %s338
        %s342 = smul.addr %s341, 4
        %s343 = scalar_lea.vmem %s0, %s342
        %s344 = smul.u32 2, %s21
        %s345 = smul.u32 2, %s21
        %p346 = scmp.lt.s32.totalorder %s19, 1
        %s347 = scalar_select %p346, %s19, 1
        %p348 = scmp.lt.s32.totalorder %s20, 0
        %s349 = scalar_select %p348, %s20, 0
        %s350 = sadd.s32 %s349, %s347
        %s351 = smul.addr %s350, 4
        %s352 = scalar_lea.vmem %s3, %s351
        %p354 = scmp.eq.s32.totalorder %s21, 0
        // Predicated region
        $region115: #{decoder_layer_forward.13} parent=105 // pred_check
          %p355 = pneg %p354
        $region116: #{decoder_layer_forward.13} parent=105 // pred_check_branch
          %357 = sbr.rel (%p355) target = $region118
        $region117: #{decoder_layer_forward.13} parent=105 // pred_region
          %vm358 = vcmask 31744
          %359 = vst.msk [vmem:[#allocation2] sm:$0xff] %vm358, -inf
          %360 = vst.msk [vmem:[#allocation3] sm:$0xff] %vm358, 0.0
          %361 = vst [vmem:[#allocation4] sm:$0xff] 0.0
        $region118: #{decoder_layer_forward.13} parent=105 // pred_fallthru
          _
        %v362 = vld [vmem:[%s343] sm:$0xf]
        %v363 = vld [vmem:[%s296] sm:$0xf]
        %v364 = vld [vmem:[%s296 + $0x4] sm:$0xf]
        %v365 = vld [vmem:[%s303] sm:$0xf]
        %v366 = vld [vmem:[%s303 + $0x4] sm:$0xf]
        %v369 = vunpack.c.l.b16 %v363
        %v370 = vunpack.c.l.b16 %v364
        %v371 = vpack.c.b16 %v370, %v369
        %vm372 = vcmask 261120
        %v374 = vsel %vm372, %v362, 0
        %v377 = vsel %vm372, %v371, 0
        %379 = vmatprep.subr.bf16.mxu0 0
        %380 = vmatpush1.bf16.xpose.msra.mxu0 0
        %381 = vmatprep.subr.bf16.mxu0 0
        %382 = vmatpush1.bf16.xpose.msra.mxu0 0
        %383 = vmatprep.subr.bf16.mxu0 0
        %384 = vmatpush1.bf16.xpose.msra.mxu0 0
        %385 = vmatprep.subr.bf16.mxu0 0
        %386 = vmatpush1.bf16.xpose.msra.mxu0 0
        %387 = vmatprep.subr.bf16.mxu0 0
        %388 = vmatpush1.bf16.xpose.msra.mxu0 0
        %389 = vmatprep.subr.bf16.mxu0 0
        %390 = vmatpush1.bf16.xpose.msra.mxu0 0
        %391 = vmatprep.subr.bf16.mxu0 0
        %392 = vmatpush1.bf16.xpose.msra.mxu0 0
        %393 = vmatprep.subr.bf16.mxu0 0
        %394 = vmatpush1.bf16.xpose.msra.mxu0 %v377
        %395 = vmatprep.subr.bf16.mxu0 0
        %396 = vmatpush2.bf16.xpose.msra.mxu0 0
        %397 = vmatprep.subr.bf16.mxu0 0
        %398 = vmatpush2.bf16.xpose.msra.mxu0 0
        %399 = vmatprep.subr.bf16.mxu0 0
        %400 = vmatpush2.bf16.xpose.msra.mxu0 0
        %401 = vmatprep.subr.bf16.mxu0 0
        %402 = vmatpush2.bf16.xpose.msra.mxu0 0
        %403 = vmatprep.subr.bf16.mxu0 0
        %404 = vmatpush2.bf16.xpose.msra.mxu0 0
        %405 = vmatprep.subr.bf16.mxu0 0
        %406 = vmatpush2.bf16.xpose.msra.mxu0 0
        %407 = vmatprep.subr.bf16.mxu0 0
        %408 = vmatpush2.bf16.xpose.msra.mxu0 0
        %409 = vmatprep.subr.bf16.mxu0 0
        %410 = vmatpush2.bf16.xpose.msra.mxu0 0
        %411 = vmatprep.mubr.bf16.mxu0 0
        %412 = vmatmul.mubr.bf16.gmra.mxu0 %v374
        %v413 = vpop.f32.mrf.mxu0
        %v414 = vadd.f32 0.0, %v413
        %v415 = vpop.f32.mrf.mxu0
        %v416 = vpop.f32.mrf.mxu0
        %v417 = vpop.f32.mrf.mxu0
        %418 = vdwg.mxu0
        %v419 = vld [vmem:[#allocation2] sm:$0xff]
        %vm420 = vcmask 130048
        %v421 = vsel %vm420, %v414, -inf
        %422 = vmax.xlane.f32.xlu0 %v421
        %v423 = vpop.xlane.xlu0 %422
        %v424 = vmax.f32 %v419, %v423
        %v425 = vsub.f32 %v419, %v424
        %v426 = vmul.f32 %v425, 1.442695
        %v427 = vpow.pop %v426
        %429 = vset.pattern.permute.xlu0 0
        %430 = vperm.xlu0 %429, %v424
        %v431 = vpop.permute.xlu0 %430
        %v433 = vsub.f32 %v414, %v431
        %v434 = vmul.f32 %v433, 1.442695
        %v435 = vpow.pop %v434
        %v436 = vld [vmem:[#allocation3] sm:$0xff]
        %v437 = vmul.f32 %v427, %v436
        %v438 = vsel %vm420, %v435, 0.0
        %439 = vadd.xlane.f32.xlu0 %v438
        %v440 = vpop.xlane.xlu0 %439
        %v441 = vadd.f32 %v437, %v440
        %vm442 = vcmask 7168
        %443 = vst.msk [vmem:[#allocation3] sm:$0xff] %vm442, %v441
        %v444 = vld [vmem:[#allocation4] sm:$0xff]
        %446 = vset.pattern.permute.xlu0 0
        %447 = vperm.xlu0 %446, %v427
        %v448 = vpop.permute.xlu0 %447
        %v450 = vmul.f32 %v448, %v444
        %v451 = vpack.c.bf16 %v435, %v435
        %v454 = vunpack.c.l.b16 %v365
        %v455 = vunpack.c.l.b16 %v366
        %v456 = vpack.c.b16 %v455, %v454
        %v459 = vsel %vm420, %v451, 0
        %461 = vmatprep.subr.bf16.mxu0 0
        %462 = vmatpush1.bf16.msra.mxu0 0
        %463 = vmatprep.subr.bf16.mxu0 0
        %464 = vmatpush1.bf16.msra.mxu0 0
        %465 = vmatprep.subr.bf16.mxu0 0
        %466 = vmatpush1.bf16.msra.mxu0 0
        %467 = vmatprep.subr.bf16.mxu0 0
        %468 = vmatpush1.bf16.msra.mxu0 0
        %469 = vmatprep.subr.bf16.mxu0 0
        %470 = vmatpush1.bf16.msra.mxu0 0
        %471 = vmatprep.subr.bf16.mxu0 0
        %472 = vmatpush1.bf16.msra.mxu0 0
        %473 = vmatprep.subr.bf16.mxu0 0
        %474 = vmatpush1.bf16.msra.mxu0 0
        %475 = vmatprep.subr.bf16.mxu0 0
        %476 = vmatpush1.bf16.msra.mxu0 %v456
        %477 = vmatprep.subr.bf16.mxu0 0
        %478 = vmatpush2.bf16.msra.mxu0 0
        %479 = vmatprep.subr.bf16.mxu0 0
        %480 = vmatpush2.bf16.msra.mxu0 0
        %481 = vmatprep.subr.bf16.mxu0 0
        %482 = vmatpush2.bf16.msra.mxu0 0
        %483 = vmatprep.subr.bf16.mxu0 0
        %484 = vmatpush2.bf16.msra.mxu0 0
        %485 = vmatprep.subr.bf16.mxu0 0
        %486 = vmatpush2.bf16.msra.mxu0 0
        %487 = vmatprep.subr.bf16.mxu0 0
        %488 = vmatpush2.bf16.msra.mxu0 0
        %489 = vmatprep.subr.bf16.mxu0 0
        %490 = vmatpush2.bf16.msra.mxu0 0
        %491 = vmatprep.subr.bf16.mxu0 0
        %492 = vmatpush2.bf16.msra.mxu0 0
        %493 = vmatprep.mubr.bf16.mxu0 0
        %494 = vmatmul.mubr.bf16.gmra.mxu0 %v459
        %v495 = vpop.f32.mrf.mxu0
        %v496 = vadd.f32 0.0, %v495
        %v497 = vpop.f32.mrf.mxu0
        %v498 = vpop.f32.mrf.mxu0
        %v499 = vpop.f32.mrf.mxu0
        %500 = vdwg.mxu0
        %v501 = vadd.f32 %v450, %v496
        %502 = vst.msk [vmem:[#allocation4] sm:$0xff] %vm372, %v501
        %503 = vst.msk [vmem:[#allocation2] sm:$0xff] %vm442, %v424
        %v505 = vunpack.c.l.b16 %v362
        %v506 = vpack.c.b16 %v505, %v505
        %507 = vrot.lane.b32.xlu0 %v506, 96
        %v508 = vpop.permute.xlu0 %507
        %509 = vrot.lane.b32.xlu0 %v371, 96
        %v510 = vpop.permute.xlu0 %509
        %v512 = vsel %vm372, %v508, 0
        %v515 = vsel %vm372, %v510, 0
        %517 = vmatprep.subr.bf16.mxu0 0
        %518 = vmatpush1.bf16.xpose.msra.mxu0 0
        %519 = vmatprep.subr.bf16.mxu0 0
        %520 = vmatpush1.bf16.xpose.msra.mxu0 0
        %521 = vmatprep.subr.bf16.mxu0 0
        %522 = vmatpush1.bf16.xpose.msra.mxu0 0
        %523 = vmatprep.subr.bf16.mxu0 0
        %524 = vmatpush1.bf16.xpose.msra.mxu0 0
        %525 = vmatprep.subr.bf16.mxu0 0
        %526 = vmatpush1.bf16.xpose.msra.mxu0 0
        %527 = vmatprep.subr.bf16.mxu0 0
        %528 = vmatpush1.bf16.xpose.msra.mxu0 0
        %529 = vmatprep.subr.bf16.mxu0 0
        %530 = vmatpush1.bf16.xpose.msra.mxu0 0
        %531 = vmatprep.subr.bf16.mxu0 0
        %532 = vmatpush1.bf16.xpose.msra.mxu0 %v515
        %533 = vmatprep.subr.bf16.mxu0 0
        %534 = vmatpush2.bf16.xpose.msra.mxu0 0
        %535 = vmatprep.subr.bf16.mxu0 0
        %536 = vmatpush2.bf16.xpose.msra.mxu0 0
        %537 = vmatprep.subr.bf16.mxu0 0
        %538 = vmatpush2.bf16.xpose.msra.mxu0 0
        %539 = vmatprep.subr.bf16.mxu0 0
        %540 = vmatpush2.bf16.xpose.msra.mxu0 0
        %541 = vmatprep.subr.bf16.mxu0 0
        %542 = vmatpush2.bf16.xpose.msra.mxu0 0
        %543 = vmatprep.subr.bf16.mxu0 0
        %544 = vmatpush2.bf16.xpose.msra.mxu0 0
        %545 = vmatprep.subr.bf16.mxu0 0
        %546 = vmatpush2.bf16.xpose.msra.mxu0 0
        %547 = vmatprep.subr.bf16.mxu0 0
        %548 = vmatpush2.bf16.xpose.msra.mxu0 0
        %549 = vmatprep.mubr.bf16.mxu0 0
        %550 = vmatmul.mubr.bf16.gmra.mxu0 %v512
        %v551 = vpop.f32.mrf.mxu0
        %v552 = vadd.f32 0.0, %v551
        %v553 = vpop.f32.mrf.mxu0
        %v554 = vpop.f32.mrf.mxu0
        %v555 = vpop.f32.mrf.mxu0
        %556 = vdwg.mxu0
        %v557 = vld [vmem:[#allocation2] sm:$0xff]
        %v558 = vsel %vm420, %v552, -inf
        %559 = vmax.xlane.f32.xlu0 %v558
        %v560 = vpop.xlane.xlu0 %559
        %v561 = vmax.f32 %v557, %v560
        %v562 = vsub.f32 %v557, %v561
        %v563 = vmul.f32 %v562, 1.442695
        %v564 = vpow.pop %v563
        %566 = vset.pattern.permute.xlu0 1
        %567 = vperm.xlu0 %566, %v561
        %v568 = vpop.permute.xlu0 %567
        %v570 = vsub.f32 %v552, %v568
        %v571 = vmul.f32 %v570, 1.442695
        %v572 = vpow.pop %v571
        %v573 = vld [vmem:[#allocation3] sm:$0xff]
        %v574 = vmul.f32 %v564, %v573
        %v575 = vsel %vm420, %v572, 0.0
        %576 = vadd.xlane.f32.xlu0 %v575
        %v577 = vpop.xlane.xlu0 %576
        %v578 = vadd.f32 %v574, %v577
        %vm579 = vcmask 15368
        %580 = vst.msk [vmem:[#allocation3] sm:$0xff] %vm579, %v578
        %v581 = vld [vmem:[#allocation4] sm:$0xff]
        %583 = vset.pattern.permute.xlu0 1
        %584 = vperm.xlu0 %583, %v564
        %v585 = vpop.permute.xlu0 %584
        %v587 = vmul.f32 %v585, %v581
        %v588 = vpack.c.bf16 %v572, %v572
        %589 = vrot.lane.b32.xlu0 %v456, 96
        %v590 = vpop.permute.xlu0 %589
        %v593 = vsel %vm420, %v588, 0
        %595 = vmatprep.subr.bf16.mxu0 0
        %596 = vmatpush1.bf16.msra.mxu0 0
        %597 = vmatprep.subr.bf16.mxu0 0
        %598 = vmatpush1.bf16.msra.mxu0 0
        %599 = vmatprep.subr.bf16.mxu0 0
        %600 = vmatpush1.bf16.msra.mxu0 0
        %601 = vmatprep.subr.bf16.mxu0 0
        %602 = vmatpush1.bf16.msra.mxu0 0
        %603 = vmatprep.subr.bf16.mxu0 0
        %604 = vmatpush1.bf16.msra.mxu0 0
        %605 = vmatprep.subr.bf16.mxu0 0
        %606 = vmatpush1.bf16.msra.mxu0 0
        %607 = vmatprep.subr.bf16.mxu0 0
        %608 = vmatpush1.bf16.msra.mxu0 0
        %609 = vmatprep.subr.bf16.mxu0 0
        %610 = vmatpush1.bf16.msra.mxu0 %v590
        %611 = vmatprep.subr.bf16.mxu0 0
        %612 = vmatpush2.bf16.msra.mxu0 0
        %613 = vmatprep.subr.bf16.mxu0 0
        %614 = vmatpush2.bf16.msra.mxu0 0
        %615 = vmatprep.subr.bf16.mxu0 0
        %616 = vmatpush2.bf16.msra.mxu0 0
        %617 = vmatprep.subr.bf16.mxu0 0
        %618 = vmatpush2.bf16.msra.mxu0 0
        %619 = vmatprep.subr.bf16.mxu0 0
        %620 = vmatpush2.bf16.msra.mxu0 0
        %621 = vmatprep.subr.bf16.mxu0 0
        %622 = vmatpush2.bf16.msra.mxu0 0
        %623 = vmatprep.subr.bf16.mxu0 0
        %624 = vmatpush2.bf16.msra.mxu0 0
        %625 = vmatprep.subr.bf16.mxu0 0
        %626 = vmatpush2.bf16.msra.mxu0 0
        %627 = vmatprep.mubr.bf16.mxu0 0
        %628 = vmatmul.mubr.bf16.gmra.mxu0 %v593
        %v629 = vpop.f32.mrf.mxu0
        %v630 = vadd.f32 0.0, %v629
        %v631 = vpop.f32.mrf.mxu0
        %v632 = vpop.f32.mrf.mxu0
        %v633 = vpop.f32.mrf.mxu0
        %634 = vdwg.mxu0
        %636 = vrot.lane.b32.xlu0 %v630, 32
        %v637 = vpop.permute.xlu0 %636
        %v639 = vadd.f32 %v587, %v637
        %vm640 = vcmask 523520
        %641 = vst.msk [vmem:[#allocation4] sm:$0xff] %vm640, %v639
        %642 = vst.msk [vmem:[#allocation2] sm:$0xff] %vm579, %v561
        %643 = vrot.lane.b32.xlu0 %v506, 64
        %v644 = vpop.permute.xlu0 %643
        %645 = vrot.lane.b32.xlu0 %v371, 64
        %v646 = vpop.permute.xlu0 %645
        %v648 = vsel %vm372, %v644, 0
        %v651 = vsel %vm372, %v646, 0
        %653 = vmatprep.subr.bf16.mxu0 0
        %654 = vmatpush1.bf16.xpose.msra.mxu0 0
        %655 = vmatprep.subr.bf16.mxu0 0
        %656 = vmatpush1.bf16.xpose.msra.mxu0 0
        %657 = vmatprep.subr.bf16.mxu0 0
        %658 = vmatpush1.bf16.xpose.msra.mxu0 0
        %659 = vmatprep.subr.bf16.mxu0 0
        %660 = vmatpush1.bf16.xpose.msra.mxu0 0
        %661 = vmatprep.subr.bf16.mxu0 0
        %662 = vmatpush1.bf16.xpose.msra.mxu0 0
        %663 = vmatprep.subr.bf16.mxu0 0
        %664 = vmatpush1.bf16.xpose.msra.mxu0 0
        %665 = vmatprep.subr.bf16.mxu0 0
        %666 = vmatpush1.bf16.xpose.msra.mxu0 0
        %667 = vmatprep.subr.bf16.mxu0 0
        %668 = vmatpush1.bf16.xpose.msra.mxu0 %v651
        %669 = vmatprep.subr.bf16.mxu0 0
        %670 = vmatpush2.bf16.xpose.msra.mxu0 0
        %671 = vmatprep.subr.bf16.mxu0 0
        %672 = vmatpush2.bf16.xpose.msra.mxu0 0
        %673 = vmatprep.subr.bf16.mxu0 0
        %674 = vmatpush2.bf16.xpose.msra.mxu0 0
        %675 = vmatprep.subr.bf16.mxu0 0
        %676 = vmatpush2.bf16.xpose.msra.mxu0 0
        %677 = vmatprep.subr.bf16.mxu0 0
        %678 = vmatpush2.bf16.xpose.msra.mxu0 0
        %679 = vmatprep.subr.bf16.mxu0 0
        %680 = vmatpush2.bf16.xpose.msra.mxu0 0
        %681 = vmatprep.subr.bf16.mxu0 0
        %682 = vmatpush2.bf16.xpose.msra.mxu0 0
        %683 = vmatprep.subr.bf16.mxu0 0
        %684 = vmatpush2.bf16.xpose.msra.mxu0 0
        %685 = vmatprep.mubr.bf16.mxu0 0
        %686 = vmatmul.mubr.bf16.gmra.mxu0 %v648
        %v687 = vpop.f32.mrf.mxu0
        %v688 = vadd.f32 0.0, %v687
        %v689 = vpop.f32.mrf.mxu0
        %v690 = vpop.f32.mrf.mxu0
        %v691 = vpop.f32.mrf.mxu0
        %692 = vdwg.mxu0
        %v693 = vld [vmem:[#allocation2] sm:$0xff]
        %v694 = vsel %vm420, %v688, -inf
        %695 = vmax.xlane.f32.xlu0 %v694
        %v696 = vpop.xlane.xlu0 %695
        %v697 = vmax.f32 %v693, %v696
        %v698 = vsub.f32 %v693, %v697
        %v699 = vmul.f32 %v698, 1.442695
        %v700 = vpow.pop %v699
        %702 = vset.pattern.permute.xlu0 2
        %703 = vperm.xlu0 %702, %v697
        %v704 = vpop.permute.xlu0 %703
        %v706 = vsub.f32 %v688, %v704
        %v707 = vmul.f32 %v706, 1.442695
        %v708 = vpow.pop %v707
        %v709 = vld [vmem:[#allocation3] sm:$0xff]
        %v710 = vmul.f32 %v700, %v709
        %v711 = vsel %vm420, %v708, 0.0
        %712 = vadd.xlane.f32.xlu0 %v711
        %v713 = vpop.xlane.xlu0 %712
        %v714 = vadd.f32 %v710, %v713
        %vm715 = vcmask 23568
        %716 = vst.msk [vmem:[#allocation3] sm:$0xff] %vm715, %v714
        %v717 = vld [vmem:[#allocation4] sm:$0xff]
        %719 = vset.pattern.permute.xlu0 2
        %720 = vperm.xlu0 %719, %v700
        %v721 = vpop.permute.xlu0 %720
        %v723 = vmul.f32 %v721, %v717
        %v724 = vpack.c.bf16 %v708, %v708
        %725 = vrot.lane.b32.xlu0 %v456, 64
        %v726 = vpop.permute.xlu0 %725
        %v729 = vsel %vm420, %v724, 0
        %731 = vmatprep.subr.bf16.mxu0 0
        %732 = vmatpush1.bf16.msra.mxu0 0
        %733 = vmatprep.subr.bf16.mxu0 0
        %734 = vmatpush1.bf16.msra.mxu0 0
        %735 = vmatprep.subr.bf16.mxu0 0
        %736 = vmatpush1.bf16.msra.mxu0 0
        %737 = vmatprep.subr.bf16.mxu0 0
        %738 = vmatpush1.bf16.msra.mxu0 0
        %739 = vmatprep.subr.bf16.mxu0 0
        %740 = vmatpush1.bf16.msra.mxu0 0
        %741 = vmatprep.subr.bf16.mxu0 0
        %742 = vmatpush1.bf16.msra.mxu0 0
        %743 = vmatprep.subr.bf16.mxu0 0
        %744 = vmatpush1.bf16.msra.mxu0 0
        %745 = vmatprep.subr.bf16.mxu0 0
        %746 = vmatpush1.bf16.msra.mxu0 %v726
        %747 = vmatprep.subr.bf16.mxu0 0
        %748 = vmatpush2.bf16.msra.mxu0 0
        %749 = vmatprep.subr.bf16.mxu0 0
        %750 = vmatpush2.bf16.msra.mxu0 0
        %751 = vmatprep.subr.bf16.mxu0 0
        %752 = vmatpush2.bf16.msra.mxu0 0
        %753 = vmatprep.subr.bf16.mxu0 0
        %754 = vmatpush2.bf16.msra.mxu0 0
        %755 = vmatprep.subr.bf16.mxu0 0
        %756 = vmatpush2.bf16.msra.mxu0 0
        %757 = vmatprep.subr.bf16.mxu0 0
        %758 = vmatpush2.bf16.msra.mxu0 0
        %759 = vmatprep.subr.bf16.mxu0 0
        %760 = vmatpush2.bf16.msra.mxu0 0
        %761 = vmatprep.subr.bf16.mxu0 0
        %762 = vmatpush2.bf16.msra.mxu0 0
        %763 = vmatprep.mubr.bf16.mxu0 0
        %764 = vmatmul.mubr.bf16.gmra.mxu0 %v729
        %v765 = vpop.f32.mrf.mxu0
        %v766 = vadd.f32 0.0, %v765
        %v767 = vpop.f32.mrf.mxu0
        %v768 = vpop.f32.mrf.mxu0
        %v769 = vpop.f32.mrf.mxu0
        %770 = vdwg.mxu0
        %772 = vrot.lane.b32.xlu0 %v766, 64
        %v773 = vpop.permute.xlu0 %772
        %v775 = vadd.f32 %v723, %v773
        %vm776 = vcmask 785920
        %777 = vst.msk [vmem:[#allocation4] sm:$0xff] %vm776, %v775
        %778 = vst.msk [vmem:[#allocation2] sm:$0xff] %vm715, %v697
        %779 = vrot.lane.b32.xlu0 %v506, 32
        %v780 = vpop.permute.xlu0 %779
        %781 = vrot.lane.b32.xlu0 %v371, 32
        %v782 = vpop.permute.xlu0 %781
        %v784 = vsel %vm372, %v780, 0
        %v787 = vsel %vm372, %v782, 0
        %789 = vmatprep.subr.bf16.mxu0 0
        %790 = vmatpush1.bf16.xpose.msra.mxu0 0
        %791 = vmatprep.subr.bf16.mxu0 0
        %792 = vmatpush1.bf16.xpose.msra.mxu0 0
        %793 = vmatprep.subr.bf16.mxu0 0
        %794 = vmatpush1.bf16.xpose.msra.mxu0 0
        %795 = vmatprep.subr.bf16.mxu0 0
        %796 = vmatpush1.bf16.xpose.msra.mxu0 0
        %797 = vmatprep.subr.bf16.mxu0 0
        %798 = vmatpush1.bf16.xpose.msra.mxu0 0
        %799 = vmatprep.subr.bf16.mxu0 0
        %800 = vmatpush1.bf16.xpose.msra.mxu0 0
        %801 = vmatprep.subr.bf16.mxu0 0
        %802 = vmatpush1.bf16.xpose.msra.mxu0 0
        %803 = vmatprep.subr.bf16.mxu0 0
        %804 = vmatpush1.bf16.xpose.msra.mxu0 %v787
        %805 = vmatprep.subr.bf16.mxu0 0
        %806 = vmatpush2.bf16.xpose.msra.mxu0 0
        %807 = vmatprep.subr.bf16.mxu0 0
        %808 = vmatpush2.bf16.xpose.msra.mxu0 0
        %809 = vmatprep.subr.bf16.mxu0 0
        %810 = vmatpush2.bf16.xpose.msra.mxu0 0
        %811 = vmatprep.subr.bf16.mxu0 0
        %812 = vmatpush2.bf16.xpose.msra.mxu0 0
        %813 = vmatprep.subr.bf16.mxu0 0
        %814 = vmatpush2.bf16.xpose.msra.mxu0 0
        %815 = vmatprep.subr.bf16.mxu0 0
        %816 = vmatpush2.bf16.xpose.msra.mxu0 0
        %817 = vmatprep.subr.bf16.mxu0 0
        %818 = vmatpush2.bf16.xpose.msra.mxu0 0
        %819 = vmatprep.subr.bf16.mxu0 0
        %820 = vmatpush2.bf16.xpose.msra.mxu0 0
        %821 = vmatprep.mubr.bf16.mxu0 0
        %822 = vmatmul.mubr.bf16.gmra.mxu0 %v784
        %v823 = vpop.f32.mrf.mxu0
        %v824 = vadd.f32 0.0, %v823
        %v825 = vpop.f32.mrf.mxu0
        %v826 = vpop.f32.mrf.mxu0
        %v827 = vpop.f32.mrf.mxu0
        %828 = vdwg.mxu0
        %v829 = vld [vmem:[#allocation2] sm:$0xff]
        %v830 = vsel %vm420, %v824, -inf
        %831 = vmax.xlane.f32.xlu0 %v830
        %v832 = vpop.xlane.xlu0 %831
        %v833 = vmax.f32 %v829, %v832
        %v834 = vsub.f32 %v829, %v833
        %v835 = vmul.f32 %v834, 1.442695
        %v836 = vpow.pop %v835
        %838 = vset.pattern.permute.xlu0 3
        %839 = vperm.xlu0 %838, %v833
        %v840 = vpop.permute.xlu0 %839
        %v842 = vsub.f32 %v824, %v840
        %v843 = vmul.f32 %v842, 1.442695
        %v844 = vpow.pop %v843
        %v845 = vld [vmem:[#allocation3] sm:$0xff]
        %v846 = vmul.f32 %v836, %v845
        %v847 = vsel %vm420, %v844, 0.0
        %848 = vadd.xlane.f32.xlu0 %v847
        %v849 = vpop.xlane.xlu0 %848
        %v850 = vadd.f32 %v846, %v849
        %vm851 = vcmask 31768
        %852 = vst.msk [vmem:[#allocation3] sm:$0xff] %vm851, %v850
        %v853 = vld [vmem:[#allocation4] sm:$0xff]
        %855 = vset.pattern.permute.xlu0 3
        %856 = vperm.xlu0 %855, %v836
        %v857 = vpop.permute.xlu0 %856
        %v859 = vmul.f32 %v857, %v853
        %v860 = vpack.c.bf16 %v844, %v844
        %861 = vrot.lane.b32.xlu0 %v456, 32
        %v862 = vpop.permute.xlu0 %861
        %v865 = vsel %vm420, %v860, 0
        %867 = vmatprep.subr.bf16.mxu0 0
        %868 = vmatpush1.bf16.msra.mxu0 0
        %869 = vmatprep.subr.bf16.mxu0 0
        %870 = vmatpush1.bf16.msra.mxu0 0
        %871 = vmatprep.subr.bf16.mxu0 0
        %872 = vmatpush1.bf16.msra.mxu0 0
        %873 = vmatprep.subr.bf16.mxu0 0
        %874 = vmatpush1.bf16.msra.mxu0 0
        %875 = vmatprep.subr.bf16.mxu0 0
        %876 = vmatpush1.bf16.msra.mxu0 0
        %877 = vmatprep.subr.bf16.mxu0 0
        %878 = vmatpush1.bf16.msra.mxu0 0
        %879 = vmatprep.subr.bf16.mxu0 0
        %880 = vmatpush1.bf16.msra.mxu0 0
        %881 = vmatprep.subr.bf16.mxu0 0
        %882 = vmatpush1.bf16.msra.mxu0 %v862
        %883 = vmatprep.subr.bf16.mxu0 0
        %884 = vmatpush2.bf16.msra.mxu0 0
        %885 = vmatprep.subr.bf16.mxu0 0
        %886 = vmatpush2.bf16.msra.mxu0 0
        %887 = vmatprep.subr.bf16.mxu0 0
        %888 = vmatpush2.bf16.msra.mxu0 0
        %889 = vmatprep.subr.bf16.mxu0 0
        %890 = vmatpush2.bf16.msra.mxu0 0
        %891 = vmatprep.subr.bf16.mxu0 0
        %892 = vmatpush2.bf16.msra.mxu0 0
        %893 = vmatprep.subr.bf16.mxu0 0
        %894 = vmatpush2.bf16.msra.mxu0 0
        %895 = vmatprep.subr.bf16.mxu0 0
        %896 = vmatpush2.bf16.msra.mxu0 0
        %897 = vmatprep.subr.bf16.mxu0 0
        %898 = vmatpush2.bf16.msra.mxu0 0
        %899 = vmatprep.mubr.bf16.mxu0 0
        %900 = vmatmul.mubr.bf16.gmra.mxu0 %v865
        %v901 = vpop.f32.mrf.mxu0
        %v902 = vadd.f32 0.0, %v901
        %v903 = vpop.f32.mrf.mxu0
        %v904 = vpop.f32.mrf.mxu0
        %v905 = vpop.f32.mrf.mxu0
        %906 = vdwg.mxu0
        %908 = vrot.lane.b32.xlu0 %v902, 96
        %v909 = vpop.permute.xlu0 %908
        %v911 = vadd.f32 %v859, %v909
        %vm912 = vcmask 1048320
        %913 = vst.msk [vmem:[#allocation4] sm:$0xff] %vm912, %v911
        %914 = vst.msk [vmem:[#allocation2] sm:$0xff] %vm851, %v833
        // Predicated region
        $region119: #{decoder_layer_forward.13} parent=105 // pred_check
          %p915 = pneg %p354
        $region120: #{decoder_layer_forward.13} parent=105 // pred_check_branch
          %917 = sbr.rel (%p915) target = $region122
        $region121: #{decoder_layer_forward.13} parent=105 // pred_region
          %v918 = vld [vmem:[#allocation3] sm:$0xff]
          %v919 = vrcp.pop %v918
          %v920 = vld [vmem:[#allocation4] sm:$0xff]
          %922 = vset.pattern.permute.xlu0 0
          %923 = vperm.xlu0 %922, %v919
          %v924 = vpop.permute.xlu0 %923
          %v926 = vmul.f32 %v920, %v924
          %927 = vset.pattern.permute.xlu0 1
          %928 = vperm.xlu0 %927, %v919
          %v929 = vpop.permute.xlu0 %928
          %v931 = vmul.f32 %v920, %v929
          %932 = vset.pattern.permute.xlu0 2
          %933 = vperm.xlu0 %932, %v919
          %v934 = vpop.permute.xlu0 %933
          %v936 = vmul.f32 %v920, %v934
          %937 = vset.pattern.permute.xlu0 3
          %938 = vperm.xlu0 %937, %v919
          %v939 = vpop.permute.xlu0 %938
          %v941 = vmul.f32 %v920, %v939
          %v942 = vsel %vm372, %v926, %v931
          %vm943 = vcmask 523264
          %v944 = vsel %vm943, %v942, %v936
          %vm945 = vcmask 785408
          %v946 = vsel %vm945, %v944, %v941
          %v947 = vpack.c.bf16 %v946, %v946
          %948 = vst [vmem:[%s352] sm:$0xf] %v947
        $region122: #{decoder_layer_forward.13} parent=105 // pred_fallthru
          _
        %p949 = scmp.lt.s32.totalorder %s19, 1
        %s950 = scalar_select %p949, %s19, 1
        %p951 = scmp.lt.s32.totalorder %s20, 0
        %s952 = scalar_select %p951, %s20, 0
        %s953 = sadd.s32 %s952, %s950
        %s954 = smul.addr %s953, 4
        %s955 = scalar_lea.vmem %s3, %s954
        // Predicated region
        $region123: #{decoder_layer_forward.13} parent=105 // pred_check
          %p956 = pneg %p137
        $region124: #{decoder_layer_forward.13} parent=105 // pred_check_branch
          %958 = sbr.rel (%p956) target = $region126
        $region125: #{decoder_layer_forward.13} parent=105 // pred_region
          _
        $region126: #{decoder_layer_forward.13} parent=105 // pred_fallthru
          _
      $region106: #{decoder_layer_forward.13} parent=5 // pred_fallthru
        _
      %p959 = scmp.le.s32.totalorder 2, %s9
      // Predicated region
      $region127: #{decoder_layer_forward.13} parent=5 // pred_check
        %p960 = pneg %p959
      $region128: #{decoder_layer_forward.13} parent=5 // pred_check_branch
        %962 = sbr.rel (%p960) target = $region130
      $region129: #{decoder_layer_forward.13} parent=5 // pred_region
        %s963 = ssub.s32 %s9, 2
        // Predicated region
        $region131: #{decoder_layer_forward.13} parent=129 // pred_check
          %p964 = pneg %p143
        $region132: #{decoder_layer_forward.13} parent=129 // pred_check_branch
          %966 = sbr.rel (%p964) target = $region134
        $region133: #{decoder_layer_forward.13} parent=129 // pred_region
          %p967 = scmp.lt.s32.totalorder %s22, 1
          %s968 = scalar_select %p967, %s22, 1
          %p969 = scmp.lt.s32.totalorder %s23, 0
          %s970 = scalar_select %p969, %s23, 0
          %s971 = sadd.s32 %s970, %s968
          %s972 = smul.addr %s971, 4
          %s973 = scalar_lea.vmem %s3, %s972
        $region134: #{decoder_layer_forward.13} parent=129 // pred_fallthru
          _
      $region130: #{decoder_layer_forward.13} parent=5 // pred_fallthru
        _
    $region6: #{decoder_layer_forward.13} parent=1 // loop_footer
      %s13 = sadd.s32 1, %s9
    $region7: #{decoder_layer_forward.13} parent=1 // loop_footer_branch
      %8 = sbr.rel target = $region3
    $region8: #{decoder_layer_forward.13} parent=1 // loop_exit
      _

</llo_original>
